<compile_context>
chip_gen: v7x
topology: tpu7x:2x2x1
jax: 0.10.0
libtpu: 0.0.40
codegen_flags: <defaults>
</compile_context>

<pallas_src>
import functools

import jax
import jax.numpy as jnp
from jax import lax
from jax.experimental import pallas as pl
from jax.experimental.pallas import tpu as pltpu

ACT_DTYPE = jnp.bfloat16       # MXU input dtype (f32 accumulation everywhere)
EPS = 1e-5


def _round_up(x, m):
    return (x + m - 1) // m * m


# ----------------------------- in-kernel helpers ---------------------------

def _conv3x3_flat(buf_ref, w_ref, n_rows, width, n_out):
    """3x3 / stride-1 / pad-1 convolution over a flat 'halo' buffer.

    buf_ref : (n_rows + 2*width + 2, C) f32 scratch.  Rows [width+1,
              width+1+n_rows) hold the activation row-major (i*width + j);
              every other row is zero.
    w_ref   : (9, C, n_out) bf16 per-tap weights (tap = kh*3 + kw).

    Each tap is a contiguous sublane slice (start = kh*width + kw) covering
    ALL output rows at once (M = n_rows); horizontal wrap-around reads are
    zeroed with a static column mask.  Returns the (n_rows, n_out) f32 acc.
    """
    col = lax.broadcasted_iota(jnp.int32, (n_rows, 1), 0) % width
    acc = jnp.zeros((n_rows, n_out), jnp.float32)
    for kh in range(3):
        for kw in range(3):
            patch = buf_ref[pl.ds(kh * width + kw, n_rows), :]
            if kw == 0:        # output col 0 would wrap to previous row's col W-1
                patch = jnp.where(col != 0, patch, 0.0)
            elif kw == 2:      # output col W-1 would wrap to next row's col 0
                patch = jnp.where(col != width - 1, patch, 0.0)
            acc = acc + jnp.dot(patch.astype(ACT_DTYPE), w_ref[kh * 3 + kw],
                                preferred_element_type=jnp.float32)
    return acc


def _fill_halo(buf_ref, width, act):
    """Zero a halo buffer and write the activation into its interior rows."""
    buf_ref[...] = jnp.zeros_like(buf_ref)
    buf_ref[pl.ds(width + 1, act.shape[0]), :] = act.astype(buf_ref.dtype)


# --------------------------------- kernel ----------------------------------

def _osnet_kernel(lhs_ref,
                  w0_ref, s0_ref, c0_ref,
                  w11_ref, s11_ref, c11_ref,
                  w12_ref, s12_ref, c12_ref,
                  w21_ref, s21_ref, c21_ref,
                  w22_ref, s22_ref, c22_ref,
                  wfc_ref, cfc_ref,
                  out_ref,
                  buf1_ref, bufa_ref, bufb_ref, buf2_ref, res2_ref,
                  *, hs, ws):
    """Entire OSNet backbone for one batch element (activations VMEM-resident)."""
    m1 = hs * ws                       # post-stem map: hs x ws  (4 x 4)
    hs2, ws2 = hs // 2, ws // 2        # block2 map:   hs2 x ws2 (2 x 2)
    m2 = hs2 * ws2

    # --- stem: conv1(3x3,s2,p1) as ONE im2col matmul + BN + ReLU + maxpool ---
    v = jnp.dot(lhs_ref[0], w0_ref[...], preferred_element_type=jnp.float32)
    v = jnp.maximum(v * s0_ref[...] + c0_ref[...], 0.0)           # (4*m1, 16)
    pooled = v[0:m1]                                              # 2x2 maxpool:
    for ph in range(1, 4):                                        # rows are pool-
        pooled = jnp.maximum(pooled, v[ph * m1:(ph + 1) * m1])    # phase major
    _fill_halo(buf1_ref, ws, pooled)                              # (m1, 16)

    # --- block1 conv1 + fused 1x1 downsample (extra N cols) + BN -------------
    acc = _conv3x3_flat(buf1_ref, w11_ref, m1, ws, 64)
    acc = acc * s11_ref[...] + c11_ref[...]
    resid1 = acc[:, 32:]                                          # BN'd, no ReLU
    _fill_halo(bufa_ref, ws, jnp.maximum(acc[:, :32], 0.0))

    # --- block1 conv2 + BN + residual + ReLU ----------------------------------
    acc = _conv3x3_flat(bufa_ref, w12_ref, m1, ws, 32)
    out1 = jnp.maximum(acc * s12_ref[...] + c12_ref[...] + resid1, 0.0)
    _fill_halo(bufb_ref, ws, out1)

    # --- block2 conv1 (stride 2) + fused 1x1 downsample + BN + ReLU ----------
    # Stride 2 is handled by evaluating the stride-1 conv over the tiny map and
    # keeping only even-row / even-col output positions (4 cheap row stores).
    acc = _conv3x3_flat(bufb_ref, w21_ref, m1, ws, 128)
    acc = acc * s21_ref[...] + c21_ref[...]
    main2 = jnp.maximum(acc[:, :64], 0.0)
    resid2 = acc[:, 64:]
    buf2_ref[...] = jnp.zeros_like(buf2_ref)
    p = 0
    for i in range(hs2):
        for j in range(ws2):
            m = 2 * i * ws + 2 * j                                # stride-2 pick
            buf2_ref[pl.ds(ws2 + 1 + p, 1), :] = main2[m:m + 1, :]
            res2_ref[pl.ds(p, 1), :] = resid2[m:m + 1, :]
            p += 1

    # --- block2 conv2 + BN + residual + ReLU ----------------------------------
    acc = _conv3x3_flat(buf2_ref, w22_ref, m2, ws2, 64)
    feat = jnp.maximum(acc * s22_ref[...] + c22_ref[...] + res2_ref[...], 0.0)

    # --- global average pool + FC (head folded into the same kernel) ----------
    gap = jnp.mean(feat, axis=0, keepdims=True)                   # (1, 64)
    out_ref[0, :, :] = (jnp.dot(gap.astype(ACT_DTYPE), wfc_ref[...],
                                preferred_element_type=jnp.float32)
                        + cfc_ref[...])


# ------------------------------ wrapper side --------------------------------

def _stem_im2col(x):
    """(B,H,W,Cin) -> (B, 4*(H//4)*(W//4), round_up(9*Cin,8)) bf16 im2col LHS
    for the stride-2 stem conv.  Rows are ordered (pool phase, pool position)
    so the in-kernel 2x2 maxpool is a 4-way elementwise max."""
    B, H, W, C = x.shape
    hs, ws = H // 4, W // 4
    k0 = _round_up(9 * C, 8)
    xp = jnp.pad(x, ((0, 0), (1, 1), (1, 1), (0, 0)))
    phases = []
    for dr in range(2):
        for dc in range(2):
            taps = []
            for kh in range(3):
                for kw in range(3):
                    r0, c0 = 2 * dr + kh, 2 * dc + kw
                    taps.append(xp[:, r0:r0 + 4 * hs - 3:4,
                                 c0:c0 + 4 * ws - 3:4, :])        # (B,hs,ws,C)
            phases.append(jnp.concatenate(taps, axis=-1).reshape(B, hs * ws, 9 * C))
    lhs = jnp.concatenate(phases, axis=1)                         # (B,4*hs*ws,9C)
    lhs = jnp.pad(lhs, ((0, 0), (0, 0), (0, k0 - 9 * C)))
    return lhs.astype(ACT_DTYPE)


def osnet_pallas(prep, x_nhwc):
    B, H, W, _ = x_nhwc.shape
    assert H % 8 == 0 and W % 8 == 0, "this implementation needs H, W % 8 == 0"
    hs, ws = H // 4, W // 4
    m1, ws2 = hs * ws, ws // 2
    m2 = (hs // 2) * ws2
    lhs = _stem_im2col(x_nhwc)

    order = ("w_stem", "s_stem", "c_stem",
             "w11", "s11", "c11", "w12", "s12", "c12",
             "w21", "s21", "c21", "w22", "s22", "c22",
             "w_fc", "c_fc")
    consts = [prep[k] for k in order]

    def _const_spec(a):                    # full block, VMEM-resident over grid
        return pl.BlockSpec(a.shape, lambda b: (0,) * a.ndim)

    out = pl.pallas_call(
        functools.partial(_osnet_kernel, hs=hs, ws=ws),
        grid=(B,),
        in_specs=[pl.BlockSpec((1,) + lhs.shape[1:], lambda b: (b, 0, 0))]
                 + [_const_spec(a) for a in consts],
        out_specs=pl.BlockSpec((1, 1, 128), lambda b: (b, 0, 0)),
        out_shape=jax.ShapeDtypeStruct((B, 1, 128), jnp.float32),
        scratch_shapes=[
            pltpu.VMEM((m1 + 2 * ws + 2, 16), jnp.float32),    # stem out (halo)
            pltpu.VMEM((m1 + 2 * ws + 2, 32), jnp.float32),    # block1 mid (halo)
            pltpu.VMEM((m1 + 2 * ws + 2, 32), jnp.float32),    # block1 out (halo)
            pltpu.VMEM((m2 + 2 * ws2 + 2, 64), jnp.float32),   # block2 mid (halo)
            pltpu.VMEM((m2, 64), jnp.float32),                 # block2 residual
        ],
        compiler_params=pltpu.CompilerParams(
            dimension_semantics=("parallel",),
            vmem_limit_bytes=32 * 1024 * 1024),
    )(lhs, *consts)
    return out.reshape(B, 128)


@jax.jit
def osnet_forward(prep, x_nchw):
    x = jnp.transpose(x_nchw, (0, 2, 3, 1))                       # NCHW -> NHWC
    return osnet_pallas(prep, x)


# ------------------------- parameter preparation ----------------------------

def _tap_weights(w_hwio):
    kh, kw, ci, co = w_hwio.shape
    return w_hwio.reshape(kh * kw, ci, co).astype(ACT_DTYPE)


def _center_tap(w_1x1):
    ci, co = w_1x1.shape[2], w_1x1.shape[3]
    w = jnp.zeros((9, ci, co), jnp.float32).at[4].set(w_1x1.reshape(ci, co))
    return w.astype(ACT_DTYPE)


def _vec(v):
    return v.reshape(1, -1).astype(jnp.float32)


def prepare_params(p):
    """One-time weight/BN folding into kernel-ready arrays (outside forward jit)."""
    k0 = _round_up(9 * p["conv1_w"].shape[2], 8)
    w_stem = p["conv1_w"].reshape(-1, p["conv1_w"].shape[3])       # (27, 16)
    w_stem = jnp.pad(w_stem, ((0, k0 - w_stem.shape[0]), (0, 0))).astype(ACT_DTYPE)
    b1, b2 = p["block1"], p["block2"]
    return {
        "w_stem": w_stem, "s_stem": _vec(p["bn1"][0]), "c_stem": _vec(p["bn1"][1]),
        # block conv1 weights carry the 1x1 downsample as extra N columns
        # (centre tap only): one pass emits both main and residual paths.
        "w11": jnp.concatenate([_tap_weights(b1["conv1_w"]),
                                _center_tap(b1["down_w"])], axis=2),
        "s11": jnp.concatenate([_vec(b1["bn1"][0]), _vec(b1["down_bn"][0])], axis=1),
        "c11": jnp.concatenate([_vec(b1["bn1"][1]), _vec(b1["down_bn"][1])], axis=1),
        "w12": _tap_weights(b1["conv2_w"]),
        "s12": _vec(b1["bn2"][0]), "c12": _vec(b1["bn2"][1]),
        "w21": jnp.concatenate([_tap_weights(b2["conv1_w"]),
                                _center_tap(b2["down_w"])], axis=2),
        "s21": jnp.concatenate([_vec(b2["bn1"][0]), _vec(b2["down_bn"][0])], axis=1),
        "c21": jnp.concatenate([_vec(b2["bn1"][1]), _vec(b2["down_bn"][1])], axis=1),
        "w22": _tap_weights(b2["conv2_w"]),
        "s22": _vec(b2["bn2"][0]), "c22": _vec(b2["bn2"][1]),
        "w_fc": p["fc_w"].astype(ACT_DTYPE), "c_fc": _vec(p["fc_b"]),
    }


# ------------------------------ parameters ----------------------------------

def conv_w(key, kh, kw, cin, cout):
    fan = kh * kw * cin
    return jax.random.normal(key, (kh, kw, cin, cout), jnp.float32) / jnp.sqrt(fan)


def bn_params(key, c):
    k1, k2 = jax.random.split(key)
    gamma = 1.0 + 0.1 * jax.random.normal(k1, (c,), jnp.float32)
    beta = 0.1 * jax.random.normal(k2, (c,), jnp.float32)
    running_mean = jnp.zeros((c,), jnp.float32)
    running_var = jnp.ones((c,), jnp.float32)
    scale = gamma / jnp.sqrt(running_var + EPS)
    bias = beta - running_mean * scale
    return scale, bias


def init_params(key):
    ks = jax.random.split(key, 16)
    p = {}
    p["conv1_w"] = conv_w(ks[0], 3, 3, 3, 16)
    p["bn1"] = bn_params(ks[1], 16)
    p["block1"] = {
        "conv1_w": conv_w(ks[2], 3, 3, 16, 32), "bn1": bn_params(ks[3], 32),
        "conv2_w": conv_w(ks[4], 3, 3, 32, 32), "bn2": bn_params(ks[5], 32),
        "down_w": conv_w(ks[6], 1, 1, 16, 32), "down_bn": bn_params(ks[7], 32),
    }
    p["block2"] = {
        "conv1_w": conv_w(ks[8], 3, 3, 32, 64), "bn1": bn_params(ks[9], 64),
        "conv2_w": conv_w(ks[10], 3, 3, 64, 64), "bn2": bn_params(ks[11], 64),
        "down_w": conv_w(ks[12], 1, 1, 32, 64), "down_bn": bn_params(ks[13], 64),
    }
    p["fc_w"] = jax.random.normal(ks[14], (64, 128), jnp.float32) / jnp.sqrt(64.0)
    p["fc_b"] = 0.1 * jax.random.normal(ks[15], (128,), jnp.float32)
    return p


# --------------------------- pure-JAX reference ------------------------------

def ref_conv_bn(x, w, scale, bias, stride, pad, residual=None, relu=True):
    out = lax.conv_general_dilated(
        x, w, (stride, stride), [(pad, pad), (pad, pad)],
        dimension_numbers=("NHWC", "HWIO", "NHWC"))
    out = out * scale + bias
    if residual is not None:
        out = out + residual
    if relu:
        out = jnp.maximum(out, 0.0)
    return out


def ref_forward(params, x_nchw):
    x = jnp.transpose(x_nchw, (0, 2, 3, 1))
    x = ref_conv_bn(x, params["conv1_w"], *params["bn1"], 2, 1)
    x = lax.reduce_window(x, -jnp.inf, lax.max, (1, 2, 2, 1), (1, 2, 2, 1), "VALID")
    for name, stride in (("block1", 1), ("block2", 2)):
        p = params[name]
        residual = ref_conv_bn(x, p["down_w"], *p["down_bn"], stride, 0, relu=False)
        out = ref_conv_bn(x, p["conv1_w"], *p["bn1"], stride, 1)
        x = ref_conv_bn(out, p["conv2_w"], *p["bn2"], 1, 1, residual=residual)
    pooled = jnp.mean(x, axis=(1, 2))
    return pooled @ params["fc_w"] + params["fc_b"]


# --------------------------------- main --------------------------------------

if __name__ == "__main__":
    key = jax.random.PRNGKey(0)
    pkey, xkey = jax.random.split(key)
    params = init_params(pkey)
    prep = prepare_params(params)                     # one-time weight folding
    x = jax.random.normal(xkey, (2, 3, 16, 16), jnp.float32)   # NCHW input

    out = osnet_forward(prep, x)
    out = jax.block_until_ready(out)

    ref = ref_forward(params, x)
    assert out.shape == (2, 128), out.shape
    assert bool(jnp.all(jnp.isfinite(out)))
    # MXU inputs are bf16 (f32 accumulation / epilogues); reference is f32,
    # so allow bf16-level tolerance.
    assert bool(jnp.allclose(out, ref, atol=4e-2, rtol=4e-2)), (
        float(jnp.max(jnp.abs(out - ref))))
    print("KERNEL_OK")
</pallas_src>

<mosaic_0001>
module attributes {stable_mosaic.version = 11 : i64} {
  func.func @_osnet_kernel(%arg0: i32, %arg1: memref<1x64x32xbf16, #tpu.memory_space<vmem>>, %arg2: memref<32x16xbf16, #tpu.memory_space<vmem>>, %arg3: memref<1x16xf32, #tpu.memory_space<vmem>>, %arg4: memref<1x16xf32, #tpu.memory_space<vmem>>, %arg5: memref<9x16x64xbf16, #tpu.memory_space<vmem>>, %arg6: memref<1x64xf32, #tpu.memory_space<vmem>>, %arg7: memref<1x64xf32, #tpu.memory_space<vmem>>, %arg8: memref<9x32x32xbf16, #tpu.memory_space<vmem>>, %arg9: memref<1x32xf32, #tpu.memory_space<vmem>>, %arg10: memref<1x32xf32, #tpu.memory_space<vmem>>, %arg11: memref<9x32x128xbf16, #tpu.memory_space<vmem>>, %arg12: memref<1x128xf32, #tpu.memory_space<vmem>>, %arg13: memref<1x128xf32, #tpu.memory_space<vmem>>, %arg14: memref<9x64x64xbf16, #tpu.memory_space<vmem>>, %arg15: memref<1x64xf32, #tpu.memory_space<vmem>>, %arg16: memref<1x64xf32, #tpu.memory_space<vmem>>, %arg17: memref<64x128xbf16, #tpu.memory_space<vmem>>, %arg18: memref<1x128xf32, #tpu.memory_space<vmem>>, %arg19: memref<1x1x128xf32, #tpu.memory_space<vmem>>, %arg20: memref<26x16xf32, #tpu.memory_space<vmem>>, %arg21: memref<26x32xf32, #tpu.memory_space<vmem>>, %arg22: memref<26x32xf32, #tpu.memory_space<vmem>>, %arg23: memref<10x64xf32, #tpu.memory_space<vmem>>, %arg24: memref<4x64xf32, #tpu.memory_space<vmem>>) attributes {dimension_semantics = [#tpu.dimension_semantics<parallel>], iteration_bounds = array<i64: 2>, scalar_prefetch = 0 : i64, scratch_operands = 5 : i64, tpu.core_type = #tpu.core_type<tc>, window_params = [{transform_indices = @transform_0, window_bounds = array<i64: 1, 64, 32>}, {pipeline_mode = #tpu.pipeline_mode<synchronous>, transform_indices = @transform_1, window_bounds = array<i64: 32, 16>}, {pipeline_mode = #tpu.pipeline_mode<synchronous>, transform_indices = @transform_2, window_bounds = array<i64: 1, 16>}, {pipeline_mode = #tpu.pipeline_mode<synchronous>, transform_indices = @transform_3, window_bounds = array<i64: 1, 16>}, {pipeline_mode = #tpu.pipeline_mode<synchronous>, transform_indices = @transform_4, window_bounds = array<i64: 9, 16, 64>}, {pipeline_mode = #tpu.pipeline_mode<synchronous>, transform_indices = @transform_5, window_bounds = array<i64: 1, 64>}, {pipeline_mode = #tpu.pipeline_mode<synchronous>, transform_indices = @transform_6, window_bounds = array<i64: 1, 64>}, {pipeline_mode = #tpu.pipeline_mode<synchronous>, transform_indices = @transform_7, window_bounds = array<i64: 9, 32, 32>}, {pipeline_mode = #tpu.pipeline_mode<synchronous>, transform_indices = @transform_8, window_bounds = array<i64: 1, 32>}, {pipeline_mode = #tpu.pipeline_mode<synchronous>, transform_indices = @transform_9, window_bounds = array<i64: 1, 32>}, {pipeline_mode = #tpu.pipeline_mode<synchronous>, transform_indices = @transform_10, window_bounds = array<i64: 9, 32, 128>}, {pipeline_mode = #tpu.pipeline_mode<synchronous>, transform_indices = @transform_11, window_bounds = array<i64: 1, 128>}, {pipeline_mode = #tpu.pipeline_mode<synchronous>, transform_indices = @transform_12, window_bounds = array<i64: 1, 128>}, {pipeline_mode = #tpu.pipeline_mode<synchronous>, transform_indices = @transform_13, window_bounds = array<i64: 9, 64, 64>}, {pipeline_mode = #tpu.pipeline_mode<synchronous>, transform_indices = @transform_14, window_bounds = array<i64: 1, 64>}, {pipeline_mode = #tpu.pipeline_mode<synchronous>, transform_indices = @transform_15, window_bounds = array<i64: 1, 64>}, {pipeline_mode = #tpu.pipeline_mode<synchronous>, transform_indices = @transform_16, window_bounds = array<i64: 64, 128>}, {pipeline_mode = #tpu.pipeline_mode<synchronous>, transform_indices = @transform_17, window_bounds = array<i64: 1, 128>}, {transform_indices = @transform_18, window_bounds = array<i64: 1, 1, 128>}]} {
    %c0 = arith.constant 0 : index
    %c0_0 = arith.constant 0 : index
    %c0_1 = arith.constant 0 : index
    %0 = vector.load %arg1[%c0, %c0_0, %c0_1] : memref<1x64x32xbf16, #tpu.memory_space<vmem>>, vector<1x64x32xbf16>
    %1 = vector.shape_cast %0 : vector<1x64x32xbf16> to vector<64x32xbf16>
    %c0_2 = arith.constant 0 : index
    %c0_3 = arith.constant 0 : index
    %2 = vector.load %arg2[%c0_2, %c0_3] : memref<32x16xbf16, #tpu.memory_space<vmem>>, vector<32x16xbf16>
    %cst = arith.constant dense<0.000000e+00> : vector<64x16xf32>
    %3 = tpu.matmul %1, %2, %cst {dimension_numbers = #tpu.dot_dimension_numbers<[1], [0], [0], [1], [0, 0, 1, 1], [], []>} : vector<64x32xbf16>, vector<32x16xbf16>, vector<64x16xf32> -> vector<64x16xf32>
    %c0_4 = arith.constant 0 : index
    %c0_5 = arith.constant 0 : index
    %4 = vector.load %arg3[%c0_4, %c0_5] : memref<1x16xf32, #tpu.memory_space<vmem>>, vector<1x16xf32>
    %5 = vector.broadcast %4 : vector<1x16xf32> to vector<64x16xf32>
    %6 = arith.mulf %3, %5 : vector<64x16xf32>
    %c0_6 = arith.constant 0 : index
    %c0_7 = arith.constant 0 : index
    %7 = vector.load %arg4[%c0_6, %c0_7] : memref<1x16xf32, #tpu.memory_space<vmem>>, vector<1x16xf32>
    %8 = vector.broadcast %7 : vector<1x16xf32> to vector<64x16xf32>
    %9 = arith.addf %6, %8 : vector<64x16xf32>
    %cst_8 = arith.constant 0.000000e+00 : f32
    %10 = vector.broadcast %cst_8 : f32 to vector<64x16xf32>
    %11 = arith.maximumf %9, %10 : vector<64x16xf32>
    %12 = vector.extract_strided_slice %11 {offsets = [0, 0], sizes = [16, 16], strides = [1, 1]} : vector<64x16xf32> to vector<16x16xf32>
    %13 = vector.extract_strided_slice %11 {offsets = [16, 0], sizes = [16, 16], strides = [1, 1]} : vector<64x16xf32> to vector<16x16xf32>
    %14 = arith.maximumf %12, %13 : vector<16x16xf32>
    %15 = vector.extract_strided_slice %11 {offsets = [32, 0], sizes = [16, 16], strides = [1, 1]} : vector<64x16xf32> to vector<16x16xf32>
    %16 = arith.maximumf %14, %15 : vector<16x16xf32>
    %17 = vector.extract_strided_slice %11 {offsets = [48, 0], sizes = [16, 16], strides = [1, 1]} : vector<64x16xf32> to vector<16x16xf32>
    %18 = arith.maximumf %16, %17 : vector<16x16xf32>
    %cst_9 = arith.constant 0.000000e+00 : f32
    %19 = vector.broadcast %cst_9 : f32 to vector<26x16xf32>
    %c0_10 = arith.constant 0 : index
    %c0_11 = arith.constant 0 : index
    %20 = vector.load %arg20[%c0_10, %c0_11] : memref<26x16xf32, #tpu.memory_space<vmem>>, vector<26x16xf32>
    tpu.vector_store %arg20[%c0_10, %c0_11], %19 {strides = array<i32>} : memref<26x16xf32, #tpu.memory_space<vmem>>, vector<26x16xf32>,
    %c5 = arith.constant 5 : index
    %c0_12 = arith.constant 0 : index
    %21 = vector.load %arg20[%c5, %c0_12] : memref<26x16xf32, #tpu.memory_space<vmem>>, vector<16x16xf32>
    tpu.vector_store %arg20[%c5, %c0_12], %18 {strides = array<i32>} : memref<26x16xf32, #tpu.memory_space<vmem>>, vector<16x16xf32>,
    %22 = tpu.iota {dimensions = array<i32: 0>} : vector<16x1xi32>
    %c4_i32 = arith.constant 4 : i32
    %c0_i32 = arith.constant 0 : i32
    %23 = arith.cmpi eq, %c4_i32, %c0_i32 : i32
    %c1_i32 = arith.constant 1 : i32
    %24 = arith.select %23, %c1_i32, %c4_i32 : i32
    %25 = vector.broadcast %24 : i32 to vector<16x1xi32>
    %26 = arith.remsi %22, %25 : vector<16x1xi32>
    %c0_i32_13 = arith.constant 0 : i32
    %27 = vector.broadcast %c0_i32_13 : i32 to vector<16x1xi32>
    %28 = arith.cmpi ne, %26, %27 : vector<16x1xi32>
    %c0_i32_14 = arith.constant 0 : i32
    %29 = vector.broadcast %c0_i32_14 : i32 to vector<16x1xi32>
    %30 = arith.cmpi slt, %26, %29 : vector<16x1xi32>
    %c0_i32_15 = arith.constant 0 : i32
    %31 = arith.cmpi slt, %24, %c0_i32_15 : i32
    %32 = vector.broadcast %31 : i1 to vector<16x1xi1>
    %33 = vector.broadcast %32 : vector<16x1xi1> to vector<16x1xi1>
    %34 = arith.xori %30, %33 : vector<16x1xi1>
    %35 = arith.andi %34, %28 : vector<16x1xi1>
    %36 = vector.broadcast %24 : i32 to vector<16x1xi32>
    %37 = arith.addi %26, %36 : vector<16x1xi32>
    %38 = arith.select %35, %37, %26 : vector<16x1xi1>, vector<16x1xi32>
    %cst_16 = arith.constant 0.000000e+00 : f32
    %39 = vector.broadcast %cst_16 : f32 to vector<16x64xf32>
    %c0_17 = arith.constant 0 : index
    %c0_18 = arith.constant 0 : index
    %40 = vector.load %arg20[%c0_17, %c0_18] : memref<26x16xf32, #tpu.memory_space<vmem>>, vector<16x16xf32>
    %c0_i32_19 = arith.constant 0 : i32
    %41 = vector.broadcast %c0_i32_19 : i32 to vector<16x1xi32>
    %42 = arith.cmpi ne, %38, %41 : vector<16x1xi32>
    %cst_20 = arith.constant 0.000000e+00 : f32
    %43 = vector.shape_cast %42 : vector<16x1xi1> to vector<16x1xi1>
    %44 = vector.broadcast %43 : vector<16x1xi1> to vector<16x16xi1>
    %45 = vector.broadcast %cst_20 : f32 to vector<16x16xf32>
    %46 = arith.select %44, %40, %45 : vector<16x16xi1>, vector<16x16xf32>
    %47 = arith.truncf %46 : vector<16x16xf32> to vector<16x16xbf16>
    %c0_21 = arith.constant 0 : index
    %c0_22 = arith.constant 0 : index
    %c0_23 = arith.constant 0 : index
    %48 = vector.load %arg5[%c0_21, %c0_22, %c0_23] : memref<9x16x64xbf16, #tpu.memory_space<vmem>>, vector<1x16x64xbf16>
    %49 = vector.shape_cast %48 : vector<1x16x64xbf16> to vector<16x64xbf16>
    %cst_24 = arith.constant dense<0.000000e+00> : vector<16x64xf32>
    %50 = tpu.matmul %47, %49, %cst_24 {dimension_numbers = #tpu.dot_dimension_numbers<[1], [0], [0], [1], [0, 0, 1, 1], [], []>} : vector<16x16xbf16>, vector<16x64xbf16>, vector<16x64xf32> -> vector<16x64xf32>
    %51 = arith.addf %39, %50 : vector<16x64xf32>
    %c1 = arith.constant 1 : index
    %c0_25 = arith.constant 0 : index
    %52 = vector.load %arg20[%c1, %c0_25] : memref<26x16xf32, #tpu.memory_space<vmem>>, vector<16x16xf32>
    %53 = arith.truncf %52 : vector<16x16xf32> to vector<16x16xbf16>
    %c1_26 = arith.constant 1 : index
    %c0_27 = arith.constant 0 : index
    %c0_28 = arith.constant 0 : index
    %54 = vector.load %arg5[%c1_26, %c0_27, %c0_28] : memref<9x16x64xbf16, #tpu.memory_space<vmem>>, vector<1x16x64xbf16>
    %55 = vector.shape_cast %54 : vector<1x16x64xbf16> to vector<16x64xbf16>
    %cst_29 = arith.constant dense<0.000000e+00> : vector<16x64xf32>
    %56 = tpu.matmul %53, %55, %cst_29 {dimension_numbers = #tpu.dot_dimension_numbers<[1], [0], [0], [1], [0, 0, 1, 1], [], []>} : vector<16x16xbf16>, vector<16x64xbf16>, vector<16x64xf32> -> vector<16x64xf32>
    %57 = arith.addf %51, %56 : vector<16x64xf32>
    %c2 = arith.constant 2 : index
    %c0_30 = arith.constant 0 : index
    %58 = vector.load %arg20[%c2, %c0_30] : memref<26x16xf32, #tpu.memory_space<vmem>>, vector<16x16xf32>
    %c3_i32 = arith.constant 3 : i32
    %59 = vector.broadcast %c3_i32 : i32 to vector<16x1xi32>
    %60 = arith.cmpi ne, %38, %59 : vector<16x1xi32>
    %cst_31 = arith.constant 0.000000e+00 : f32
    %61 = vector.shape_cast %60 : vector<16x1xi1> to vector<16x1xi1>
    %62 = vector.broadcast %61 : vector<16x1xi1> to vector<16x16xi1>
    %63 = vector.broadcast %cst_31 : f32 to vector<16x16xf32>
    %64 = arith.select %62, %58, %63 : vector<16x16xi1>, vector<16x16xf32>
    %65 = arith.truncf %64 : vector<16x16xf32> to vector<16x16xbf16>
    %c2_32 = arith.constant 2 : index
    %c0_33 = arith.constant 0 : index
    %c0_34 = arith.constant 0 : index
    %66 = vector.load %arg5[%c2_32, %c0_33, %c0_34] : memref<9x16x64xbf16, #tpu.memory_space<vmem>>, vector<1x16x64xbf16>
    %67 = vector.shape_cast %66 : vector<1x16x64xbf16> to vector<16x64xbf16>
    %cst_35 = arith.constant dense<0.000000e+00> : vector<16x64xf32>
    %68 = tpu.matmul %65, %67, %cst_35 {dimension_numbers = #tpu.dot_dimension_numbers<[1], [0], [0], [1], [0, 0, 1, 1], [], []>} : vector<16x16xbf16>, vector<16x64xbf16>, vector<16x64xf32> -> vector<16x64xf32>
    %69 = arith.addf %57, %68 : vector<16x64xf32>
    %c4 = arith.constant 4 : index
    %c0_36 = arith.constant 0 : index
    %70 = vector.load %arg20[%c4, %c0_36] : memref<26x16xf32, #tpu.memory_space<vmem>>, vector<16x16xf32>
    %c0_i32_37 = arith.constant 0 : i32
    %71 = vector.broadcast %c0_i32_37 : i32 to vector<16x1xi32>
    %72 = arith.cmpi ne, %38, %71 : vector<16x1xi32>
    %cst_38 = arith.constant 0.000000e+00 : f32
    %73 = vector.shape_cast %72 : vector<16x1xi1> to vector<16x1xi1>
    %74 = vector.broadcast %73 : vector<16x1xi1> to vector<16x16xi1>
    %75 = vector.broadcast %cst_38 : f32 to vector<16x16xf32>
    %76 = arith.select %74, %70, %75 : vector<16x16xi1>, vector<16x16xf32>
    %77 = arith.truncf %76 : vector<16x16xf32> to vector<16x16xbf16>
    %c3 = arith.constant 3 : index
    %c0_39 = arith.constant 0 : index
    %c0_40 = arith.constant 0 : index
    %78 = vector.load %arg5[%c3, %c0_39, %c0_40] : memref<9x16x64xbf16, #tpu.memory_space<vmem>>, vector<1x16x64xbf16>
    %79 = vector.shape_cast %78 : vector<1x16x64xbf16> to vector<16x64xbf16>
    %cst_41 = arith.constant dense<0.000000e+00> : vector<16x64xf32>
    %80 = tpu.matmul %77, %79, %cst_41 {dimension_numbers = #tpu.dot_dimension_numbers<[1], [0], [0], [1], [0, 0, 1, 1], [], []>} : vector<16x16xbf16>, vector<16x64xbf16>, vector<16x64xf32> -> vector<16x64xf32>
    %81 = arith.addf %69, %80 : vector<16x64xf32>
    %c5_42 = arith.constant 5 : index
    %c0_43 = arith.constant 0 : index
    %82 = vector.load %arg20[%c5_42, %c0_43] : memref<26x16xf32, #tpu.memory_space<vmem>>, vector<16x16xf32>
    %83 = arith.truncf %82 : vector<16x16xf32> to vector<16x16xbf16>
    %c4_44 = arith.constant 4 : index
    %c0_45 = arith.constant 0 : index
    %c0_46 = arith.constant 0 : index
    %84 = vector.load %arg5[%c4_44, %c0_45, %c0_46] : memref<9x16x64xbf16, #tpu.memory_space<vmem>>, vector<1x16x64xbf16>
    %85 = vector.shape_cast %84 : vector<1x16x64xbf16> to vector<16x64xbf16>
    %cst_47 = arith.constant dense<0.000000e+00> : vector<16x64xf32>
    %86 = tpu.matmul %83, %85, %cst_47 {dimension_numbers = #tpu.dot_dimension_numbers<[1], [0], [0], [1], [0, 0, 1, 1], [], []>} : vector<16x16xbf16>, vector<16x64xbf16>, vector<16x64xf32> -> vector<16x64xf32>
    %87 = arith.addf %81, %86 : vector<16x64xf32>
    %c6 = arith.constant 6 : index
    %c0_48 = arith.constant 0 : index
    %88 = vector.load %arg20[%c6, %c0_48] : memref<26x16xf32, #tpu.memory_space<vmem>>, vector<16x16xf32>
    %c3_i32_49 = arith.constant 3 : i32
    %89 = vector.broadcast %c3_i32_49 : i32 to vector<16x1xi32>
    %90 = arith.cmpi ne, %38, %89 : vector<16x1xi32>
    %cst_50 = arith.constant 0.000000e+00 : f32
    %91 = vector.shape_cast %90 : vector<16x1xi1> to vector<16x1xi1>
    %92 = vector.broadcast %91 : vector<16x1xi1> to vector<16x16xi1>
    %93 = vector.broadcast %cst_50 : f32 to vector<16x16xf32>
    %94 = arith.select %92, %88, %93 : vector<16x16xi1>, vector<16x16xf32>
    %95 = arith.truncf %94 : vector<16x16xf32> to vector<16x16xbf16>
    %c5_51 = arith.constant 5 : index
    %c0_52 = arith.constant 0 : index
    %c0_53 = arith.constant 0 : index
    %96 = vector.load %arg5[%c5_51, %c0_52, %c0_53] : memref<9x16x64xbf16, #tpu.memory_space<vmem>>, vector<1x16x64xbf16>
    %97 = vector.shape_cast %96 : vector<1x16x64xbf16> to vector<16x64xbf16>
    %cst_54 = arith.constant dense<0.000000e+00> : vector<16x64xf32>
    %98 = tpu.matmul %95, %97, %cst_54 {dimension_numbers = #tpu.dot_dimension_numbers<[1], [0], [0], [1], [0, 0, 1, 1], [], []>} : vector<16x16xbf16>, vector<16x64xbf16>, vector<16x64xf32> -> vector<16x64xf32>
    %99 = arith.addf %87, %98 : vector<16x64xf32>
    %c8 = arith.constant 8 : index
    %c0_55 = arith.constant 0 : index
    %100 = vector.load %arg20[%c8, %c0_55] : memref<26x16xf32, #tpu.memory_space<vmem>>, vector<16x16xf32>
    %c0_i32_56 = arith.constant 0 : i32
    %101 = vector.broadcast %c0_i32_56 : i32 to vector<16x1xi32>
    %102 = arith.cmpi ne, %38, %101 : vector<16x1xi32>
    %cst_57 = arith.constant 0.000000e+00 : f32
    %103 = vector.shape_cast %102 : vector<16x1xi1> to vector<16x1xi1>
    %104 = vector.broadcast %103 : vector<16x1xi1> to vector<16x16xi1>
    %105 = vector.broadcast %cst_57 : f32 to vector<16x16xf32>
    %106 = arith.select %104, %100, %105 : vector<16x16xi1>, vector<16x16xf32>
    %107 = arith.truncf %106 : vector<16x16xf32> to vector<16x16xbf16>
    %c6_58 = arith.constant 6 : index
    %c0_59 = arith.constant 0 : index
    %c0_60 = arith.constant 0 : index
    %108 = vector.load %arg5[%c6_58, %c0_59, %c0_60] : memref<9x16x64xbf16, #tpu.memory_space<vmem>>, vector<1x16x64xbf16>
    %109 = vector.shape_cast %108 : vector<1x16x64xbf16> to vector<16x64xbf16>
    %cst_61 = arith.constant dense<0.000000e+00> : vector<16x64xf32>
    %110 = tpu.matmul %107, %109, %cst_61 {dimension_numbers = #tpu.dot_dimension_numbers<[1], [0], [0], [1], [0, 0, 1, 1], [], []>} : vector<16x16xbf16>, vector<16x64xbf16>, vector<16x64xf32> -> vector<16x64xf32>
    %111 = arith.addf %99, %110 : vector<16x64xf32>
    %c9 = arith.constant 9 : index
    %c0_62 = arith.constant 0 : index
    %112 = vector.load %arg20[%c9, %c0_62] : memref<26x16xf32, #tpu.memory_space<vmem>>, vector<16x16xf32>
    %113 = arith.truncf %112 : vector<16x16xf32> to vector<16x16xbf16>
    %c7 = arith.constant 7 : index
    %c0_63 = arith.constant 0 : index
    %c0_64 = arith.constant 0 : index
    %114 = vector.load %arg5[%c7, %c0_63, %c0_64] : memref<9x16x64xbf16, #tpu.memory_space<vmem>>, vector<1x16x64xbf16>
    %115 = vector.shape_cast %114 : vector<1x16x64xbf16> to vector<16x64xbf16>
    %cst_65 = arith.constant dense<0.000000e+00> : vector<16x64xf32>
    %116 = tpu.matmul %113, %115, %cst_65 {dimension_numbers = #tpu.dot_dimension_numbers<[1], [0], [0], [1], [0, 0, 1, 1], [], []>} : vector<16x16xbf16>, vector<16x64xbf16>, vector<16x64xf32> -> vector<16x64xf32>
    %117 = arith.addf %111, %116 : vector<16x64xf32>
    %c10 = arith.constant 10 : index
    %c0_66 = arith.constant 0 : index
    %118 = vector.load %arg20[%c10, %c0_66] : memref<26x16xf32, #tpu.memory_space<vmem>>, vector<16x16xf32>
    %c3_i32_67 = arith.constant 3 : i32
    %119 = vector.broadcast %c3_i32_67 : i32 to vector<16x1xi32>
    %120 = arith.cmpi ne, %38, %119 : vector<16x1xi32>
    %cst_68 = arith.constant 0.000000e+00 : f32
    %121 = vector.shape_cast %120 : vector<16x1xi1> to vector<16x1xi1>
    %122 = vector.broadcast %121 : vector<16x1xi1> to vector<16x16xi1>
    %123 = vector.broadcast %cst_68 : f32 to vector<16x16xf32>
    %124 = arith.select %122, %118, %123 : vector<16x16xi1>, vector<16x16xf32>
    %125 = arith.truncf %124 : vector<16x16xf32> to vector<16x16xbf16>
    %c8_69 = arith.constant 8 : index
    %c0_70 = arith.constant 0 : index
    %c0_71 = arith.constant 0 : index
    %126 = vector.load %arg5[%c8_69, %c0_70, %c0_71] : memref<9x16x64xbf16, #tpu.memory_space<vmem>>, vector<1x16x64xbf16>
    %127 = vector.shape_cast %126 : vector<1x16x64xbf16> to vector<16x64xbf16>
    %cst_72 = arith.constant dense<0.000000e+00> : vector<16x64xf32>
    %128 = tpu.matmul %125, %127, %cst_72 {dimension_numbers = #tpu.dot_dimension_numbers<[1], [0], [0], [1], [0, 0, 1, 1], [], []>} : vector<16x16xbf16>, vector<16x64xbf16>, vector<16x64xf32> -> vector<16x64xf32>
    %129 = arith.addf %117, %128 : vector<16x64xf32>
    %c0_73 = arith.constant 0 : index
    %c0_74 = arith.constant 0 : index
    %130 = vector.load %arg6[%c0_73, %c0_74] : memref<1x64xf32, #tpu.memory_space<vmem>>, vector<1x64xf32>
    %131 = vector.broadcast %130 : vector<1x64xf32> to vector<16x64xf32>
    %132 = arith.mulf %129, %131 : vector<16x64xf32>
    %c0_75 = arith.constant 0 : index
    %c0_76 = arith.constant 0 : index
    %133 = vector.load %arg7[%c0_75, %c0_76] : memref<1x64xf32, #tpu.memory_space<vmem>>, vector<1x64xf32>
    %134 = vector.broadcast %133 : vector<1x64xf32> to vector<16x64xf32>
    %135 = arith.addf %132, %134 : vector<16x64xf32>
    %136 = vector.extract_strided_slice %135 {offsets = [0, 32], sizes = [16, 32], strides = [1, 1]} : vector<16x64xf32> to vector<16x32xf32>
    %137 = vector.extract_strided_slice %135 {offsets = [0, 0], sizes = [16, 32], strides = [1, 1]} : vector<16x64xf32> to vector<16x32xf32>
    %cst_77 = arith.constant 0.000000e+00 : f32
    %138 = vector.broadcast %cst_77 : f32 to vector<16x32xf32>
    %139 = arith.maximumf %137, %138 : vector<16x32xf32>
    %cst_78 = arith.constant 0.000000e+00 : f32
    %140 = vector.broadcast %cst_78 : f32 to vector<26x32xf32>
    %c0_79 = arith.constant 0 : index
    %c0_80 = arith.constant 0 : index
    %141 = vector.load %arg21[%c0_79, %c0_80] : memref<26x32xf32, #tpu.memory_space<vmem>>, vector<26x32xf32>
    tpu.vector_store %arg21[%c0_79, %c0_80], %140 {strides = array<i32>} : memref<26x32xf32, #tpu.memory_space<vmem>>, vector<26x32xf32>,
    %c5_81 = arith.constant 5 : index
    %c0_82 = arith.constant 0 : index
    %142 = vector.load %arg21[%c5_81, %c0_82] : memref<26x32xf32, #tpu.memory_space<vmem>>, vector<16x32xf32>
    tpu.vector_store %arg21[%c5_81, %c0_82], %139 {strides = array<i32>} : memref<26x32xf32, #tpu.memory_space<vmem>>, vector<16x32xf32>,
    %143 = tpu.iota {dimensions = array<i32: 0>} : vector<16x1xi32>
    %c4_i32_83 = arith.constant 4 : i32
    %c0_i32_84 = arith.constant 0 : i32
    %144 = arith.cmpi eq, %c4_i32_83, %c0_i32_84 : i32
    %c1_i32_85 = arith.constant 1 : i32
    %145 = arith.select %144, %c1_i32_85, %c4_i32_83 : i32
    %146 = vector.broadcast %145 : i32 to vector<16x1xi32>
    %147 = arith.remsi %143, %146 : vector<16x1xi32>
    %c0_i32_86 = arith.constant 0 : i32
    %148 = vector.broadcast %c0_i32_86 : i32 to vector<16x1xi32>
    %149 = arith.cmpi ne, %147, %148 : vector<16x1xi32>
    %c0_i32_87 = arith.constant 0 : i32
    %150 = vector.broadcast %c0_i32_87 : i32 to vector<16x1xi32>
    %151 = arith.cmpi slt, %147, %150 : vector<16x1xi32>
    %c0_i32_88 = arith.constant 0 : i32
    %152 = arith.cmpi slt, %145, %c0_i32_88 : i32
    %153 = vector.broadcast %152 : i1 to vector<16x1xi1>
    %154 = vector.broadcast %153 : vector<16x1xi1> to vector<16x1xi1>
    %155 = arith.xori %151, %154 : vector<16x1xi1>
    %156 = arith.andi %155, %149 : vector<16x1xi1>
    %157 = vector.broadcast %145 : i32 to vector<16x1xi32>
    %158 = arith.addi %147, %157 : vector<16x1xi32>
    %159 = arith.select %156, %158, %147 : vector<16x1xi1>, vector<16x1xi32>
    %cst_89 = arith.constant 0.000000e+00 : f32
    %160 = vector.broadcast %cst_89 : f32 to vector<16x32xf32>
    %c0_90 = arith.constant 0 : index
    %c0_91 = arith.constant 0 : index
    %161 = vector.load %arg21[%c0_90, %c0_91] : memref<26x32xf32, #tpu.memory_space<vmem>>, vector<16x32xf32>
    %c0_i32_92 = arith.constant 0 : i32
    %162 = vector.broadcast %c0_i32_92 : i32 to vector<16x1xi32>
    %163 = arith.cmpi ne, %159, %162 : vector<16x1xi32>
    %cst_93 = arith.constant 0.000000e+00 : f32
    %164 = vector.shape_cast %163 : vector<16x1xi1> to vector<16x1xi1>
    %165 = vector.broadcast %164 : vector<16x1xi1> to vector<16x32xi1>
    %166 = vector.broadcast %cst_93 : f32 to vector<16x32xf32>
    %167 = arith.select %165, %161, %166 : vector<16x32xi1>, vector<16x32xf32>
    %168 = arith.truncf %167 : vector<16x32xf32> to vector<16x32xbf16>
    %c0_94 = arith.constant 0 : index
    %c0_95 = arith.constant 0 : index
    %c0_96 = arith.constant 0 : index
    %169 = vector.load %arg8[%c0_94, %c0_95, %c0_96] : memref<9x32x32xbf16, #tpu.memory_space<vmem>>, vector<1x32x32xbf16>
    %170 = vector.shape_cast %169 : vector<1x32x32xbf16> to vector<32x32xbf16>
    %cst_97 = arith.constant dense<0.000000e+00> : vector<16x32xf32>
    %171 = tpu.matmul %168, %170, %cst_97 {dimension_numbers = #tpu.dot_dimension_numbers<[1], [0], [0], [1], [0, 0, 1, 1], [], []>} : vector<16x32xbf16>, vector<32x32xbf16>, vector<16x32xf32> -> vector<16x32xf32>
    %172 = arith.addf %160, %171 : vector<16x32xf32>
    %c1_98 = arith.constant 1 : index
    %c0_99 = arith.constant 0 : index
    %173 = vector.load %arg21[%c1_98, %c0_99] : memref<26x32xf32, #tpu.memory_space<vmem>>, vector<16x32xf32>
    %174 = arith.truncf %173 : vector<16x32xf32> to vector<16x32xbf16>
    %c1_100 = arith.constant 1 : index
    %c0_101 = arith.constant 0 : index
    %c0_102 = arith.constant 0 : index
    %175 = vector.load %arg8[%c1_100, %c0_101, %c0_102] : memref<9x32x32xbf16, #tpu.memory_space<vmem>>, vector<1x32x32xbf16>
    %176 = vector.shape_cast %175 : vector<1x32x32xbf16> to vector<32x32xbf16>
    %cst_103 = arith.constant dense<0.000000e+00> : vector<16x32xf32>
    %177 = tpu.matmul %174, %176, %cst_103 {dimension_numbers = #tpu.dot_dimension_numbers<[1], [0], [0], [1], [0, 0, 1, 1], [], []>} : vector<16x32xbf16>, vector<32x32xbf16>, vector<16x32xf32> -> vector<16x32xf32>
    %178 = arith.addf %172, %177 : vector<16x32xf32>
    %c2_104 = arith.constant 2 : index
    %c0_105 = arith.constant 0 : index
    %179 = vector.load %arg21[%c2_104, %c0_105] : memref<26x32xf32, #tpu.memory_space<vmem>>, vector<16x32xf32>
    %c3_i32_106 = arith.constant 3 : i32
    %180 = vector.broadcast %c3_i32_106 : i32 to vector<16x1xi32>
    %181 = arith.cmpi ne, %159, %180 : vector<16x1xi32>
    %cst_107 = arith.constant 0.000000e+00 : f32
    %182 = vector.shape_cast %181 : vector<16x1xi1> to vector<16x1xi1>
    %183 = vector.broadcast %182 : vector<16x1xi1> to vector<16x32xi1>
    %184 = vector.broadcast %cst_107 : f32 to vector<16x32xf32>
    %185 = arith.select %183, %179, %184 : vector<16x32xi1>, vector<16x32xf32>
    %186 = arith.truncf %185 : vector<16x32xf32> to vector<16x32xbf16>
    %c2_108 = arith.constant 2 : index
    %c0_109 = arith.constant 0 : index
    %c0_110 = arith.constant 0 : index
    %187 = vector.load %arg8[%c2_108, %c0_109, %c0_110] : memref<9x32x32xbf16, #tpu.memory_space<vmem>>, vector<1x32x32xbf16>
    %188 = vector.shape_cast %187 : vector<1x32x32xbf16> to vector<32x32xbf16>
    %cst_111 = arith.constant dense<0.000000e+00> : vector<16x32xf32>
    %189 = tpu.matmul %186, %188, %cst_111 {dimension_numbers = #tpu.dot_dimension_numbers<[1], [0], [0], [1], [0, 0, 1, 1], [], []>} : vector<16x32xbf16>, vector<32x32xbf16>, vector<16x32xf32> -> vector<16x32xf32>
    %190 = arith.addf %178, %189 : vector<16x32xf32>
    %c4_112 = arith.constant 4 : index
    %c0_113 = arith.constant 0 : index
    %191 = vector.load %arg21[%c4_112, %c0_113] : memref<26x32xf32, #tpu.memory_space<vmem>>, vector<16x32xf32>
    %c0_i32_114 = arith.constant 0 : i32
    %192 = vector.broadcast %c0_i32_114 : i32 to vector<16x1xi32>
    %193 = arith.cmpi ne, %159, %192 : vector<16x1xi32>
    %cst_115 = arith.constant 0.000000e+00 : f32
    %194 = vector.shape_cast %193 : vector<16x1xi1> to vector<16x1xi1>
    %195 = vector.broadcast %194 : vector<16x1xi1> to vector<16x32xi1>
    %196 = vector.broadcast %cst_115 : f32 to vector<16x32xf32>
    %197 = arith.select %195, %191, %196 : vector<16x32xi1>, vector<16x32xf32>
    %198 = arith.truncf %197 : vector<16x32xf32> to vector<16x32xbf16>
    %c3_116 = arith.constant 3 : index
    %c0_117 = arith.constant 0 : index
    %c0_118 = arith.constant 0 : index
    %199 = vector.load %arg8[%c3_116, %c0_117, %c0_118] : memref<9x32x32xbf16, #tpu.memory_space<vmem>>, vector<1x32x32xbf16>
    %200 = vector.shape_cast %199 : vector<1x32x32xbf16> to vector<32x32xbf16>
    %cst_119 = arith.constant dense<0.000000e+00> : vector<16x32xf32>
    %201 = tpu.matmul %198, %200, %cst_119 {dimension_numbers = #tpu.dot_dimension_numbers<[1], [0], [0], [1], [0, 0, 1, 1], [], []>} : vector<16x32xbf16>, vector<32x32xbf16>, vector<16x32xf32> -> vector<16x32xf32>
    %202 = arith.addf %190, %201 : vector<16x32xf32>
    %c5_120 = arith.constant 5 : index
    %c0_121 = arith.constant 0 : index
    %203 = vector.load %arg21[%c5_120, %c0_121] : memref<26x32xf32, #tpu.memory_space<vmem>>, vector<16x32xf32>
    %204 = arith.truncf %203 : vector<16x32xf32> to vector<16x32xbf16>
    %c4_122 = arith.constant 4 : index
    %c0_123 = arith.constant 0 : index
    %c0_124 = arith.constant 0 : index
    %205 = vector.load %arg8[%c4_122, %c0_123, %c0_124] : memref<9x32x32xbf16, #tpu.memory_space<vmem>>, vector<1x32x32xbf16>
    %206 = vector.shape_cast %205 : vector<1x32x32xbf16> to vector<32x32xbf16>
    %cst_125 = arith.constant dense<0.000000e+00> : vector<16x32xf32>
    %207 = tpu.matmul %204, %206, %cst_125 {dimension_numbers = #tpu.dot_dimension_numbers<[1], [0], [0], [1], [0, 0, 1, 1], [], []>} : vector<16x32xbf16>, vector<32x32xbf16>, vector<16x32xf32> -> vector<16x32xf32>
    %208 = arith.addf %202, %207 : vector<16x32xf32>
    %c6_126 = arith.constant 6 : index
    %c0_127 = arith.constant 0 : index
    %209 = vector.load %arg21[%c6_126, %c0_127] : memref<26x32xf32, #tpu.memory_space<vmem>>, vector<16x32xf32>
    %c3_i32_128 = arith.constant 3 : i32
    %210 = vector.broadcast %c3_i32_128 : i32 to vector<16x1xi32>
    %211 = arith.cmpi ne, %159, %210 : vector<16x1xi32>
    %cst_129 = arith.constant 0.000000e+00 : f32
    %212 = vector.shape_cast %211 : vector<16x1xi1> to vector<16x1xi1>
    %213 = vector.broadcast %212 : vector<16x1xi1> to vector<16x32xi1>
    %214 = vector.broadcast %cst_129 : f32 to vector<16x32xf32>
    %215 = arith.select %213, %209, %214 : vector<16x32xi1>, vector<16x32xf32>
    %216 = arith.truncf %215 : vector<16x32xf32> to vector<16x32xbf16>
    %c5_130 = arith.constant 5 : index
    %c0_131 = arith.constant 0 : index
    %c0_132 = arith.constant 0 : index
    %217 = vector.load %arg8[%c5_130, %c0_131, %c0_132] : memref<9x32x32xbf16, #tpu.memory_space<vmem>>, vector<1x32x32xbf16>
    %218 = vector.shape_cast %217 : vector<1x32x32xbf16> to vector<32x32xbf16>
    %cst_133 = arith.constant dense<0.000000e+00> : vector<16x32xf32>
    %219 = tpu.matmul %216, %218, %cst_133 {dimension_numbers = #tpu.dot_dimension_numbers<[1], [0], [0], [1], [0, 0, 1, 1], [], []>} : vector<16x32xbf16>, vector<32x32xbf16>, vector<16x32xf32> -> vector<16x32xf32>
    %220 = arith.addf %208, %219 : vector<16x32xf32>
    %c8_134 = arith.constant 8 : index
    %c0_135 = arith.constant 0 : index
    %221 = vector.load %arg21[%c8_134, %c0_135] : memref<26x32xf32, #tpu.memory_space<vmem>>, vector<16x32xf32>
    %c0_i32_136 = arith.constant 0 : i32
    %222 = vector.broadcast %c0_i32_136 : i32 to vector<16x1xi32>
    %223 = arith.cmpi ne, %159, %222 : vector<16x1xi32>
    %cst_137 = arith.constant 0.000000e+00 : f32
    %224 = vector.shape_cast %223 : vector<16x1xi1> to vector<16x1xi1>
    %225 = vector.broadcast %224 : vector<16x1xi1> to vector<16x32xi1>
    %226 = vector.broadcast %cst_137 : f32 to vector<16x32xf32>
    %227 = arith.select %225, %221, %226 : vector<16x32xi1>, vector<16x32xf32>
    %228 = arith.truncf %227 : vector<16x32xf32> to vector<16x32xbf16>
    %c6_138 = arith.constant 6 : index
    %c0_139 = arith.constant 0 : index
    %c0_140 = arith.constant 0 : index
    %229 = vector.load %arg8[%c6_138, %c0_139, %c0_140] : memref<9x32x32xbf16, #tpu.memory_space<vmem>>, vector<1x32x32xbf16>
    %230 = vector.shape_cast %229 : vector<1x32x32xbf16> to vector<32x32xbf16>
    %cst_141 = arith.constant dense<0.000000e+00> : vector<16x32xf32>
    %231 = tpu.matmul %228, %230, %cst_141 {dimension_numbers = #tpu.dot_dimension_numbers<[1], [0], [0], [1], [0, 0, 1, 1], [], []>} : vector<16x32xbf16>, vector<32x32xbf16>, vector<16x32xf32> -> vector<16x32xf32>
    %232 = arith.addf %220, %231 : vector<16x32xf32>
    %c9_142 = arith.constant 9 : index
    %c0_143 = arith.constant 0 : index
    %233 = vector.load %arg21[%c9_142, %c0_143] : memref<26x32xf32, #tpu.memory_space<vmem>>, vector<16x32xf32>
    %234 = arith.truncf %233 : vector<16x32xf32> to vector<16x32xbf16>
    %c7_144 = arith.constant 7 : index
    %c0_145 = arith.constant 0 : index
    %c0_146 = arith.constant 0 : index
    %235 = vector.load %arg8[%c7_144, %c0_145, %c0_146] : memref<9x32x32xbf16, #tpu.memory_space<vmem>>, vector<1x32x32xbf16>
    %236 = vector.shape_cast %235 : vector<1x32x32xbf16> to vector<32x32xbf16>
    %cst_147 = arith.constant dense<0.000000e+00> : vector<16x32xf32>
    %237 = tpu.matmul %234, %236, %cst_147 {dimension_numbers = #tpu.dot_dimension_numbers<[1], [0], [0], [1], [0, 0, 1, 1], [], []>} : vector<16x32xbf16>, vector<32x32xbf16>, vector<16x32xf32> -> vector<16x32xf32>
    %238 = arith.addf %232, %237 : vector<16x32xf32>
    %c10_148 = arith.constant 10 : index
    %c0_149 = arith.constant 0 : index
    %239 = vector.load %arg21[%c10_148, %c0_149] : memref<26x32xf32, #tpu.memory_space<vmem>>, vector<16x32xf32>
    %c3_i32_150 = arith.constant 3 : i32
    %240 = vector.broadcast %c3_i32_150 : i32 to vector<16x1xi32>
    %241 = arith.cmpi ne, %159, %240 : vector<16x1xi32>
    %cst_151 = arith.constant 0.000000e+00 : f32
    %242 = vector.shape_cast %241 : vector<16x1xi1> to vector<16x1xi1>
    %243 = vector.broadcast %242 : vector<16x1xi1> to vector<16x32xi1>
    %244 = vector.broadcast %cst_151 : f32 to vector<16x32xf32>
    %245 = arith.select %243, %239, %244 : vector<16x32xi1>, vector<16x32xf32>
    %246 = arith.truncf %245 : vector<16x32xf32> to vector<16x32xbf16>
    %c8_152 = arith.constant 8 : index
    %c0_153 = arith.constant 0 : index
    %c0_154 = arith.constant 0 : index
    %247 = vector.load %arg8[%c8_152, %c0_153, %c0_154] : memref<9x32x32xbf16, #tpu.memory_space<vmem>>, vector<1x32x32xbf16>
    %248 = vector.shape_cast %247 : vector<1x32x32xbf16> to vector<32x32xbf16>
    %cst_155 = arith.constant dense<0.000000e+00> : vector<16x32xf32>
    %249 = tpu.matmul %246, %248, %cst_155 {dimension_numbers = #tpu.dot_dimension_numbers<[1], [0], [0], [1], [0, 0, 1, 1], [], []>} : vector<16x32xbf16>, vector<32x32xbf16>, vector<16x32xf32> -> vector<16x32xf32>
    %250 = arith.addf %238, %249 : vector<16x32xf32>
    %c0_156 = arith.constant 0 : index
    %c0_157 = arith.constant 0 : index
    %251 = vector.load %arg9[%c0_156, %c0_157] : memref<1x32xf32, #tpu.memory_space<vmem>>, vector<1x32xf32>
    %252 = vector.broadcast %251 : vector<1x32xf32> to vector<16x32xf32>
    %253 = arith.mulf %250, %252 : vector<16x32xf32>
    %c0_158 = arith.constant 0 : index
    %c0_159 = arith.constant 0 : index
    %254 = vector.load %arg10[%c0_158, %c0_159] : memref<1x32xf32, #tpu.memory_space<vmem>>, vector<1x32xf32>
    %255 = vector.broadcast %254 : vector<1x32xf32> to vector<16x32xf32>
    %256 = arith.addf %253, %255 : vector<16x32xf32>
    %257 = arith.addf %256, %136 : vector<16x32xf32>
    %cst_160 = arith.constant 0.000000e+00 : f32
    %258 = vector.broadcast %cst_160 : f32 to vector<16x32xf32>
    %259 = arith.maximumf %257, %258 : vector<16x32xf32>
    %cst_161 = arith.constant 0.000000e+00 : f32
    %260 = vector.broadcast %cst_161 : f32 to vector<26x32xf32>
    %c0_162 = arith.constant 0 : index
    %c0_163 = arith.constant 0 : index
    %261 = vector.load %arg22[%c0_162, %c0_163] : memref<26x32xf32, #tpu.memory_space<vmem>>, vector<26x32xf32>
    tpu.vector_store %arg22[%c0_162, %c0_163], %260 {strides = array<i32>} : memref<26x32xf32, #tpu.memory_space<vmem>>, vector<26x32xf32>,
    %c5_164 = arith.constant 5 : index
    %c0_165 = arith.constant 0 : index
    %262 = vector.load %arg22[%c5_164, %c0_165] : memref<26x32xf32, #tpu.memory_space<vmem>>, vector<16x32xf32>
    tpu.vector_store %arg22[%c5_164, %c0_165], %259 {strides = array<i32>} : memref<26x32xf32, #tpu.memory_space<vmem>>, vector<16x32xf32>,
    %263 = tpu.iota {dimensions = array<i32: 0>} : vector<16x1xi32>
    %c4_i32_166 = arith.constant 4 : i32
    %c0_i32_167 = arith.constant 0 : i32
    %264 = arith.cmpi eq, %c4_i32_166, %c0_i32_167 : i32
    %c1_i32_168 = arith.constant 1 : i32
    %265 = arith.select %264, %c1_i32_168, %c4_i32_166 : i32
    %266 = vector.broadcast %265 : i32 to vector<16x1xi32>
    %267 = arith.remsi %263, %266 : vector<16x1xi32>
    %c0_i32_169 = arith.constant 0 : i32
    %268 = vector.broadcast %c0_i32_169 : i32 to vector<16x1xi32>
    %269 = arith.cmpi ne, %267, %268 : vector<16x1xi32>
    %c0_i32_170 = arith.constant 0 : i32
    %270 = vector.broadcast %c0_i32_170 : i32 to vector<16x1xi32>
    %271 = arith.cmpi slt, %267, %270 : vector<16x1xi32>
    %c0_i32_171 = arith.constant 0 : i32
    %272 = arith.cmpi slt, %265, %c0_i32_171 : i32
    %273 = vector.broadcast %272 : i1 to vector<16x1xi1>
    %274 = vector.broadcast %273 : vector<16x1xi1> to vector<16x1xi1>
    %275 = arith.xori %271, %274 : vector<16x1xi1>
    %276 = arith.andi %275, %269 : vector<16x1xi1>
    %277 = vector.broadcast %265 : i32 to vector<16x1xi32>
    %278 = arith.addi %267, %277 : vector<16x1xi32>
    %279 = arith.select %276, %278, %267 : vector<16x1xi1>, vector<16x1xi32>
    %cst_172 = arith.constant 0.000000e+00 : f32
    %280 = vector.broadcast %cst_172 : f32 to vector<16x128xf32>
    %c0_173 = arith.constant 0 : index
    %c0_174 = arith.constant 0 : index
    %281 = vector.load %arg22[%c0_173, %c0_174] : memref<26x32xf32, #tpu.memory_space<vmem>>, vector<16x32xf32>
    %c0_i32_175 = arith.constant 0 : i32
    %282 = vector.broadcast %c0_i32_175 : i32 to vector<16x1xi32>
    %283 = arith.cmpi ne, %279, %282 : vector<16x1xi32>
    %cst_176 = arith.constant 0.000000e+00 : f32
    %284 = vector.shape_cast %283 : vector<16x1xi1> to vector<16x1xi1>
    %285 = vector.broadcast %284 : vector<16x1xi1> to vector<16x32xi1>
    %286 = vector.broadcast %cst_176 : f32 to vector<16x32xf32>
    %287 = arith.select %285, %281, %286 : vector<16x32xi1>, vector<16x32xf32>
    %288 = arith.truncf %287 : vector<16x32xf32> to vector<16x32xbf16>
    %c0_177 = arith.constant 0 : index
    %c0_178 = arith.constant 0 : index
    %c0_179 = arith.constant 0 : index
    %289 = vector.load %arg11[%c0_177, %c0_178, %c0_179] : memref<9x32x128xbf16, #tpu.memory_space<vmem>>, vector<1x32x128xbf16>
    %290 = vector.shape_cast %289 : vector<1x32x128xbf16> to vector<32x128xbf16>
    %cst_180 = arith.constant dense<0.000000e+00> : vector<16x128xf32>
    %291 = tpu.matmul %288, %290, %cst_180 {dimension_numbers = #tpu.dot_dimension_numbers<[1], [0], [0], [1], [0, 0, 1, 1], [], []>} : vector<16x32xbf16>, vector<32x128xbf16>, vector<16x128xf32> -> vector<16x128xf32>
    %292 = arith.addf %280, %291 : vector<16x128xf32>
    %c1_181 = arith.constant 1 : index
    %c0_182 = arith.constant 0 : index
    %293 = vector.load %arg22[%c1_181, %c0_182] : memref<26x32xf32, #tpu.memory_space<vmem>>, vector<16x32xf32>
    %294 = arith.truncf %293 : vector<16x32xf32> to vector<16x32xbf16>
    %c1_183 = arith.constant 1 : index
    %c0_184 = arith.constant 0 : index
    %c0_185 = arith.constant 0 : index
    %295 = vector.load %arg11[%c1_183, %c0_184, %c0_185] : memref<9x32x128xbf16, #tpu.memory_space<vmem>>, vector<1x32x128xbf16>
    %296 = vector.shape_cast %295 : vector<1x32x128xbf16> to vector<32x128xbf16>
    %cst_186 = arith.constant dense<0.000000e+00> : vector<16x128xf32>
    %297 = tpu.matmul %294, %296, %cst_186 {dimension_numbers = #tpu.dot_dimension_numbers<[1], [0], [0], [1], [0, 0, 1, 1], [], []>} : vector<16x32xbf16>, vector<32x128xbf16>, vector<16x128xf32> -> vector<16x128xf32>
    %298 = arith.addf %292, %297 : vector<16x128xf32>
    %c2_187 = arith.constant 2 : index
    %c0_188 = arith.constant 0 : index
    %299 = vector.load %arg22[%c2_187, %c0_188] : memref<26x32xf32, #tpu.memory_space<vmem>>, vector<16x32xf32>
    %c3_i32_189 = arith.constant 3 : i32
    %300 = vector.broadcast %c3_i32_189 : i32 to vector<16x1xi32>
    %301 = arith.cmpi ne, %279, %300 : vector<16x1xi32>
    %cst_190 = arith.constant 0.000000e+00 : f32
    %302 = vector.shape_cast %301 : vector<16x1xi1> to vector<16x1xi1>
    %303 = vector.broadcast %302 : vector<16x1xi1> to vector<16x32xi1>
    %304 = vector.broadcast %cst_190 : f32 to vector<16x32xf32>
    %305 = arith.select %303, %299, %304 : vector<16x32xi1>, vector<16x32xf32>
    %306 = arith.truncf %305 : vector<16x32xf32> to vector<16x32xbf16>
    %c2_191 = arith.constant 2 : index
    %c0_192 = arith.constant 0 : index
    %c0_193 = arith.constant 0 : index
    %307 = vector.load %arg11[%c2_191, %c0_192, %c0_193] : memref<9x32x128xbf16, #tpu.memory_space<vmem>>, vector<1x32x128xbf16>
    %308 = vector.shape_cast %307 : vector<1x32x128xbf16> to vector<32x128xbf16>
    %cst_194 = arith.constant dense<0.000000e+00> : vector<16x128xf32>
    %309 = tpu.matmul %306, %308, %cst_194 {dimension_numbers = #tpu.dot_dimension_numbers<[1], [0], [0], [1], [0, 0, 1, 1], [], []>} : vector<16x32xbf16>, vector<32x128xbf16>, vector<16x128xf32> -> vector<16x128xf32>
    %310 = arith.addf %298, %309 : vector<16x128xf32>
    %c4_195 = arith.constant 4 : index
    %c0_196 = arith.constant 0 : index
    %311 = vector.load %arg22[%c4_195, %c0_196] : memref<26x32xf32, #tpu.memory_space<vmem>>, vector<16x32xf32>
    %c0_i32_197 = arith.constant 0 : i32
    %312 = vector.broadcast %c0_i32_197 : i32 to vector<16x1xi32>
    %313 = arith.cmpi ne, %279, %312 : vector<16x1xi32>
    %cst_198 = arith.constant 0.000000e+00 : f32
    %314 = vector.shape_cast %313 : vector<16x1xi1> to vector<16x1xi1>
    %315 = vector.broadcast %314 : vector<16x1xi1> to vector<16x32xi1>
    %316 = vector.broadcast %cst_198 : f32 to vector<16x32xf32>
    %317 = arith.select %315, %311, %316 : vector<16x32xi1>, vector<16x32xf32>
    %318 = arith.truncf %317 : vector<16x32xf32> to vector<16x32xbf16>
    %c3_199 = arith.constant 3 : index
    %c0_200 = arith.constant 0 : index
    %c0_201 = arith.constant 0 : index
    %319 = vector.load %arg11[%c3_199, %c0_200, %c0_201] : memref<9x32x128xbf16, #tpu.memory_space<vmem>>, vector<1x32x128xbf16>
    %320 = vector.shape_cast %319 : vector<1x32x128xbf16> to vector<32x128xbf16>
    %cst_202 = arith.constant dense<0.000000e+00> : vector<16x128xf32>
    %321 = tpu.matmul %318, %320, %cst_202 {dimension_numbers = #tpu.dot_dimension_numbers<[1], [0], [0], [1], [0, 0, 1, 1], [], []>} : vector<16x32xbf16>, vector<32x128xbf16>, vector<16x128xf32> -> vector<16x128xf32>
    %322 = arith.addf %310, %321 : vector<16x128xf32>
    %c5_203 = arith.constant 5 : index
    %c0_204 = arith.constant 0 : index
    %323 = vector.load %arg22[%c5_203, %c0_204] : memref<26x32xf32, #tpu.memory_space<vmem>>, vector<16x32xf32>
    %324 = arith.truncf %323 : vector<16x32xf32> to vector<16x32xbf16>
    %c4_205 = arith.constant 4 : index
    %c0_206 = arith.constant 0 : index
    %c0_207 = arith.constant 0 : index
    %325 = vector.load %arg11[%c4_205, %c0_206, %c0_207] : memref<9x32x128xbf16, #tpu.memory_space<vmem>>, vector<1x32x128xbf16>
    %326 = vector.shape_cast %325 : vector<1x32x128xbf16> to vector<32x128xbf16>
    %cst_208 = arith.constant dense<0.000000e+00> : vector<16x128xf32>
    %327 = tpu.matmul %324, %326, %cst_208 {dimension_numbers = #tpu.dot_dimension_numbers<[1], [0], [0], [1], [0, 0, 1, 1], [], []>} : vector<16x32xbf16>, vector<32x128xbf16>, vector<16x128xf32> -> vector<16x128xf32>
    %328 = arith.addf %322, %327 : vector<16x128xf32>
    %c6_209 = arith.constant 6 : index
    %c0_210 = arith.constant 0 : index
    %329 = vector.load %arg22[%c6_209, %c0_210] : memref<26x32xf32, #tpu.memory_space<vmem>>, vector<16x32xf32>
    %c3_i32_211 = arith.constant 3 : i32
    %330 = vector.broadcast %c3_i32_211 : i32 to vector<16x1xi32>
    %331 = arith.cmpi ne, %279, %330 : vector<16x1xi32>
    %cst_212 = arith.constant 0.000000e+00 : f32
    %332 = vector.shape_cast %331 : vector<16x1xi1> to vector<16x1xi1>
    %333 = vector.broadcast %332 : vector<16x1xi1> to vector<16x32xi1>
    %334 = vector.broadcast %cst_212 : f32 to vector<16x32xf32>
    %335 = arith.select %333, %329, %334 : vector<16x32xi1>, vector<16x32xf32>
    %336 = arith.truncf %335 : vector<16x32xf32> to vector<16x32xbf16>
    %c5_213 = arith.constant 5 : index
    %c0_214 = arith.constant 0 : index
    %c0_215 = arith.constant 0 : index
    %337 = vector.load %arg11[%c5_213, %c0_214, %c0_215] : memref<9x32x128xbf16, #tpu.memory_space<vmem>>, vector<1x32x128xbf16>
    %338 = vector.shape_cast %337 : vector<1x32x128xbf16> to vector<32x128xbf16>
    %cst_216 = arith.constant dense<0.000000e+00> : vector<16x128xf32>
    %339 = tpu.matmul %336, %338, %cst_216 {dimension_numbers = #tpu.dot_dimension_numbers<[1], [0], [0], [1], [0, 0, 1, 1], [], []>} : vector<16x32xbf16>, vector<32x128xbf16>, vector<16x128xf32> -> vector<16x128xf32>
    %340 = arith.addf %328, %339 : vector<16x128xf32>
    %c8_217 = arith.constant 8 : index
    %c0_218 = arith.constant 0 : index
    %341 = vector.load %arg22[%c8_217, %c0_218] : memref<26x32xf32, #tpu.memory_space<vmem>>, vector<16x32xf32>
    %c0_i32_219 = arith.constant 0 : i32
    %342 = vector.broadcast %c0_i32_219 : i32 to vector<16x1xi32>
    %343 = arith.cmpi ne, %279, %342 : vector<16x1xi32>
    %cst_220 = arith.constant 0.000000e+00 : f32
    %344 = vector.shape_cast %343 : vector<16x1xi1> to vector<16x1xi1>
    %345 = vector.broadcast %344 : vector<16x1xi1> to vector<16x32xi1>
    %346 = vector.broadcast %cst_220 : f32 to vector<16x32xf32>
    %347 = arith.select %345, %341, %346 : vector<16x32xi1>, vector<16x32xf32>
    %348 = arith.truncf %347 : vector<16x32xf32> to vector<16x32xbf16>
    %c6_221 = arith.constant 6 : index
    %c0_222 = arith.constant 0 : index
    %c0_223 = arith.constant 0 : index
    %349 = vector.load %arg11[%c6_221, %c0_222, %c0_223] : memref<9x32x128xbf16, #tpu.memory_space<vmem>>, vector<1x32x128xbf16>
    %350 = vector.shape_cast %349 : vector<1x32x128xbf16> to vector<32x128xbf16>
    %cst_224 = arith.constant dense<0.000000e+00> : vector<16x128xf32>
    %351 = tpu.matmul %348, %350, %cst_224 {dimension_numbers = #tpu.dot_dimension_numbers<[1], [0], [0], [1], [0, 0, 1, 1], [], []>} : vector<16x32xbf16>, vector<32x128xbf16>, vector<16x128xf32> -> vector<16x128xf32>
    %352 = arith.addf %340, %351 : vector<16x128xf32>
    %c9_225 = arith.constant 9 : index
    %c0_226 = arith.constant 0 : index
    %353 = vector.load %arg22[%c9_225, %c0_226] : memref<26x32xf32, #tpu.memory_space<vmem>>, vector<16x32xf32>
    %354 = arith.truncf %353 : vector<16x32xf32> to vector<16x32xbf16>
    %c7_227 = arith.constant 7 : index
    %c0_228 = arith.constant 0 : index
    %c0_229 = arith.constant 0 : index
    %355 = vector.load %arg11[%c7_227, %c0_228, %c0_229] : memref<9x32x128xbf16, #tpu.memory_space<vmem>>, vector<1x32x128xbf16>
    %356 = vector.shape_cast %355 : vector<1x32x128xbf16> to vector<32x128xbf16>
    %cst_230 = arith.constant dense<0.000000e+00> : vector<16x128xf32>
    %357 = tpu.matmul %354, %356, %cst_230 {dimension_numbers = #tpu.dot_dimension_numbers<[1], [0], [0], [1], [0, 0, 1, 1], [], []>} : vector<16x32xbf16>, vector<32x128xbf16>, vector<16x128xf32> -> vector<16x128xf32>
    %358 = arith.addf %352, %357 : vector<16x128xf32>
    %c10_231 = arith.constant 10 : index
    %c0_232 = arith.constant 0 : index
    %359 = vector.load %arg22[%c10_231, %c0_232] : memref<26x32xf32, #tpu.memory_space<vmem>>, vector<16x32xf32>
    %c3_i32_233 = arith.constant 3 : i32
    %360 = vector.broadcast %c3_i32_233 : i32 to vector<16x1xi32>
    %361 = arith.cmpi ne, %279, %360 : vector<16x1xi32>
    %cst_234 = arith.constant 0.000000e+00 : f32
    %362 = vector.shape_cast %361 : vector<16x1xi1> to vector<16x1xi1>
    %363 = vector.broadcast %362 : vector<16x1xi1> to vector<16x32xi1>
    %364 = vector.broadcast %cst_234 : f32 to vector<16x32xf32>
    %365 = arith.select %363, %359, %364 : vector<16x32xi1>, vector<16x32xf32>
    %366 = arith.truncf %365 : vector<16x32xf32> to vector<16x32xbf16>
    %c8_235 = arith.constant 8 : index
    %c0_236 = arith.constant 0 : index
    %c0_237 = arith.constant 0 : index
    %367 = vector.load %arg11[%c8_235, %c0_236, %c0_237] : memref<9x32x128xbf16, #tpu.memory_space<vmem>>, vector<1x32x128xbf16>
    %368 = vector.shape_cast %367 : vector<1x32x128xbf16> to vector<32x128xbf16>
    %cst_238 = arith.constant dense<0.000000e+00> : vector<16x128xf32>
    %369 = tpu.matmul %366, %368, %cst_238 {dimension_numbers = #tpu.dot_dimension_numbers<[1], [0], [0], [1], [0, 0, 1, 1], [], []>} : vector<16x32xbf16>, vector<32x128xbf16>, vector<16x128xf32> -> vector<16x128xf32>
    %370 = arith.addf %358, %369 : vector<16x128xf32>
    %c0_239 = arith.constant 0 : index
    %c0_240 = arith.constant 0 : index
    %371 = vector.load %arg12[%c0_239, %c0_240] : memref<1x128xf32, #tpu.memory_space<vmem>>, vector<1x128xf32>
    %372 = vector.broadcast %371 : vector<1x128xf32> to vector<16x128xf32>
    %373 = arith.mulf %370, %372 : vector<16x128xf32>
    %c0_241 = arith.constant 0 : index
    %c0_242 = arith.constant 0 : index
    %374 = vector.load %arg13[%c0_241, %c0_242] : memref<1x128xf32, #tpu.memory_space<vmem>>, vector<1x128xf32>
    %375 = vector.broadcast %374 : vector<1x128xf32> to vector<16x128xf32>
    %376 = arith.addf %373, %375 : vector<16x128xf32>
    %377 = vector.extract_strided_slice %376 {offsets = [0, 0], sizes = [16, 64], strides = [1, 1]} : vector<16x128xf32> to vector<16x64xf32>
    %cst_243 = arith.constant 0.000000e+00 : f32
    %378 = vector.broadcast %cst_243 : f32 to vector<16x64xf32>
    %379 = arith.maximumf %377, %378 : vector<16x64xf32>
    %380 = vector.extract_strided_slice %376 {offsets = [0, 64], sizes = [16, 64], strides = [1, 1]} : vector<16x128xf32> to vector<16x64xf32>
    %cst_244 = arith.constant 0.000000e+00 : f32
    %381 = vector.broadcast %cst_244 : f32 to vector<10x64xf32>
    %c0_245 = arith.constant 0 : index
    %c0_246 = arith.constant 0 : index
    %382 = vector.load %arg23[%c0_245, %c0_246] : memref<10x64xf32, #tpu.memory_space<vmem>>, vector<10x64xf32>
    tpu.vector_store %arg23[%c0_245, %c0_246], %381 {strides = array<i32>} : memref<10x64xf32, #tpu.memory_space<vmem>>, vector<10x64xf32>,
    %383 = vector.extract_strided_slice %379 {offsets = [0, 0], sizes = [1, 64], strides = [1, 1]} : vector<16x64xf32> to vector<1x64xf32>
    %c3_247 = arith.constant 3 : index
    %c0_248 = arith.constant 0 : index
    %384 = vector.load %arg23[%c3_247, %c0_248] : memref<10x64xf32, #tpu.memory_space<vmem>>, vector<1x64xf32>
    tpu.vector_store %arg23[%c3_247, %c0_248], %383 {strides = array<i32>} : memref<10x64xf32, #tpu.memory_space<vmem>>, vector<1x64xf32>,
    %385 = vector.extract_strided_slice %380 {offsets = [0, 0], sizes = [1, 64], strides = [1, 1]} : vector<16x64xf32> to vector<1x64xf32>
    %c0_249 = arith.constant 0 : index
    %c0_250 = arith.constant 0 : index
    %386 = vector.load %arg24[%c0_249, %c0_250] : memref<4x64xf32, #tpu.memory_space<vmem>>, vector<1x64xf32>
    tpu.vector_store %arg24[%c0_249, %c0_250], %385 {strides = array<i32>} : memref<4x64xf32, #tpu.memory_space<vmem>>, vector<1x64xf32>,
    %387 = vector.extract_strided_slice %379 {offsets = [2, 0], sizes = [1, 64], strides = [1, 1]} : vector<16x64xf32> to vector<1x64xf32>
    %c4_251 = arith.constant 4 : index
    %c0_252 = arith.constant 0 : index
    %388 = vector.load %arg23[%c4_251, %c0_252] : memref<10x64xf32, #tpu.memory_space<vmem>>, vector<1x64xf32>
    tpu.vector_store %arg23[%c4_251, %c0_252], %387 {strides = array<i32>} : memref<10x64xf32, #tpu.memory_space<vmem>>, vector<1x64xf32>,
    %389 = vector.extract_strided_slice %380 {offsets = [2, 0], sizes = [1, 64], strides = [1, 1]} : vector<16x64xf32> to vector<1x64xf32>
    %c1_253 = arith.constant 1 : index
    %c0_254 = arith.constant 0 : index
    %390 = vector.load %arg24[%c1_253, %c0_254] : memref<4x64xf32, #tpu.memory_space<vmem>>, vector<1x64xf32>
    tpu.vector_store %arg24[%c1_253, %c0_254], %389 {strides = array<i32>} : memref<4x64xf32, #tpu.memory_space<vmem>>, vector<1x64xf32>,
    %391 = vector.extract_strided_slice %379 {offsets = [8, 0], sizes = [1, 64], strides = [1, 1]} : vector<16x64xf32> to vector<1x64xf32>
    %c5_255 = arith.constant 5 : index
    %c0_256 = arith.constant 0 : index
    %392 = vector.load %arg23[%c5_255, %c0_256] : memref<10x64xf32, #tpu.memory_space<vmem>>, vector<1x64xf32>
    tpu.vector_store %arg23[%c5_255, %c0_256], %391 {strides = array<i32>} : memref<10x64xf32, #tpu.memory_space<vmem>>, vector<1x64xf32>,
    %393 = vector.extract_strided_slice %380 {offsets = [8, 0], sizes = [1, 64], strides = [1, 1]} : vector<16x64xf32> to vector<1x64xf32>
    %c2_257 = arith.constant 2 : index
    %c0_258 = arith.constant 0 : index
    %394 = vector.load %arg24[%c2_257, %c0_258] : memref<4x64xf32, #tpu.memory_space<vmem>>, vector<1x64xf32>
    tpu.vector_store %arg24[%c2_257, %c0_258], %393 {strides = array<i32>} : memref<4x64xf32, #tpu.memory_space<vmem>>, vector<1x64xf32>,
    %395 = vector.extract_strided_slice %379 {offsets = [10, 0], sizes = [1, 64], strides = [1, 1]} : vector<16x64xf32> to vector<1x64xf32>
    %c6_259 = arith.constant 6 : index
    %c0_260 = arith.constant 0 : index
    %396 = vector.load %arg23[%c6_259, %c0_260] : memref<10x64xf32, #tpu.memory_space<vmem>>, vector<1x64xf32>
    tpu.vector_store %arg23[%c6_259, %c0_260], %395 {strides = array<i32>} : memref<10x64xf32, #tpu.memory_space<vmem>>, vector<1x64xf32>,
    %397 = vector.extract_strided_slice %380 {offsets = [10, 0], sizes = [1, 64], strides = [1, 1]} : vector<16x64xf32> to vector<1x64xf32>
    %c3_261 = arith.constant 3 : index
    %c0_262 = arith.constant 0 : index
    %398 = vector.load %arg24[%c3_261, %c0_262] : memref<4x64xf32, #tpu.memory_space<vmem>>, vector<1x64xf32>
    tpu.vector_store %arg24[%c3_261, %c0_262], %397 {strides = array<i32>} : memref<4x64xf32, #tpu.memory_space<vmem>>, vector<1x64xf32>,
    %399 = tpu.iota {dimensions = array<i32: 0>} : vector<4x1xi32>
    %c2_i32 = arith.constant 2 : i32
    %c0_i32_263 = arith.constant 0 : i32
    %400 = arith.cmpi eq, %c2_i32, %c0_i32_263 : i32
    %c1_i32_264 = arith.constant 1 : i32
    %401 = arith.select %400, %c1_i32_264, %c2_i32 : i32
    %402 = vector.broadcast %401 : i32 to vector<4x1xi32>
    %403 = arith.remsi %399, %402 : vector<4x1xi32>
    %c0_i32_265 = arith.constant 0 : i32
    %404 = vector.broadcast %c0_i32_265 : i32 to vector<4x1xi32>
    %405 = arith.cmpi ne, %403, %404 : vector<4x1xi32>
    %c0_i32_266 = arith.constant 0 : i32
    %406 = vector.broadcast %c0_i32_266 : i32 to vector<4x1xi32>
    %407 = arith.cmpi slt, %403, %406 : vector<4x1xi32>
    %c0_i32_267 = arith.constant 0 : i32
    %408 = arith.cmpi slt, %401, %c0_i32_267 : i32
    %409 = vector.broadcast %408 : i1 to vector<4x1xi1>
    %410 = vector.broadcast %409 : vector<4x1xi1> to vector<4x1xi1>
    %411 = arith.xori %407, %410 : vector<4x1xi1>
    %412 = arith.andi %411, %405 : vector<4x1xi1>
    %413 = vector.broadcast %401 : i32 to vector<4x1xi32>
    %414 = arith.addi %403, %413 : vector<4x1xi32>
    %415 = arith.select %412, %414, %403 : vector<4x1xi1>, vector<4x1xi32>
    %cst_268 = arith.constant 0.000000e+00 : f32
    %416 = vector.broadcast %cst_268 : f32 to vector<4x64xf32>
    %c0_269 = arith.constant 0 : index
    %c0_270 = arith.constant 0 : index
    %417 = vector.load %arg23[%c0_269, %c0_270] : memref<10x64xf32, #tpu.memory_space<vmem>>, vector<4x64xf32>
    %c0_i32_271 = arith.constant 0 : i32
    %418 = vector.broadcast %c0_i32_271 : i32 to vector<4x1xi32>
    %419 = arith.cmpi ne, %415, %418 : vector<4x1xi32>
    %cst_272 = arith.constant 0.000000e+00 : f32
    %420 = vector.shape_cast %419 : vector<4x1xi1> to vector<4x1xi1>
    %421 = vector.broadcast %420 : vector<4x1xi1> to vector<4x64xi1>
    %422 = vector.broadcast %cst_272 : f32 to vector<4x64xf32>
    %423 = arith.select %421, %417, %422 : vector<4x64xi1>, vector<4x64xf32>
    %424 = arith.truncf %423 : vector<4x64xf32> to vector<4x64xbf16>
    %c0_273 = arith.constant 0 : index
    %c0_274 = arith.constant 0 : index
    %c0_275 = arith.constant 0 : index
    %425 = vector.load %arg14[%c0_273, %c0_274, %c0_275] : memref<9x64x64xbf16, #tpu.memory_space<vmem>>, vector<1x64x64xbf16>
    %426 = vector.shape_cast %425 : vector<1x64x64xbf16> to vector<64x64xbf16>
    %cst_276 = arith.constant dense<0.000000e+00> : vector<4x64xf32>
    %427 = tpu.matmul %424, %426, %cst_276 {dimension_numbers = #tpu.dot_dimension_numbers<[1], [0], [0], [1], [0, 0, 1, 1], [], []>} : vector<4x64xbf16>, vector<64x64xbf16>, vector<4x64xf32> -> vector<4x64xf32>
    %428 = arith.addf %416, %427 : vector<4x64xf32>
    %c1_277 = arith.constant 1 : index
    %c0_278 = arith.constant 0 : index
    %429 = vector.load %arg23[%c1_277, %c0_278] : memref<10x64xf32, #tpu.memory_space<vmem>>, vector<4x64xf32>
    %430 = arith.truncf %429 : vector<4x64xf32> to vector<4x64xbf16>
    %c1_279 = arith.constant 1 : index
    %c0_280 = arith.constant 0 : index
    %c0_281 = arith.constant 0 : index
    %431 = vector.load %arg14[%c1_279, %c0_280, %c0_281] : memref<9x64x64xbf16, #tpu.memory_space<vmem>>, vector<1x64x64xbf16>
    %432 = vector.shape_cast %431 : vector<1x64x64xbf16> to vector<64x64xbf16>
    %cst_282 = arith.constant dense<0.000000e+00> : vector<4x64xf32>
    %433 = tpu.matmul %430, %432, %cst_282 {dimension_numbers = #tpu.dot_dimension_numbers<[1], [0], [0], [1], [0, 0, 1, 1], [], []>} : vector<4x64xbf16>, vector<64x64xbf16>, vector<4x64xf32> -> vector<4x64xf32>
    %434 = arith.addf %428, %433 : vector<4x64xf32>
    %c2_283 = arith.constant 2 : index
    %c0_284 = arith.constant 0 : index
    %435 = vector.load %arg23[%c2_283, %c0_284] : memref<10x64xf32, #tpu.memory_space<vmem>>, vector<4x64xf32>
    %c1_i32_285 = arith.constant 1 : i32
    %436 = vector.broadcast %c1_i32_285 : i32 to vector<4x1xi32>
    %437 = arith.cmpi ne, %415, %436 : vector<4x1xi32>
    %cst_286 = arith.constant 0.000000e+00 : f32
    %438 = vector.shape_cast %437 : vector<4x1xi1> to vector<4x1xi1>
    %439 = vector.broadcast %438 : vector<4x1xi1> to vector<4x64xi1>
    %440 = vector.broadcast %cst_286 : f32 to vector<4x64xf32>
    %441 = arith.select %439, %435, %440 : vector<4x64xi1>, vector<4x64xf32>
    %442 = arith.truncf %441 : vector<4x64xf32> to vector<4x64xbf16>
    %c2_287 = arith.constant 2 : index
    %c0_288 = arith.constant 0 : index
    %c0_289 = arith.constant 0 : index
    %443 = vector.load %arg14[%c2_287, %c0_288, %c0_289] : memref<9x64x64xbf16, #tpu.memory_space<vmem>>, vector<1x64x64xbf16>
    %444 = vector.shape_cast %443 : vector<1x64x64xbf16> to vector<64x64xbf16>
    %cst_290 = arith.constant dense<0.000000e+00> : vector<4x64xf32>
    %445 = tpu.matmul %442, %444, %cst_290 {dimension_numbers = #tpu.dot_dimension_numbers<[1], [0], [0], [1], [0, 0, 1, 1], [], []>} : vector<4x64xbf16>, vector<64x64xbf16>, vector<4x64xf32> -> vector<4x64xf32>
    %446 = arith.addf %434, %445 : vector<4x64xf32>
    %c2_291 = arith.constant 2 : index
    %c0_292 = arith.constant 0 : index
    %447 = vector.load %arg23[%c2_291, %c0_292] : memref<10x64xf32, #tpu.memory_space<vmem>>, vector<4x64xf32>
    %c0_i32_293 = arith.constant 0 : i32
    %448 = vector.broadcast %c0_i32_293 : i32 to vector<4x1xi32>
    %449 = arith.cmpi ne, %415, %448 : vector<4x1xi32>
    %cst_294 = arith.constant 0.000000e+00 : f32
    %450 = vector.shape_cast %449 : vector<4x1xi1> to vector<4x1xi1>
    %451 = vector.broadcast %450 : vector<4x1xi1> to vector<4x64xi1>
    %452 = vector.broadcast %cst_294 : f32 to vector<4x64xf32>
    %453 = arith.select %451, %447, %452 : vector<4x64xi1>, vector<4x64xf32>
    %454 = arith.truncf %453 : vector<4x64xf32> to vector<4x64xbf16>
    %c3_295 = arith.constant 3 : index
    %c0_296 = arith.constant 0 : index
    %c0_297 = arith.constant 0 : index
    %455 = vector.load %arg14[%c3_295, %c0_296, %c0_297] : memref<9x64x64xbf16, #tpu.memory_space<vmem>>, vector<1x64x64xbf16>
    %456 = vector.shape_cast %455 : vector<1x64x64xbf16> to vector<64x64xbf16>
    %cst_298 = arith.constant dense<0.000000e+00> : vector<4x64xf32>
    %457 = tpu.matmul %454, %456, %cst_298 {dimension_numbers = #tpu.dot_dimension_numbers<[1], [0], [0], [1], [0, 0, 1, 1], [], []>} : vector<4x64xbf16>, vector<64x64xbf16>, vector<4x64xf32> -> vector<4x64xf32>
    %458 = arith.addf %446, %457 : vector<4x64xf32>
    %c3_299 = arith.constant 3 : index
    %c0_300 = arith.constant 0 : index
    %459 = vector.load %arg23[%c3_299, %c0_300] : memref<10x64xf32, #tpu.memory_space<vmem>>, vector<4x64xf32>
    %460 = arith.truncf %459 : vector<4x64xf32> to vector<4x64xbf16>
    %c4_301 = arith.constant 4 : index
    %c0_302 = arith.constant 0 : index
    %c0_303 = arith.constant 0 : index
    %461 = vector.load %arg14[%c4_301, %c0_302, %c0_303] : memref<9x64x64xbf16, #tpu.memory_space<vmem>>, vector<1x64x64xbf16>
    %462 = vector.shape_cast %461 : vector<1x64x64xbf16> to vector<64x64xbf16>
    %cst_304 = arith.constant dense<0.000000e+00> : vector<4x64xf32>
    %463 = tpu.matmul %460, %462, %cst_304 {dimension_numbers = #tpu.dot_dimension_numbers<[1], [0], [0], [1], [0, 0, 1, 1], [], []>} : vector<4x64xbf16>, vector<64x64xbf16>, vector<4x64xf32> -> vector<4x64xf32>
    %464 = arith.addf %458, %463 : vector<4x64xf32>
    %c4_305 = arith.constant 4 : index
    %c0_306 = arith.constant 0 : index
    %465 = vector.load %arg23[%c4_305, %c0_306] : memref<10x64xf32, #tpu.memory_space<vmem>>, vector<4x64xf32>
    %c1_i32_307 = arith.constant 1 : i32
    %466 = vector.broadcast %c1_i32_307 : i32 to vector<4x1xi32>
    %467 = arith.cmpi ne, %415, %466 : vector<4x1xi32>
    %cst_308 = arith.constant 0.000000e+00 : f32
    %468 = vector.shape_cast %467 : vector<4x1xi1> to vector<4x1xi1>
    %469 = vector.broadcast %468 : vector<4x1xi1> to vector<4x64xi1>
    %470 = vector.broadcast %cst_308 : f32 to vector<4x64xf32>
    %471 = arith.select %469, %465, %470 : vector<4x64xi1>, vector<4x64xf32>
    %472 = arith.truncf %471 : vector<4x64xf32> to vector<4x64xbf16>
    %c5_309 = arith.constant 5 : index
    %c0_310 = arith.constant 0 : index
    %c0_311 = arith.constant 0 : index
    %473 = vector.load %arg14[%c5_309, %c0_310, %c0_311] : memref<9x64x64xbf16, #tpu.memory_space<vmem>>, vector<1x64x64xbf16>
    %474 = vector.shape_cast %473 : vector<1x64x64xbf16> to vector<64x64xbf16>
    %cst_312 = arith.constant dense<0.000000e+00> : vector<4x64xf32>
    %475 = tpu.matmul %472, %474, %cst_312 {dimension_numbers = #tpu.dot_dimension_numbers<[1], [0], [0], [1], [0, 0, 1, 1], [], []>} : vector<4x64xbf16>, vector<64x64xbf16>, vector<4x64xf32> -> vector<4x64xf32>
    %476 = arith.addf %464, %475 : vector<4x64xf32>
    %c4_313 = arith.constant 4 : index
    %c0_314 = arith.constant 0 : index
    %477 = vector.load %arg23[%c4_313, %c0_314] : memref<10x64xf32, #tpu.memory_space<vmem>>, vector<4x64xf32>
    %c0_i32_315 = arith.constant 0 : i32
    %478 = vector.broadcast %c0_i32_315 : i32 to vector<4x1xi32>
    %479 = arith.cmpi ne, %415, %478 : vector<4x1xi32>
    %cst_316 = arith.constant 0.000000e+00 : f32
    %480 = vector.shape_cast %479 : vector<4x1xi1> to vector<4x1xi1>
    %481 = vector.broadcast %480 : vector<4x1xi1> to vector<4x64xi1>
    %482 = vector.broadcast %cst_316 : f32 to vector<4x64xf32>
    %483 = arith.select %481, %477, %482 : vector<4x64xi1>, vector<4x64xf32>
    %484 = arith.truncf %483 : vector<4x64xf32> to vector<4x64xbf16>
    %c6_317 = arith.constant 6 : index
    %c0_318 = arith.constant 0 : index
    %c0_319 = arith.constant 0 : index
    %485 = vector.load %arg14[%c6_317, %c0_318, %c0_319] : memref<9x64x64xbf16, #tpu.memory_space<vmem>>, vector<1x64x64xbf16>
    %486 = vector.shape_cast %485 : vector<1x64x64xbf16> to vector<64x64xbf16>
    %cst_320 = arith.constant dense<0.000000e+00> : vector<4x64xf32>
    %487 = tpu.matmul %484, %486, %cst_320 {dimension_numbers = #tpu.dot_dimension_numbers<[1], [0], [0], [1], [0, 0, 1, 1], [], []>} : vector<4x64xbf16>, vector<64x64xbf16>, vector<4x64xf32> -> vector<4x64xf32>
    %488 = arith.addf %476, %487 : vector<4x64xf32>
    %c5_321 = arith.constant 5 : index
    %c0_322 = arith.constant 0 : index
    %489 = vector.load %arg23[%c5_321, %c0_322] : memref<10x64xf32, #tpu.memory_space<vmem>>, vector<4x64xf32>
    %490 = arith.truncf %489 : vector<4x64xf32> to vector<4x64xbf16>
    %c7_323 = arith.constant 7 : index
    %c0_324 = arith.constant 0 : index
    %c0_325 = arith.constant 0 : index
    %491 = vector.load %arg14[%c7_323, %c0_324, %c0_325] : memref<9x64x64xbf16, #tpu.memory_space<vmem>>, vector<1x64x64xbf16>
    %492 = vector.shape_cast %491 : vector<1x64x64xbf16> to vector<64x64xbf16>
    %cst_326 = arith.constant dense<0.000000e+00> : vector<4x64xf32>
    %493 = tpu.matmul %490, %492, %cst_326 {dimension_numbers = #tpu.dot_dimension_numbers<[1], [0], [0], [1], [0, 0, 1, 1], [], []>} : vector<4x64xbf16>, vector<64x64xbf16>, vector<4x64xf32> -> vector<4x64xf32>
    %494 = arith.addf %488, %493 : vector<4x64xf32>
    %c6_327 = arith.constant 6 : index
    %c0_328 = arith.constant 0 : index
    %495 = vector.load %arg23[%c6_327, %c0_328] : memref<10x64xf32, #tpu.memory_space<vmem>>, vector<4x64xf32>
    %c1_i32_329 = arith.constant 1 : i32
    %496 = vector.broadcast %c1_i32_329 : i32 to vector<4x1xi32>
    %497 = arith.cmpi ne, %415, %496 : vector<4x1xi32>
    %cst_330 = arith.constant 0.000000e+00 : f32
    %498 = vector.shape_cast %497 : vector<4x1xi1> to vector<4x1xi1>
    %499 = vector.broadcast %498 : vector<4x1xi1> to vector<4x64xi1>
    %500 = vector.broadcast %cst_330 : f32 to vector<4x64xf32>
    %501 = arith.select %499, %495, %500 : vector<4x64xi1>, vector<4x64xf32>
    %502 = arith.truncf %501 : vector<4x64xf32> to vector<4x64xbf16>
    %c8_331 = arith.constant 8 : index
    %c0_332 = arith.constant 0 : index
    %c0_333 = arith.constant 0 : index
    %503 = vector.load %arg14[%c8_331, %c0_332, %c0_333] : memref<9x64x64xbf16, #tpu.memory_space<vmem>>, vector<1x64x64xbf16>
    %504 = vector.shape_cast %503 : vector<1x64x64xbf16> to vector<64x64xbf16>
    %cst_334 = arith.constant dense<0.000000e+00> : vector<4x64xf32>
    %505 = tpu.matmul %502, %504, %cst_334 {dimension_numbers = #tpu.dot_dimension_numbers<[1], [0], [0], [1], [0, 0, 1, 1], [], []>} : vector<4x64xbf16>, vector<64x64xbf16>, vector<4x64xf32> -> vector<4x64xf32>
    %506 = arith.addf %494, %505 : vector<4x64xf32>
    %c0_335 = arith.constant 0 : index
    %c0_336 = arith.constant 0 : index
    %507 = vector.load %arg15[%c0_335, %c0_336] : memref<1x64xf32, #tpu.memory_space<vmem>>, vector<1x64xf32>
    %508 = vector.broadcast %507 : vector<1x64xf32> to vector<4x64xf32>
    %509 = arith.mulf %506, %508 : vector<4x64xf32>
    %c0_337 = arith.constant 0 : index
    %c0_338 = arith.constant 0 : index
    %510 = vector.load %arg16[%c0_337, %c0_338] : memref<1x64xf32, #tpu.memory_space<vmem>>, vector<1x64xf32>
    %511 = vector.broadcast %510 : vector<1x64xf32> to vector<4x64xf32>
    %512 = arith.addf %509, %511 : vector<4x64xf32>
    %c0_339 = arith.constant 0 : index
    %c0_340 = arith.constant 0 : index
    %513 = vector.load %arg24[%c0_339, %c0_340] : memref<4x64xf32, #tpu.memory_space<vmem>>, vector<4x64xf32>
    %514 = arith.addf %512, %513 : vector<4x64xf32>
    %cst_341 = arith.constant 0.000000e+00 : f32
    %515 = vector.broadcast %cst_341 : f32 to vector<4x64xf32>
    %516 = arith.maximumf %514, %515 : vector<4x64xf32>
    %cst_342 = arith.constant dense<0.000000e+00> : vector<64xf32>
    %517 = vector.multi_reduction <add>, %516, %cst_342 [0] : vector<4x64xf32> to vector<64xf32>
    %518 = vector.shape_cast %517 : vector<64xf32> to vector<1x64xf32>
    %cst_343 = arith.constant 4.000000e+00 : f32
    %519 = vector.broadcast %cst_343 : f32 to vector<1x64xf32>
    %520 = arith.divf %518, %519 : vector<1x64xf32>
    %521 = arith.truncf %520 : vector<1x64xf32> to vector<1x64xbf16>
    %c0_344 = arith.constant 0 : index
    %c0_345 = arith.constant 0 : index
    %522 = vector.load %arg17[%c0_344, %c0_345] : memref<64x128xbf16, #tpu.memory_space<vmem>>, vector<64x128xbf16>
    %cst_346 = arith.constant dense<0.000000e+00> : vector<1x128xf32>
    %523 = tpu.matmul %521, %522, %cst_346 {dimension_numbers = #tpu.dot_dimension_numbers<[1], [0], [0], [1], [0, 0, 1, 1], [], []>} : vector<1x64xbf16>, vector<64x128xbf16>, vector<1x128xf32> -> vector<1x128xf32>
    %c0_347 = arith.constant 0 : index
    %c0_348 = arith.constant 0 : index
    %524 = vector.load %arg18[%c0_347, %c0_348] : memref<1x128xf32, #tpu.memory_space<vmem>>, vector<1x128xf32>
    %525 = arith.addf %523, %524 : vector<1x128xf32>
    %c0_349 = arith.constant 0 : index
    %c0_350 = arith.constant 0 : index
    %c0_351 = arith.constant 0 : index
    %526 = vector.load %arg19[%c0_349, %c0_350, %c0_351] : memref<1x1x128xf32, #tpu.memory_space<vmem>>, vector<1x1x128xf32>
    %527 = vector.shape_cast %526 : vector<1x1x128xf32> to vector<1x128xf32>
    %528 = vector.shape_cast %525 : vector<1x128xf32> to vector<1x1x128xf32>
    tpu.vector_store %arg19[%c0_349, %c0_350, %c0_351], %528 {strides = array<i32>} : memref<1x1x128xf32, #tpu.memory_space<vmem>>, vector<1x1x128xf32>,
    return
  }
  func.func @transform_0(%arg0: i32) -> (i32, i32, i32) {
    %c0_i32 = arith.constant 0 : i32
    %c0_i32_0 = arith.constant 0 : i32
    %c0_i32_1 = arith.constant 0 : i32
    return %arg0, %c0_i32, %c0_i32_0 : i32, i32, i32
  }
  func.func @transform_1(%arg0: i32) -> (i32, i32) {
    %c0_i32 = arith.constant 0 : i32
    %c0_i32_0 = arith.constant 0 : i32
    %c0_i32_1 = arith.constant 0 : i32
    return %c0_i32, %c0_i32_0 : i32, i32
  }
  func.func @transform_2(%arg0: i32) -> (i32, i32) {
    %c0_i32 = arith.constant 0 : i32
    %c0_i32_0 = arith.constant 0 : i32
    %c0_i32_1 = arith.constant 0 : i32
    return %c0_i32, %c0_i32_0 : i32, i32
  }
  func.func @transform_3(%arg0: i32) -> (i32, i32) {
    %c0_i32 = arith.constant 0 : i32
    %c0_i32_0 = arith.constant 0 : i32
    %c0_i32_1 = arith.constant 0 : i32
    return %c0_i32, %c0_i32_0 : i32, i32
  }
  func.func @transform_4(%arg0: i32) -> (i32, i32, i32) {
    %c0_i32 = arith.constant 0 : i32
    %c0_i32_0 = arith.constant 0 : i32
    %c0_i32_1 = arith.constant 0 : i32
    %c0_i32_2 = arith.constant 0 : i32
    return %c0_i32, %c0_i32_0, %c0_i32_1 : i32, i32, i32
  }
  func.func @transform_5(%arg0: i32) -> (i32, i32) {
    %c0_i32 = arith.constant 0 : i32
    %c0_i32_0 = arith.constant 0 : i32
    %c0_i32_1 = arith.constant 0 : i32
    return %c0_i32, %c0_i32_0 : i32, i32
  }
  func.func @transform_6(%arg0: i32) -> (i32, i32) {
    %c0_i32 = arith.constant 0 : i32
    %c0_i32_0 = arith.constant 0 : i32
    %c0_i32_1 = arith.constant 0 : i32
    return %c0_i32, %c0_i32_0 : i32, i32
  }
  func.func @transform_7(%arg0: i32) -> (i32, i32, i32) {
    %c0_i32 = arith.constant 0 : i32
    %c0_i32_0 = arith.constant 0 : i32
    %c0_i32_1 = arith.constant 0 : i32
    %c0_i32_2 = arith.constant 0 : i32
    return %c0_i32, %c0_i32_0, %c0_i32_1 : i32, i32, i32
  }
  func.func @transform_8(%arg0: i32) -> (i32, i32) {
    %c0_i32 = arith.constant 0 : i32
    %c0_i32_0 = arith.constant 0 : i32
    %c0_i32_1 = arith.constant 0 : i32
    return %c0_i32, %c0_i32_0 : i32, i32
  }
  func.func @transform_9(%arg0: i32) -> (i32, i32) {
    %c0_i32 = arith.constant 0 : i32
    %c0_i32_0 = arith.constant 0 : i32
    %c0_i32_1 = arith.constant 0 : i32
    return %c0_i32, %c0_i32_0 : i32, i32
  }
  func.func @transform_10(%arg0: i32) -> (i32, i32, i32) {
    %c0_i32 = arith.constant 0 : i32
    %c0_i32_0 = arith.constant 0 : i32
    %c0_i32_1 = arith.constant 0 : i32
    %c0_i32_2 = arith.constant 0 : i32
    return %c0_i32, %c0_i32_0, %c0_i32_1 : i32, i32, i32
  }
  func.func @transform_11(%arg0: i32) -> (i32, i32) {
    %c0_i32 = arith.constant 0 : i32
    %c0_i32_0 = arith.constant 0 : i32
    %c0_i32_1 = arith.constant 0 : i32
    return %c0_i32, %c0_i32_0 : i32, i32
  }
  func.func @transform_12(%arg0: i32) -> (i32, i32) {
    %c0_i32 = arith.constant 0 : i32
    %c0_i32_0 = arith.constant 0 : i32
    %c0_i32_1 = arith.constant 0 : i32
    return %c0_i32, %c0_i32_0 : i32, i32
  }
  func.func @transform_13(%arg0: i32) -> (i32, i32, i32) {
    %c0_i32 = arith.constant 0 : i32
    %c0_i32_0 = arith.constant 0 : i32
    %c0_i32_1 = arith.constant 0 : i32
    %c0_i32_2 = arith.constant 0 : i32
    return %c0_i32, %c0_i32_0, %c0_i32_1 : i32, i32, i32
  }
  func.func @transform_14(%arg0: i32) -> (i32, i32) {
    %c0_i32 = arith.constant 0 : i32
    %c0_i32_0 = arith.constant 0 : i32
    %c0_i32_1 = arith.constant 0 : i32
    return %c0_i32, %c0_i32_0 : i32, i32
  }
  func.func @transform_15(%arg0: i32) -> (i32, i32) {
    %c0_i32 = arith.constant 0 : i32
    %c0_i32_0 = arith.constant 0 : i32
    %c0_i32_1 = arith.constant 0 : i32
    return %c0_i32, %c0_i32_0 : i32, i32
  }
  func.func @transform_16(%arg0: i32) -> (i32, i32) {
    %c0_i32 = arith.constant 0 : i32
    %c0_i32_0 = arith.constant 0 : i32
    %c0_i32_1 = arith.constant 0 : i32
    return %c0_i32, %c0_i32_0 : i32, i32
  }
  func.func @transform_17(%arg0: i32) -> (i32, i32) {
    %c0_i32 = arith.constant 0 : i32
    %c0_i32_0 = arith.constant 0 : i32
    %c0_i32_1 = arith.constant 0 : i32
    return %c0_i32, %c0_i32_0 : i32, i32
  }
  func.func @transform_18(%arg0: i32) -> (i32, i32, i32) {
    %c0_i32 = arith.constant 0 : i32
    %c0_i32_0 = arith.constant 0 : i32
    %c0_i32_1 = arith.constant 0 : i32
    return %arg0, %c0_i32, %c0_i32_0 : i32, i32, i32
  }
}

</mosaic_0001>

<llo_original>
// kernel: osnet_forward.1
$region0: #{osnet_forward.1}
  #allocation0 [shape = 'u32[]', space=smem, size = 0x4, offset = 0x4, fixed_abs, tag = 'smem constant byte address 0x4 - core index']
  #allocation1 [shape = 'u32[144,128]{1,0:T(1,128)}', space=vmem, size = 0x12000, scoped, tag = 'internal scratch']
  #allocation2 [shape = 'f32[26,16]{1,0:T(8,128)}', space=vmem, size = 0x4000, scoped, tag = 'scratch operand']
  #allocation3 [shape = 'f32[26,32]{1,0:T(8,128)}', space=vmem, size = 0x4000, scoped, tag = 'scratch operand']
  #allocation4 [shape = 'f32[26,32]{1,0:T(8,128)}', space=vmem, size = 0x4000, scoped, tag = 'scratch operand']
  #allocation5 [shape = 'f32[10,64]{1,0:T(8,128)}', space=vmem, size = 0x2000, scoped, tag = 'scratch operand']
  #allocation6 [shape = 'f32[4,64]{1,0:T(4,128)}', space=vmem, size = 0x800, scoped, tag = 'scratch operand']
  %s0 = inlined_call_operand.vmem [shape: bf16[2,64,32], index: 0, kind: input, shape index: {}]
  %s1 = inlined_call_operand.vmem [shape: bf16[32,16], index: 1, kind: input, shape index: {}]
  %s2 = inlined_call_operand.vmem [shape: f32[1,16], index: 2, kind: input, shape index: {}]
  %s3 = inlined_call_operand.vmem [shape: f32[1,16], index: 3, kind: input, shape index: {}]
  %s4 = inlined_call_operand.vmem [shape: bf16[9,16,64], index: 4, kind: input, shape index: {}]
  %s5 = inlined_call_operand.vmem [shape: f32[1,64], index: 5, kind: input, shape index: {}]
  %s6 = inlined_call_operand.vmem [shape: f32[1,64], index: 6, kind: input, shape index: {}]
  %s7 = inlined_call_operand.vmem [shape: bf16[9,32,32], index: 7, kind: input, shape index: {}]
  %s8 = inlined_call_operand.vmem [shape: f32[1,32], index: 8, kind: input, shape index: {}]
  %s9 = inlined_call_operand.vmem [shape: f32[1,32], index: 9, kind: input, shape index: {}]
  %s10 = inlined_call_operand.vmem [shape: bf16[9,32,128], index: 10, kind: input, shape index: {}]
  %s11 = inlined_call_operand.vmem [shape: f32[1,128], index: 11, kind: input, shape index: {}]
  %s12 = inlined_call_operand.vmem [shape: f32[1,128], index: 12, kind: input, shape index: {}]
  %s13 = inlined_call_operand.vmem [shape: bf16[9,64,64], index: 13, kind: input, shape index: {}]
  %s14 = inlined_call_operand.vmem [shape: f32[1,64], index: 14, kind: input, shape index: {}]
  %s15 = inlined_call_operand.vmem [shape: f32[1,64], index: 15, kind: input, shape index: {}]
  %s16 = inlined_call_operand.vmem [shape: bf16[64,128], index: 16, kind: input, shape index: {}]
  %s17 = inlined_call_operand.vmem [shape: f32[1,128], index: 17, kind: input, shape index: {}]
  %s18 = inlined_call_operand.hbm [shape: f32[2,1,128], index: 18, kind: output, shape index: {}]
  %s19 = sld [smem:[#allocation0]]
  $region105: #{osnet_forward.1} parent=0
    _
  %s21 = ssub.s32 1, %s19
  %s22 = scalar_select 0, %s21, %s19
  $region1: #{osnet_forward.1} parent=0
    #allocation7 [shape = 'u8[1024]{0}', space=vmem, size = 0x400, scoped, tag = 'output window, operand 0']
    #allocation8 [shape = 's32[2]{0}', space=sflag, size = 0x8, scoped, tag = 'scoped memory for osnet_forward.1']
    %23 = vsyncpa [#allocation8], 0
    %s24 = scalar_lea.sflag [#allocation8], 1
    %25 = vsyncpa %s24, 0
    loop: start=0, step=1, limit=4
    $region2: #{osnet_forward.1} parent=1 // loop_pre_header
      _
    $region3: #{osnet_forward.1} parent=1 // loop_header
      %s27 = sphi 0, %s31
      %p28 = scmp.ge.s32.totalorder %s27, 4
      %s37 = sphi 0, %s39
      %s40 = sphi 0, %s37
      %s41 = sphi 0, %s40
      %s57 = sphi 0, %s41
      %s61 = sphi 0, %s61
      %s63 = sphi 0, %s61
      %s64 = sphi 0, %s63
      %s78 = sphi 0, %s64
      %s82 = sphi 0, %s82
      %s84 = sphi 0, %s82
      %s85 = sphi 0, %s84
      %s99 = sphi 0, %s85
      %s103 = sphi 0, %s103
      %s105 = sphi 0, %s103
      %s106 = sphi 0, %s105
      %s120 = sphi 0, %s106
      %s124 = sphi 0, %s124
      %s126 = sphi 0, %s124
      %s127 = sphi 0, %s126
      %s141 = sphi 0, %s127
      %s145 = sphi 0, %s145
      %s147 = sphi 0, %s145
      %s148 = sphi 0, %s147
      %s162 = sphi 0, %s148
      %s166 = sphi 0, %s166
      %s168 = sphi 0, %s166
      %s169 = sphi 0, %s168
      %s183 = sphi 0, %s169
      %s187 = sphi 0, %s187
      %s189 = sphi 0, %s187
      %s190 = sphi 0, %s189
      %s204 = sphi 0, %s190
      %s208 = sphi 0, %s208
      %s210 = sphi 0, %s208
      %s211 = sphi 0, %s210
      %s225 = sphi 0, %s211
      %s229 = sphi 0, %s229
      %s231 = sphi 0, %s229
      %s232 = sphi 0, %s231
      %s246 = sphi 0, %s232
      %s250 = sphi 0, %s250
      %s252 = sphi 0, %s250
      %s253 = sphi 0, %s252
      %s267 = sphi 0, %s253
      %s271 = sphi 0, %s271
      %s273 = sphi 0, %s271
      %s274 = sphi 0, %s273
      %s288 = sphi 0, %s274
      %s292 = sphi 0, %s292
      %s294 = sphi 0, %s292
      %s295 = sphi 0, %s294
      %s309 = sphi 0, %s295
      %s313 = sphi 0, %s313
      %s315 = sphi 0, %s313
      %s316 = sphi 0, %s315
      %s330 = sphi 0, %s316
      %s334 = sphi 0, %s334
      %s336 = sphi 0, %s334
      %s337 = sphi 0, %s336
      %s351 = sphi 0, %s337
      %s355 = sphi 0, %s355
      %s357 = sphi 0, %s355
      %s358 = sphi 0, %s357
      %s372 = sphi 0, %s358
      %s376 = sphi 0, %s376
      %s378 = sphi 0, %s376
      %s379 = sphi 0, %s378
      %s393 = sphi 0, %s379
      %s397 = sphi 0, %s397
      %s399 = sphi 0, %s397
      %s400 = sphi 0, %s399
      %s414 = sphi 0, %s400
      %s420 = sphi 0, %s422
      %s423 = sphi 0, %s420
      %s424 = sphi 0, %s423
      %s440 = sphi 0, %s424
    $region4: #{osnet_forward.1} parent=1 // loop_header_branch
      %30 = sbr.rel (%p28) target = $region8
    $region5: #{osnet_forward.1} parent=1 // loop_body
      %s32 = ssub.s32 %s27, 1
      %s33 = ssub.s32 %s27, 2
      %s34 = sadd.s32 %s27, 1
      %s35 = ssub.s32 %s27, %s34
      %p36 = scmp.eq.s32.totalorder %s35, 0
      %s38 = sadd.s32 %s37, 1
      %s39 = scalar_select %p36, %s37, %s38
      %p42 = pneg %p36
      %p43 = scmp.eq.s32.totalorder %s27, 1
      %p44 = por %p42, %p43
      %p45 = scmp.ne.s32.totalorder %s37, %s40
      %p46 = scmp.eq.s32.totalorder %s27, 0
      %p47 = por %p45, %p46
      %p48 = scmp.ne.s32.totalorder %s37, %s40
      %p49 = scmp.eq.s32.totalorder %s32, 1
      %p50 = por %p48, %p49
      %p51 = scmp.ne.s32.totalorder %s40, %s41
      %p52 = scmp.eq.s32.totalorder %s32, 0
      %p53 = por %p51, %p52
      %p54 = scmp.ne.s32.totalorder %s40, %s41
      %p55 = scmp.eq.s32.totalorder %s33, 1
      %p56 = por %p54, %p55
      %p58 = scmp.ne.s32.totalorder %s41, %s57
      %p59 = scmp.eq.s32.totalorder %s33, 0
      %p60 = por %p58, %p59
      %s62 = sadd.s32 %s61, 1
      %p65 = scmp.eq.s32.totalorder %s27, 1
      %p66 = scmp.ne.s32.totalorder %s61, %s63
      %p67 = scmp.eq.s32.totalorder %s27, 0
      %p68 = por %p66, %p67
      %p69 = scmp.ne.s32.totalorder %s61, %s63
      %p70 = scmp.eq.s32.totalorder %s32, 1
      %p71 = por %p69, %p70
      %p72 = scmp.ne.s32.totalorder %s63, %s64
      %p73 = scmp.eq.s32.totalorder %s32, 0
      %p74 = por %p72, %p73
      %p75 = scmp.ne.s32.totalorder %s63, %s64
      %p76 = scmp.eq.s32.totalorder %s33, 1
      %p77 = por %p75, %p76
      %p79 = scmp.ne.s32.totalorder %s64, %s78
      %p80 = scmp.eq.s32.totalorder %s33, 0
      %p81 = por %p79, %p80
      %s83 = sadd.s32 %s82, 1
      %p86 = scmp.eq.s32.totalorder %s27, 1
      %p87 = scmp.ne.s32.totalorder %s82, %s84
      %p88 = scmp.eq.s32.totalorder %s27, 0
      %p89 = por %p87, %p88
      %p90 = scmp.ne.s32.totalorder %s82, %s84
      %p91 = scmp.eq.s32.totalorder %s32, 1
      %p92 = por %p90, %p91
      %p93 = scmp.ne.s32.totalorder %s84, %s85
      %p94 = scmp.eq.s32.totalorder %s32, 0
      %p95 = por %p93, %p94
      %p96 = scmp.ne.s32.totalorder %s84, %s85
      %p97 = scmp.eq.s32.totalorder %s33, 1
      %p98 = por %p96, %p97
      %p100 = scmp.ne.s32.totalorder %s85, %s99
      %p101 = scmp.eq.s32.totalorder %s33, 0
      %p102 = por %p100, %p101
      %s104 = sadd.s32 %s103, 1
      %p107 = scmp.eq.s32.totalorder %s27, 1
      %p108 = scmp.ne.s32.totalorder %s103, %s105
      %p109 = scmp.eq.s32.totalorder %s27, 0
      %p110 = por %p108, %p109
      %p111 = scmp.ne.s32.totalorder %s103, %s105
      %p112 = scmp.eq.s32.totalorder %s32, 1
      %p113 = por %p111, %p112
      %p114 = scmp.ne.s32.totalorder %s105, %s106
      %p115 = scmp.eq.s32.totalorder %s32, 0
      %p116 = por %p114, %p115
      %p117 = scmp.ne.s32.totalorder %s105, %s106
      %p118 = scmp.eq.s32.totalorder %s33, 1
      %p119 = por %p117, %p118
      %p121 = scmp.ne.s32.totalorder %s106, %s120
      %p122 = scmp.eq.s32.totalorder %s33, 0
      %p123 = por %p121, %p122
      %s125 = sadd.s32 %s124, 1
      %p128 = scmp.eq.s32.totalorder %s27, 1
      %p129 = scmp.ne.s32.totalorder %s124, %s126
      %p130 = scmp.eq.s32.totalorder %s27, 0
      %p131 = por %p129, %p130
      %p132 = scmp.ne.s32.totalorder %s124, %s126
      %p133 = scmp.eq.s32.totalorder %s32, 1
      %p134 = por %p132, %p133
      %p135 = scmp.ne.s32.totalorder %s126, %s127
      %p136 = scmp.eq.s32.totalorder %s32, 0
      %p137 = por %p135, %p136
      %p138 = scmp.ne.s32.totalorder %s126, %s127
      %p139 = scmp.eq.s32.totalorder %s33, 1
      %p140 = por %p138, %p139
      %p142 = scmp.ne.s32.totalorder %s127, %s141
      %p143 = scmp.eq.s32.totalorder %s33, 0
      %p144 = por %p142, %p143
      %s146 = sadd.s32 %s145, 1
      %p149 = scmp.eq.s32.totalorder %s27, 1
      %p150 = scmp.ne.s32.totalorder %s145, %s147
      %p151 = scmp.eq.s32.totalorder %s27, 0
      %p152 = por %p150, %p151
      %p153 = scmp.ne.s32.totalorder %s145, %s147
      %p154 = scmp.eq.s32.totalorder %s32, 1
      %p155 = por %p153, %p154
      %p156 = scmp.ne.s32.totalorder %s147, %s148
      %p157 = scmp.eq.s32.totalorder %s32, 0
      %p158 = por %p156, %p157
      %p159 = scmp.ne.s32.totalorder %s147, %s148
      %p160 = scmp.eq.s32.totalorder %s33, 1
      %p161 = por %p159, %p160
      %p163 = scmp.ne.s32.totalorder %s148, %s162
      %p164 = scmp.eq.s32.totalorder %s33, 0
      %p165 = por %p163, %p164
      %s167 = sadd.s32 %s166, 1
      %p170 = scmp.eq.s32.totalorder %s27, 1
      %p171 = scmp.ne.s32.totalorder %s166, %s168
      %p172 = scmp.eq.s32.totalorder %s27, 0
      %p173 = por %p171, %p172
      %p174 = scmp.ne.s32.totalorder %s166, %s168
      %p175 = scmp.eq.s32.totalorder %s32, 1
      %p176 = por %p174, %p175
      %p177 = scmp.ne.s32.totalorder %s168, %s169
      %p178 = scmp.eq.s32.totalorder %s32, 0
      %p179 = por %p177, %p178
      %p180 = scmp.ne.s32.totalorder %s168, %s169
      %p181 = scmp.eq.s32.totalorder %s33, 1
      %p182 = por %p180, %p181
      %p184 = scmp.ne.s32.totalorder %s169, %s183
      %p185 = scmp.eq.s32.totalorder %s33, 0
      %p186 = por %p184, %p185
      %s188 = sadd.s32 %s187, 1
      %p191 = scmp.eq.s32.totalorder %s27, 1
      %p192 = scmp.ne.s32.totalorder %s187, %s189
      %p193 = scmp.eq.s32.totalorder %s27, 0
      %p194 = por %p192, %p193
      %p195 = scmp.ne.s32.totalorder %s187, %s189
      %p196 = scmp.eq.s32.totalorder %s32, 1
      %p197 = por %p195, %p196
      %p198 = scmp.ne.s32.totalorder %s189, %s190
      %p199 = scmp.eq.s32.totalorder %s32, 0
      %p200 = por %p198, %p199
      %p201 = scmp.ne.s32.totalorder %s189, %s190
      %p202 = scmp.eq.s32.totalorder %s33, 1
      %p203 = por %p201, %p202
      %p205 = scmp.ne.s32.totalorder %s190, %s204
      %p206 = scmp.eq.s32.totalorder %s33, 0
      %p207 = por %p205, %p206
      %s209 = sadd.s32 %s208, 1
      %p212 = scmp.eq.s32.totalorder %s27, 1
      %p213 = scmp.ne.s32.totalorder %s208, %s210
      %p214 = scmp.eq.s32.totalorder %s27, 0
      %p215 = por %p213, %p214
      %p216 = scmp.ne.s32.totalorder %s208, %s210
      %p217 = scmp.eq.s32.totalorder %s32, 1
      %p218 = por %p216, %p217
      %p219 = scmp.ne.s32.totalorder %s210, %s211
      %p220 = scmp.eq.s32.totalorder %s32, 0
      %p221 = por %p219, %p220
      %p222 = scmp.ne.s32.totalorder %s210, %s211
      %p223 = scmp.eq.s32.totalorder %s33, 1
      %p224 = por %p222, %p223
      %p226 = scmp.ne.s32.totalorder %s211, %s225
      %p227 = scmp.eq.s32.totalorder %s33, 0
      %p228 = por %p226, %p227
      %s230 = sadd.s32 %s229, 1
      %p233 = scmp.eq.s32.totalorder %s27, 1
      %p234 = scmp.ne.s32.totalorder %s229, %s231
      %p235 = scmp.eq.s32.totalorder %s27, 0
      %p236 = por %p234, %p235
      %p237 = scmp.ne.s32.totalorder %s229, %s231
      %p238 = scmp.eq.s32.totalorder %s32, 1
      %p239 = por %p237, %p238
      %p240 = scmp.ne.s32.totalorder %s231, %s232
      %p241 = scmp.eq.s32.totalorder %s32, 0
      %p242 = por %p240, %p241
      %p243 = scmp.ne.s32.totalorder %s231, %s232
      %p244 = scmp.eq.s32.totalorder %s33, 1
      %p245 = por %p243, %p244
      %p247 = scmp.ne.s32.totalorder %s232, %s246
      %p248 = scmp.eq.s32.totalorder %s33, 0
      %p249 = por %p247, %p248
      %s251 = sadd.s32 %s250, 1
      %p254 = scmp.eq.s32.totalorder %s27, 1
      %p255 = scmp.ne.s32.totalorder %s250, %s252
      %p256 = scmp.eq.s32.totalorder %s27, 0
      %p257 = por %p255, %p256
      %p258 = scmp.ne.s32.totalorder %s250, %s252
      %p259 = scmp.eq.s32.totalorder %s32, 1
      %p260 = por %p258, %p259
      %p261 = scmp.ne.s32.totalorder %s252, %s253
      %p262 = scmp.eq.s32.totalorder %s32, 0
      %p263 = por %p261, %p262
      %p264 = scmp.ne.s32.totalorder %s252, %s253
      %p265 = scmp.eq.s32.totalorder %s33, 1
      %p266 = por %p264, %p265
      %p268 = scmp.ne.s32.totalorder %s253, %s267
      %p269 = scmp.eq.s32.totalorder %s33, 0
      %p270 = por %p268, %p269
      %s272 = sadd.s32 %s271, 1
      %p275 = scmp.eq.s32.totalorder %s27, 1
      %p276 = scmp.ne.s32.totalorder %s271, %s273
      %p277 = scmp.eq.s32.totalorder %s27, 0
      %p278 = por %p276, %p277
      %p279 = scmp.ne.s32.totalorder %s271, %s273
      %p280 = scmp.eq.s32.totalorder %s32, 1
      %p281 = por %p279, %p280
      %p282 = scmp.ne.s32.totalorder %s273, %s274
      %p283 = scmp.eq.s32.totalorder %s32, 0
      %p284 = por %p282, %p283
      %p285 = scmp.ne.s32.totalorder %s273, %s274
      %p286 = scmp.eq.s32.totalorder %s33, 1
      %p287 = por %p285, %p286
      %p289 = scmp.ne.s32.totalorder %s274, %s288
      %p290 = scmp.eq.s32.totalorder %s33, 0
      %p291 = por %p289, %p290
      %s293 = sadd.s32 %s292, 1
      %p296 = scmp.eq.s32.totalorder %s27, 1
      %p297 = scmp.ne.s32.totalorder %s292, %s294
      %p298 = scmp.eq.s32.totalorder %s27, 0
      %p299 = por %p297, %p298
      %p300 = scmp.ne.s32.totalorder %s292, %s294
      %p301 = scmp.eq.s32.totalorder %s32, 1
      %p302 = por %p300, %p301
      %p303 = scmp.ne.s32.totalorder %s294, %s295
      %p304 = scmp.eq.s32.totalorder %s32, 0
      %p305 = por %p303, %p304
      %p306 = scmp.ne.s32.totalorder %s294, %s295
      %p307 = scmp.eq.s32.totalorder %s33, 1
      %p308 = por %p306, %p307
      %p310 = scmp.ne.s32.totalorder %s295, %s309
      %p311 = scmp.eq.s32.totalorder %s33, 0
      %p312 = por %p310, %p311
      %s314 = sadd.s32 %s313, 1
      %p317 = scmp.eq.s32.totalorder %s27, 1
      %p318 = scmp.ne.s32.totalorder %s313, %s315
      %p319 = scmp.eq.s32.totalorder %s27, 0
      %p320 = por %p318, %p319
      %p321 = scmp.ne.s32.totalorder %s313, %s315
      %p322 = scmp.eq.s32.totalorder %s32, 1
      %p323 = por %p321, %p322
      %p324 = scmp.ne.s32.totalorder %s315, %s316
      %p325 = scmp.eq.s32.totalorder %s32, 0
      %p326 = por %p324, %p325
      %p327 = scmp.ne.s32.totalorder %s315, %s316
      %p328 = scmp.eq.s32.totalorder %s33, 1
      %p329 = por %p327, %p328
      %p331 = scmp.ne.s32.totalorder %s316, %s330
      %p332 = scmp.eq.s32.totalorder %s33, 0
      %p333 = por %p331, %p332
      %s335 = sadd.s32 %s334, 1
      %p338 = scmp.eq.s32.totalorder %s27, 1
      %p339 = scmp.ne.s32.totalorder %s334, %s336
      %p340 = scmp.eq.s32.totalorder %s27, 0
      %p341 = por %p339, %p340
      %p342 = scmp.ne.s32.totalorder %s334, %s336
      %p343 = scmp.eq.s32.totalorder %s32, 1
      %p344 = por %p342, %p343
      %p345 = scmp.ne.s32.totalorder %s336, %s337
      %p346 = scmp.eq.s32.totalorder %s32, 0
      %p347 = por %p345, %p346
      %p348 = scmp.ne.s32.totalorder %s336, %s337
      %p349 = scmp.eq.s32.totalorder %s33, 1
      %p350 = por %p348, %p349
      %p352 = scmp.ne.s32.totalorder %s337, %s351
      %p353 = scmp.eq.s32.totalorder %s33, 0
      %p354 = por %p352, %p353
      %s356 = sadd.s32 %s355, 1
      %p359 = scmp.eq.s32.totalorder %s27, 1
      %p360 = scmp.ne.s32.totalorder %s355, %s357
      %p361 = scmp.eq.s32.totalorder %s27, 0
      %p362 = por %p360, %p361
      %p363 = scmp.ne.s32.totalorder %s355, %s357
      %p364 = scmp.eq.s32.totalorder %s32, 1
      %p365 = por %p363, %p364
      %p366 = scmp.ne.s32.totalorder %s357, %s358
      %p367 = scmp.eq.s32.totalorder %s32, 0
      %p368 = por %p366, %p367
      %p369 = scmp.ne.s32.totalorder %s357, %s358
      %p370 = scmp.eq.s32.totalorder %s33, 1
      %p371 = por %p369, %p370
      %p373 = scmp.ne.s32.totalorder %s358, %s372
      %p374 = scmp.eq.s32.totalorder %s33, 0
      %p375 = por %p373, %p374
      %s377 = sadd.s32 %s376, 1
      %p380 = scmp.eq.s32.totalorder %s27, 1
      %p381 = scmp.ne.s32.totalorder %s376, %s378
      %p382 = scmp.eq.s32.totalorder %s27, 0
      %p383 = por %p381, %p382
      %p384 = scmp.ne.s32.totalorder %s376, %s378
      %p385 = scmp.eq.s32.totalorder %s32, 1
      %p386 = por %p384, %p385
      %p387 = scmp.ne.s32.totalorder %s378, %s379
      %p388 = scmp.eq.s32.totalorder %s32, 0
      %p389 = por %p387, %p388
      %p390 = scmp.ne.s32.totalorder %s378, %s379
      %p391 = scmp.eq.s32.totalorder %s33, 1
      %p392 = por %p390, %p391
      %p394 = scmp.ne.s32.totalorder %s379, %s393
      %p395 = scmp.eq.s32.totalorder %s33, 0
      %p396 = por %p394, %p395
      %s398 = sadd.s32 %s397, 1
      %p401 = scmp.eq.s32.totalorder %s27, 1
      %p402 = scmp.ne.s32.totalorder %s397, %s399
      %p403 = scmp.eq.s32.totalorder %s27, 0
      %p404 = por %p402, %p403
      %p405 = scmp.ne.s32.totalorder %s397, %s399
      %p406 = scmp.eq.s32.totalorder %s32, 1
      %p407 = por %p405, %p406
      %p408 = scmp.ne.s32.totalorder %s399, %s400
      %p409 = scmp.eq.s32.totalorder %s32, 0
      %p410 = por %p408, %p409
      %p411 = scmp.ne.s32.totalorder %s399, %s400
      %p412 = scmp.eq.s32.totalorder %s33, 1
      %p413 = por %p411, %p412
      %p415 = scmp.ne.s32.totalorder %s400, %s414
      %p416 = scmp.eq.s32.totalorder %s33, 0
      %p417 = por %p415, %p416
      %s418 = ssub.s32 %s27, %s34
      %p419 = scmp.eq.s32.totalorder %s418, 0
      %s421 = sadd.s32 %s420, 1
      %s422 = scalar_select %p419, %s420, %s421
      %p425 = pneg %p419
      %p426 = scmp.eq.s32.totalorder %s27, 1
      %p427 = por %p425, %p426
      %p428 = scmp.ne.s32.totalorder %s420, %s423
      %p429 = scmp.eq.s32.totalorder %s27, 0
      %p430 = por %p428, %p429
      %p431 = scmp.ne.s32.totalorder %s420, %s423
      %p432 = scmp.eq.s32.totalorder %s32, 1
      %p433 = por %p431, %p432
      %p434 = scmp.ne.s32.totalorder %s423, %s424
      %p435 = scmp.eq.s32.totalorder %s32, 0
      %p436 = por %p434, %p435
      %p437 = scmp.ne.s32.totalorder %s423, %s424
      %p438 = scmp.eq.s32.totalorder %s33, 1
      %p439 = por %p437, %p438
      %p441 = scmp.ne.s32.totalorder %s424, %s440
      %p442 = scmp.eq.s32.totalorder %s33, 0
      %p443 = por %p441, %p442
      %p444 = scmp.le.s32.totalorder 1, %s27
      %p445 = scmp.lt.s32.totalorder %s27, 3
      %p446 = pnand %p444, %p445
      %p447 = pneg %p446
      // Predicated region
      $region9: #{osnet_forward.1} parent=5 // pred_check
        _
      $region10: #{osnet_forward.1} parent=5 // pred_check_branch
        %449 = sbr.rel (%p446) target = $region12
      $region11: #{osnet_forward.1} parent=5 // pred_region
        %s450 = ssub.s32 %s27, 1
        // Predicated region
        $region13: #{osnet_forward.1} parent=11 // pred_check
          %p451 = pneg %p74
        $region14: #{osnet_forward.1} parent=11 // pred_check_branch
          %453 = sbr.rel (%p451) target = $region16
        $region15: #{osnet_forward.1} parent=11 // pred_region
          _
        $region16: #{osnet_forward.1} parent=11 // pred_fallthru
          _
        // Predicated region
        $region17: #{osnet_forward.1} parent=11 // pred_check
          %p454 = pneg %p95
        $region18: #{osnet_forward.1} parent=11 // pred_check_branch
          %456 = sbr.rel (%p454) target = $region20
        $region19: #{osnet_forward.1} parent=11 // pred_region
          _
        $region20: #{osnet_forward.1} parent=11 // pred_fallthru
          _
        // Predicated region
        $region21: #{osnet_forward.1} parent=11 // pred_check
          %p457 = pneg %p116
        $region22: #{osnet_forward.1} parent=11 // pred_check_branch
          %459 = sbr.rel (%p457) target = $region24
        $region23: #{osnet_forward.1} parent=11 // pred_region
          _
        $region24: #{osnet_forward.1} parent=11 // pred_fallthru
          _
        // Predicated region
        $region25: #{osnet_forward.1} parent=11 // pred_check
          %p460 = pneg %p137
        $region26: #{osnet_forward.1} parent=11 // pred_check_branch
          %462 = sbr.rel (%p460) target = $region28
        $region27: #{osnet_forward.1} parent=11 // pred_region
          _
        $region28: #{osnet_forward.1} parent=11 // pred_fallthru
          _
        // Predicated region
        $region29: #{osnet_forward.1} parent=11 // pred_check
          %p463 = pneg %p158
        $region30: #{osnet_forward.1} parent=11 // pred_check_branch
          %465 = sbr.rel (%p463) target = $region32
        $region31: #{osnet_forward.1} parent=11 // pred_region
          _
        $region32: #{osnet_forward.1} parent=11 // pred_fallthru
          _
        // Predicated region
        $region33: #{osnet_forward.1} parent=11 // pred_check
          %p466 = pneg %p179
        $region34: #{osnet_forward.1} parent=11 // pred_check_branch
          %468 = sbr.rel (%p466) target = $region36
        $region35: #{osnet_forward.1} parent=11 // pred_region
          _
        $region36: #{osnet_forward.1} parent=11 // pred_fallthru
          _
        // Predicated region
        $region37: #{osnet_forward.1} parent=11 // pred_check
          %p469 = pneg %p200
        $region38: #{osnet_forward.1} parent=11 // pred_check_branch
          %471 = sbr.rel (%p469) target = $region40
        $region39: #{osnet_forward.1} parent=11 // pred_region
          _
        $region40: #{osnet_forward.1} parent=11 // pred_fallthru
          _
        // Predicated region
        $region41: #{osnet_forward.1} parent=11 // pred_check
          %p472 = pneg %p221
        $region42: #{osnet_forward.1} parent=11 // pred_check_branch
          %474 = sbr.rel (%p472) target = $region44
        $region43: #{osnet_forward.1} parent=11 // pred_region
          _
        $region44: #{osnet_forward.1} parent=11 // pred_fallthru
          _
        // Predicated region
        $region45: #{osnet_forward.1} parent=11 // pred_check
          %p475 = pneg %p242
        $region46: #{osnet_forward.1} parent=11 // pred_check_branch
          %477 = sbr.rel (%p475) target = $region48
        $region47: #{osnet_forward.1} parent=11 // pred_region
          _
        $region48: #{osnet_forward.1} parent=11 // pred_fallthru
          _
        // Predicated region
        $region49: #{osnet_forward.1} parent=11 // pred_check
          %p478 = pneg %p263
        $region50: #{osnet_forward.1} parent=11 // pred_check_branch
          %480 = sbr.rel (%p478) target = $region52
        $region51: #{osnet_forward.1} parent=11 // pred_region
          _
        $region52: #{osnet_forward.1} parent=11 // pred_fallthru
          _
        // Predicated region
        $region53: #{osnet_forward.1} parent=11 // pred_check
          %p481 = pneg %p284
        $region54: #{osnet_forward.1} parent=11 // pred_check_branch
          %483 = sbr.rel (%p481) target = $region56
        $region55: #{osnet_forward.1} parent=11 // pred_region
          _
        $region56: #{osnet_forward.1} parent=11 // pred_fallthru
          _
        // Predicated region
        $region57: #{osnet_forward.1} parent=11 // pred_check
          %p484 = pneg %p305
        $region58: #{osnet_forward.1} parent=11 // pred_check_branch
          %486 = sbr.rel (%p484) target = $region60
        $region59: #{osnet_forward.1} parent=11 // pred_region
          _
        $region60: #{osnet_forward.1} parent=11 // pred_fallthru
          _
        // Predicated region
        $region61: #{osnet_forward.1} parent=11 // pred_check
          %p487 = pneg %p326
        $region62: #{osnet_forward.1} parent=11 // pred_check_branch
          %489 = sbr.rel (%p487) target = $region64
        $region63: #{osnet_forward.1} parent=11 // pred_region
          _
        $region64: #{osnet_forward.1} parent=11 // pred_fallthru
          _
        // Predicated region
        $region65: #{osnet_forward.1} parent=11 // pred_check
          %p490 = pneg %p347
        $region66: #{osnet_forward.1} parent=11 // pred_check_branch
          %492 = sbr.rel (%p490) target = $region68
        $region67: #{osnet_forward.1} parent=11 // pred_region
          _
        $region68: #{osnet_forward.1} parent=11 // pred_fallthru
          _
        // Predicated region
        $region69: #{osnet_forward.1} parent=11 // pred_check
          %p493 = pneg %p368
        $region70: #{osnet_forward.1} parent=11 // pred_check_branch
          %495 = sbr.rel (%p493) target = $region72
        $region71: #{osnet_forward.1} parent=11 // pred_region
          _
        $region72: #{osnet_forward.1} parent=11 // pred_fallthru
          _
        // Predicated region
        $region73: #{osnet_forward.1} parent=11 // pred_check
          %p496 = pneg %p389
        $region74: #{osnet_forward.1} parent=11 // pred_check_branch
          %498 = sbr.rel (%p496) target = $region76
        $region75: #{osnet_forward.1} parent=11 // pred_region
          _
        $region76: #{osnet_forward.1} parent=11 // pred_fallthru
          _
        // Predicated region
        $region77: #{osnet_forward.1} parent=11 // pred_check
          %p499 = pneg %p410
        $region78: #{osnet_forward.1} parent=11 // pred_check_branch
          %501 = sbr.rel (%p499) target = $region80
        $region79: #{osnet_forward.1} parent=11 // pred_region
          _
        $region80: #{osnet_forward.1} parent=11 // pred_fallthru
          _
      $region12: #{osnet_forward.1} parent=5 // pred_fallthru
        _
      %p502 = scmp.lt.s32.totalorder %s27, 2
      // Predicated region
      $region81: #{osnet_forward.1} parent=5 // pred_check
        %p503 = pneg %p502
      $region82: #{osnet_forward.1} parent=5 // pred_check_branch
        %505 = sbr.rel (%p503) target = $region84
      $region83: #{osnet_forward.1} parent=5 // pred_region
        // Predicated region
        $region85: #{osnet_forward.1} parent=83 // pred_check
          %p506 = pneg %p47
        $region86: #{osnet_forward.1} parent=83 // pred_check_branch
          %508 = sbr.rel (%p506) target = $region88
        $region87: #{osnet_forward.1} parent=83 // pred_region
          %p509 = scmp.lt.s32.totalorder %s27, 1
          %s510 = scalar_select %p509, %s27, 1
          %s511 = smul.addr %s510, 8
          %s512 = smul.addr %s511, 4
          %s513 = scalar_lea.vmem %s0, %s512
        $region88: #{osnet_forward.1} parent=83 // pred_fallthru
          _
      $region84: #{osnet_forward.1} parent=5 // pred_fallthru
        _
      %p514 = scmp.le.s32.totalorder 1, %s27
      %p515 = scmp.lt.s32.totalorder %s27, 3
      %p516 = pnand %p514, %p515
      %p517 = pneg %p516
      // Predicated region
      $region89: #{osnet_forward.1} parent=5 // pred_check
        _
      $region90: #{osnet_forward.1} parent=5 // pred_check_branch
        %519 = sbr.rel (%p516) target = $region92
      $region91: #{osnet_forward.1} parent=5 // pred_region
        %s520 = ssub.s32 %s27, 1
        %p521 = scmp.lt.s32.totalorder %s32, 1
        %s522 = scalar_select %p521, %s32, 1
        %s523 = smul.addr %s522, 8
        %s524 = smul.addr %s523, 4
        %s525 = scalar_lea.vmem %s0, %s524
        %p526 = pneg %p53
        %p527 = pneg %p50
        %p528 = pneg %p74
        %p529 = pneg %p71
        %p530 = pneg %p95
        %p531 = pneg %p92
        %p532 = pneg %p116
        %p533 = pneg %p113
        %p534 = pneg %p137
        %p535 = pneg %p134
        %p536 = pneg %p158
        %p537 = pneg %p155
        %p538 = pneg %p179
        %p539 = pneg %p176
        %p540 = pneg %p200
        %p541 = pneg %p197
        %p542 = pneg %p221
        %p543 = pneg %p218
        %p544 = pneg %p242
        %p545 = pneg %p239
        %p546 = pneg %p263
        %p547 = pneg %p260
        %p548 = pneg %p284
        %p549 = pneg %p281
        %p550 = pneg %p305
        %p551 = pneg %p302
        %p552 = pneg %p326
        %p553 = pneg %p323
        %p554 = pneg %p347
        %p555 = pneg %p344
        %p556 = pneg %p368
        %p557 = pneg %p365
        %p558 = pneg %p389
        %p559 = pneg %p386
        %p560 = pneg %p410
        %p561 = pneg %p407
        %p562 = pneg %p436
        %p563 = pneg %p433
        %s564 = sand.u32 %s423, 1
        %s565 = scalar_lea.sflag [#allocation8], %s564
        %s566 = sand.u32 %s423, 1
        %s567 = scalar_lea.vmem [#allocation7], %s566
        %p568 = scmp.lt.s32.totalorder %s32, 1
        %s569 = scalar_select %p568, %s32, 1
        %s570 = smul.addr %s569, 8
        %s571 = smul.addr %s570, 4
        %s572 = scalar_lea.vmem %s0, %s571
        %v574 = vld [vmem:[%s572] sm:$0xf]
        %v575 = vld [vmem:[%s572 + $0x4] sm:$0xf]
        %v576 = vld [vmem:[%s572 + $0x8] sm:$0xf]
        %v577 = vld [vmem:[%s572 + $0xc] sm:$0xf]
        %v578 = vld [vmem:[%s572 + $0x10] sm:$0xf]
        %v579 = vld [vmem:[%s572 + $0x14] sm:$0xf]
        %v580 = vld [vmem:[%s572 + $0x18] sm:$0xf]
        %v581 = vld [vmem:[%s572 + $0x1c] sm:$0xf]
        %v582 = vld [vmem:[%s1] sm:$0xf]
        %v583 = vld [vmem:[%s1 + $0x4] sm:$0xf]
        %v584 = vld [vmem:[%s1 + $0x8] sm:$0xf]
        %v585 = vld [vmem:[%s1 + $0xc] sm:$0xf]
        %v594 = vunpack.c.l.b16 %v574
        %v595 = vunpack.c.l.b16 %v575
        %v596 = vunpack.c.l.b16 %v576
        %v597 = vunpack.c.l.b16 %v577
        %v598 = vunpack.c.l.b16 %v578
        %v599 = vunpack.c.l.b16 %v579
        %v600 = vunpack.c.l.b16 %v580
        %v601 = vunpack.c.l.b16 %v581
        %v602 = vpack.c.b16 %v595, %v594
        %v603 = vpack.c.b16 %v597, %v596
        %v604 = vpack.c.b16 %v599, %v598
        %v605 = vpack.c.b16 %v601, %v600
        %v610 = vunpack.c.l.b16 %v582
        %v611 = vunpack.c.l.b16 %v583
        %v612 = vunpack.c.l.b16 %v584
        %v613 = vunpack.c.l.b16 %v585
        %v614 = vpack.c.b16 %v611, %v610
        %v615 = vpack.c.b16 %v613, %v612
        %vm618 = vcmask 261120
        %v620 = vsel %vm618, %v602, 0
        %v623 = vsel %vm618, %v603, 0
        %v626 = vsel %vm618, %v604, 0
        %v629 = vsel %vm618, %v605, 0
        %631 = vmatprep.subr.bf16.mxu0 0
        %632 = vmatpush1.bf16.msra.mxu0 %v614
        %633 = vmatprep.subr.bf16.mxu0 0
        %634 = vmatpush1.bf16.msra.mxu0 %v615
        %635 = vmatprep.subr.bf16.mxu0 0
        %636 = vmatpush1.bf16.msra.mxu0 0
        %637 = vmatprep.subr.bf16.mxu0 0
        %638 = vmatpush1.bf16.msra.mxu0 0
        %639 = vmatprep.subr.bf16.mxu0 0
        %640 = vmatpush1.bf16.msra.mxu0 0
        %641 = vmatprep.subr.bf16.mxu0 0
        %642 = vmatpush1.bf16.msra.mxu0 0
        %643 = vmatprep.subr.bf16.mxu0 0
        %644 = vmatpush1.bf16.msra.mxu0 0
        %645 = vmatprep.subr.bf16.mxu0 0
        %646 = vmatpush1.bf16.msra.mxu0 0
        %647 = vmatprep.subr.bf16.mxu0 0
        %648 = vmatpush1.bf16.msra.mxu0 0
        %649 = vmatprep.subr.bf16.mxu0 0
        %650 = vmatpush1.bf16.msra.mxu0 0
        %651 = vmatprep.subr.bf16.mxu0 0
        %652 = vmatpush1.bf16.msra.mxu0 0
        %653 = vmatprep.subr.bf16.mxu0 0
        %654 = vmatpush1.bf16.msra.mxu0 0
        %655 = vmatprep.subr.bf16.mxu0 0
        %656 = vmatpush1.bf16.msra.mxu0 0
        %657 = vmatprep.subr.bf16.mxu0 0
        %658 = vmatpush1.bf16.msra.mxu0 0
        %659 = vmatprep.subr.bf16.mxu0 0
        %660 = vmatpush1.bf16.msra.mxu0 0
        %661 = vmatprep.subr.bf16.mxu0 0
        %662 = vmatpush1.bf16.msra.mxu0 0
        %663 = vmatprep.mubr.bf16.mxu0 0
        %664 = vmatmul.mubr.bf16.gmra.mrb[0].mxu0 %v620
        %v665 = vpop.f32.mrb[0].mxu0
        %v666 = vadd.f32 0.0, %v665
        %v667 = vpop.f32.mrb[0].mxu0
        %v668 = vpop.f32.mrb[0].mxu0
        %v669 = vadd.f32 0.0, %v668
        %v670 = vpop.f32.mrb[0].mxu0
        %671 = vmatprep.mubr.bf16.mxu0 0
        %672 = vmatmul.mubr.bf16.gmra.mrb[0].mxu0 %v623
        %v673 = vpop.f32.mrb[0].mxu0
        %v674 = vadd.f32 0.0, %v673
        %v675 = vpop.f32.mrb[0].mxu0
        %v676 = vpop.f32.mrb[0].mxu0
        %v677 = vadd.f32 0.0, %v676
        %v678 = vpop.f32.mrb[0].mxu0
        %679 = vmatprep.mubr.bf16.mxu0 0
        %680 = vmatmul.mubr.bf16.gmra.mrb[0].mxu0 %v626
        %v681 = vpop.f32.mrb[0].mxu0
        %v682 = vadd.f32 0.0, %v681
        %v683 = vpop.f32.mrb[0].mxu0
        %v684 = vpop.f32.mrb[0].mxu0
        %v685 = vadd.f32 0.0, %v684
        %v686 = vpop.f32.mrb[0].mxu0
        %687 = vmatprep.mubr.bf16.mxu0 0
        %688 = vmatmul.mubr.bf16.gmra.mrb[0].mxu0 %v629
        %v689 = vpop.f32.mrb[0].mxu0
        %v690 = vadd.f32 0.0, %v689
        %v691 = vpop.f32.mrb[0].mxu0
        %v692 = vpop.f32.mrb[0].mxu0
        %v693 = vadd.f32 0.0, %v692
        %v694 = vpop.f32.mrb[0].mxu0
        %695 = vdwg.mxu0
        %v696 = vld [vmem:[%s2] sm:$0x1]
        %v698 = vlaneseq
        %v699 = vshrl.u32 %v698, 7
        %v700 = vsub.s32 0, %v699
        %v701 = vrot.slane %v696, %v700
        %v703 = vmul.f32 %v666, %v701
        %v704 = vmul.f32 %v669, %v701
        %v705 = vmul.f32 %v674, %v701
        %v706 = vmul.f32 %v677, %v701
        %v707 = vmul.f32 %v682, %v701
        %v708 = vmul.f32 %v685, %v701
        %v709 = vmul.f32 %v690, %v701
        %v710 = vmul.f32 %v693, %v701
        %v711 = vld [vmem:[%s3] sm:$0x1]
        %v713 = vlaneseq
        %v714 = vshrl.u32 %v713, 7
        %v715 = vsub.s32 0, %v714
        %v716 = vrot.slane %v711, %v715
        %v718 = vadd.f32 %v703, %v716
        %v719 = vadd.f32 %v704, %v716
        %v720 = vadd.f32 %v705, %v716
        %v721 = vadd.f32 %v706, %v716
        %v722 = vadd.f32 %v707, %v716
        %v723 = vadd.f32 %v708, %v716
        %v724 = vadd.f32 %v709, %v716
        %v725 = vadd.f32 %v710, %v716
        %v726 = vmax.f32 %v718, 0.0
        %v727 = vmax.f32 %v719, 0.0
        %v728 = vmax.f32 %v720, 0.0
        %v729 = vmax.f32 %v721, 0.0
        %v730 = vmax.f32 %v722, 0.0
        %v731 = vmax.f32 %v723, 0.0
        %v732 = vmax.f32 %v724, 0.0
        %v733 = vmax.f32 %v725, 0.0
        %v734 = vmax.f32 %v726, %v728
        %v735 = vmax.f32 %v727, %v729
        %v736 = vmax.f32 %v734, %v730
        %v737 = vmax.f32 %v735, %v731
        %v738 = vmax.f32 %v736, %v732
        %v739 = vmax.f32 %v737, %v733
        %vm740 = vcmask 130048
        %741 = vst.msk [vmem:[#allocation2] sm:$0xff] %vm740, 0.0
        %742 = vst.msk [vmem:[#allocation2 + $0x8] sm:$0xff] %vm740, 0.0
        %743 = vst.msk [vmem:[#allocation2 + $0x10] sm:$0xff] %vm740, 0.0
        %vm744 = vcmask 123904
        %745 = vst.msk [vmem:[#allocation2 + $0x18] sm:$0x3] %vm744, 0.0
        %746 = vst.msk [vmem:[#allocation2 + $0x5] sm:$0xff] %vm740, %v738
        %747 = vst.msk [vmem:[#allocation2 + $0xd] sm:$0xff] %vm740, %v739
        %v748 = vlaneseq
        %v749 = vshrl.u32 %v748, 7
        %v750 = vadd.s32 %v749, 8
        %vm751 = vcmp.lt.s32.totalorder %v749, 0
        %v752 = vsub.s32 0, %v749
        %v753 = vsel %vm751, %v752, %v749
        %v754 = vshrl.u32 %v753, 2
        %v755 = vand.u32 %v753, 3
        %v756 = vsub.s32 0, %v755
        %v757 = vsel %vm751, %v756, %v755
        %vm758 = vcmp.lt.s32.totalorder %v750, 0
        %v759 = vsub.s32 0, %v750
        %v760 = vsel %vm758, %v759, %v750
        %v761 = vshrl.u32 %v760, 2
        %v762 = vand.u32 %v760, 3
        %v763 = vsub.s32 0, %v762
        %v764 = vsel %vm758, %v763, %v762
        %vm765 = vcmp.ne.s32.totalorder %v757, 0
        %vm766 = vcmp.ne.s32.totalorder %v764, 0
        %vm767 = vcmp.lt.s32.totalorder %v757, 0
        %vm768 = vcmp.lt.s32.totalorder %v764, 0
        %vm769 = vmand %vm767, %vm765
        %vm770 = vmand %vm768, %vm766
        %v771 = vadd.s32 %v757, 4
        %v772 = vadd.s32 %v764, 4
        %v773 = vsel %vm769, %v771, %v757
        %v774 = vsel %vm770, %v772, %v764
        %v775 = vld [vmem:[#allocation2] sm:$0xff]
        %v776 = vld [vmem:[#allocation2 + $0x8] sm:$0xff]
        %vm777 = vcmp.ne.s32.totalorder %v773, 0
        %vm778 = vcmp.ne.s32.totalorder %v774, 0
        %v779 = vsel %vm777, 1, 0
        %v780 = vsel %vm778, 1, 0
        %vm781 = vcmp.eq.s32.totalorder %v779, 1
        %vm782 = vcmp.eq.s32.totalorder %v780, 1
        %v783 = vsel %vm781, %v775, 0.0
        %v784 = vsel %vm782, %v776, 0.0
        %v785 = vpack.c.bf16 %v784, %v783
        %v786 = vld [vmem:[%s4] sm:$0xf]
        %v787 = vld [vmem:[%s4 + $0x4] sm:$0xf]
        %v788 = vld [vmem:[#allocation2 + $0x1] sm:$0xff]
        %v789 = vld [vmem:[#allocation2 + $0x9] sm:$0xff]
        %v790 = vpack.c.bf16 %v789, %v788
        %s791 = scalar_lea.vmem %s4, 8
        %v792 = vld [vmem:[%s791] sm:$0xf]
        %v793 = vld [vmem:[%s791 + $0x4] sm:$0xf]
        %v796 = vunpack.c.l.b16 %v792
        %v797 = vunpack.c.l.b16 %v793
        %v798 = vpack.c.b16 %v797, %v796
        %v801 = vsel %vm740, %v790, 0
        %803 = vmatprep.subr.bf16.mxu0 0
        %804 = vmatpush1.bf16.msra.mxu0 %v798
        %805 = vmatprep.subr.bf16.mxu0 0
        %806 = vmatpush1.bf16.msra.mxu0 0
        %807 = vmatprep.subr.bf16.mxu0 0
        %808 = vmatpush1.bf16.msra.mxu0 0
        %809 = vmatprep.subr.bf16.mxu0 0
        %810 = vmatpush1.bf16.msra.mxu0 0
        %811 = vmatprep.subr.bf16.mxu0 0
        %812 = vmatpush1.bf16.msra.mxu0 0
        %813 = vmatprep.subr.bf16.mxu0 0
        %814 = vmatpush1.bf16.msra.mxu0 0
        %815 = vmatprep.subr.bf16.mxu0 0
        %816 = vmatpush1.bf16.msra.mxu0 0
        %817 = vmatprep.subr.bf16.mxu0 0
        %818 = vmatpush1.bf16.msra.mxu0 0
        %819 = vmatprep.subr.bf16.mxu0 0
        %820 = vmatpush1.bf16.msra.mxu0 0
        %821 = vmatprep.subr.bf16.mxu0 0
        %822 = vmatpush1.bf16.msra.mxu0 0
        %823 = vmatprep.subr.bf16.mxu0 0
        %824 = vmatpush1.bf16.msra.mxu0 0
        %825 = vmatprep.subr.bf16.mxu0 0
        %826 = vmatpush1.bf16.msra.mxu0 0
        %827 = vmatprep.subr.bf16.mxu0 0
        %828 = vmatpush1.bf16.msra.mxu0 0
        %829 = vmatprep.subr.bf16.mxu0 0
        %830 = vmatpush1.bf16.msra.mxu0 0
        %831 = vmatprep.subr.bf16.mxu0 0
        %832 = vmatpush1.bf16.msra.mxu0 0
        %833 = vmatprep.subr.bf16.mxu0 0
        %834 = vmatpush1.bf16.msra.mxu0 0
        %835 = vmatprep.mubr.bf16.mxu0 0
        %836 = vmatmul.mubr.bf16.gmra.mrb[0].mxu0 %v801
        %v837 = vpop.f32.mrb[0].mxu0
        %v838 = vadd.f32 0.0, %v837
        %v839 = vpop.f32.mrb[0].mxu0
        %v840 = vpop.f32.mrb[0].mxu0
        %v841 = vadd.f32 0.0, %v840
        %v842 = vpop.f32.mrb[0].mxu0
        %843 = vdwg.mxu0
        %v846 = vunpack.c.l.b16 %v786
        %v847 = vunpack.c.l.b16 %v787
        %v848 = vpack.c.b16 %v847, %v846
        %v851 = vsel %vm740, %v785, 0
        %853 = vmatprep.subr.bf16.mxu0 0
        %854 = vmatpush1.bf16.msra.mxu0 %v848
        %855 = vmatprep.subr.bf16.mxu0 0
        %856 = vmatpush1.bf16.msra.mxu0 0
        %857 = vmatprep.subr.bf16.mxu0 0
        %858 = vmatpush1.bf16.msra.mxu0 0
        %859 = vmatprep.subr.bf16.mxu0 0
        %860 = vmatpush1.bf16.msra.mxu0 0
        %861 = vmatprep.subr.bf16.mxu0 0
        %862 = vmatpush1.bf16.msra.mxu0 0
        %863 = vmatprep.subr.bf16.mxu0 0
        %864 = vmatpush1.bf16.msra.mxu0 0
        %865 = vmatprep.subr.bf16.mxu0 0
        %866 = vmatpush1.bf16.msra.mxu0 0
        %867 = vmatprep.subr.bf16.mxu0 0
        %868 = vmatpush1.bf16.msra.mxu0 0
        %869 = vmatprep.subr.bf16.mxu0 0
        %870 = vmatpush1.bf16.msra.mxu0 0
        %871 = vmatprep.subr.bf16.mxu0 0
        %872 = vmatpush1.bf16.msra.mxu0 0
        %873 = vmatprep.subr.bf16.mxu0 0
        %874 = vmatpush1.bf16.msra.mxu0 0
        %875 = vmatprep.subr.bf16.mxu0 0
        %876 = vmatpush1.bf16.msra.mxu0 0
        %877 = vmatprep.subr.bf16.mxu0 0
        %878 = vmatpush1.bf16.msra.mxu0 0
        %879 = vmatprep.subr.bf16.mxu0 0
        %880 = vmatpush1.bf16.msra.mxu0 0
        %881 = vmatprep.subr.bf16.mxu0 0
        %882 = vmatpush1.bf16.msra.mxu0 0
        %883 = vmatprep.subr.bf16.mxu0 0
        %884 = vmatpush1.bf16.msra.mxu0 0
        %885 = vmatprep.mubr.bf16.mxu0 0
        %886 = vmatmul.mubr.bf16.gmra.mrb[0].mxu0 %v851
        %v887 = vpop.f32.mrb[0].mxu0
        %v888 = vadd.f32 %v838, %v887
        %v889 = vpop.f32.mrb[0].mxu0
        %v890 = vpop.f32.mrb[0].mxu0
        %v891 = vadd.f32 %v841, %v890
        %v892 = vpop.f32.mrb[0].mxu0
        %893 = vdwg.mxu0
        %v894 = vld [vmem:[#allocation2 + $0x2] sm:$0xff]
        %v895 = vld [vmem:[#allocation2 + $0xa] sm:$0xff]
        %vm896 = vcmp.ne.s32.totalorder %v773, 3
        %vm897 = vcmp.ne.s32.totalorder %v774, 3
        %v898 = vsel %vm896, 1, 0
        %v899 = vsel %vm897, 1, 0
        %vm900 = vcmp.eq.s32.totalorder %v898, 1
        %vm901 = vcmp.eq.s32.totalorder %v899, 1
        %v902 = vsel %vm900, %v894, 0.0
        %v903 = vsel %vm901, %v895, 0.0
        %v904 = vpack.c.bf16 %v903, %v902
        %s905 = scalar_lea.vmem %s4, 16
        %v906 = vld [vmem:[%s905] sm:$0xf]
        %v907 = vld [vmem:[%s905 + $0x4] sm:$0xf]
        %v910 = vunpack.c.l.b16 %v906
        %v911 = vunpack.c.l.b16 %v907
        %v912 = vpack.c.b16 %v911, %v910
        %v915 = vsel %vm740, %v904, 0
        %917 = vmatprep.subr.bf16.mxu0 0
        %918 = vmatpush1.bf16.msra.mxu0 %v912
        %919 = vmatprep.subr.bf16.mxu0 0
        %920 = vmatpush1.bf16.msra.mxu0 0
        %921 = vmatprep.subr.bf16.mxu0 0
        %922 = vmatpush1.bf16.msra.mxu0 0
        %923 = vmatprep.subr.bf16.mxu0 0
        %924 = vmatpush1.bf16.msra.mxu0 0
        %925 = vmatprep.subr.bf16.mxu0 0
        %926 = vmatpush1.bf16.msra.mxu0 0
        %927 = vmatprep.subr.bf16.mxu0 0
        %928 = vmatpush1.bf16.msra.mxu0 0
        %929 = vmatprep.subr.bf16.mxu0 0
        %930 = vmatpush1.bf16.msra.mxu0 0
        %931 = vmatprep.subr.bf16.mxu0 0
        %932 = vmatpush1.bf16.msra.mxu0 0
        %933 = vmatprep.subr.bf16.mxu0 0
        %934 = vmatpush1.bf16.msra.mxu0 0
        %935 = vmatprep.subr.bf16.mxu0 0
        %936 = vmatpush1.bf16.msra.mxu0 0
        %937 = vmatprep.subr.bf16.mxu0 0
        %938 = vmatpush1.bf16.msra.mxu0 0
        %939 = vmatprep.subr.bf16.mxu0 0
        %940 = vmatpush1.bf16.msra.mxu0 0
        %941 = vmatprep.subr.bf16.mxu0 0
        %942 = vmatpush1.bf16.msra.mxu0 0
        %943 = vmatprep.subr.bf16.mxu0 0
        %944 = vmatpush1.bf16.msra.mxu0 0
        %945 = vmatprep.subr.bf16.mxu0 0
        %946 = vmatpush1.bf16.msra.mxu0 0
        %947 = vmatprep.subr.bf16.mxu0 0
        %948 = vmatpush1.bf16.msra.mxu0 0
        %949 = vmatprep.mubr.bf16.mxu0 0
        %950 = vmatmul.mubr.bf16.gmra.mrb[0].mxu0 %v915
        %v951 = vpop.f32.mrb[0].mxu0
        %v952 = vadd.f32 0.0, %v951
        %v953 = vpop.f32.mrb[0].mxu0
        %v954 = vpop.f32.mrb[0].mxu0
        %v955 = vadd.f32 0.0, %v954
        %v956 = vpop.f32.mrb[0].mxu0
        %957 = vdwg.mxu0
        %v958 = vadd.f32 %v888, %v952
        %v959 = vadd.f32 %v891, %v955
        %v960 = vld [vmem:[#allocation2 + $0x4] sm:$0xff]
        %v961 = vld [vmem:[#allocation2 + $0xc] sm:$0xff]
        %v962 = vsel %vm781, %v960, 0.0
        %v963 = vsel %vm782, %v961, 0.0
        %v964 = vpack.c.bf16 %v963, %v962
        %s965 = scalar_lea.vmem %s4, 24
        %v966 = vld [vmem:[%s965] sm:$0xf]
        %v967 = vld [vmem:[%s965 + $0x4] sm:$0xf]
        %v970 = vunpack.c.l.b16 %v966
        %v971 = vunpack.c.l.b16 %v967
        %v972 = vpack.c.b16 %v971, %v970
        %v975 = vsel %vm740, %v964, 0
        %977 = vmatprep.subr.bf16.mxu0 0
        %978 = vmatpush1.bf16.msra.mxu0 %v972
        %979 = vmatprep.subr.bf16.mxu0 0
        %980 = vmatpush1.bf16.msra.mxu0 0
        %981 = vmatprep.subr.bf16.mxu0 0
        %982 = vmatpush1.bf16.msra.mxu0 0
        %983 = vmatprep.subr.bf16.mxu0 0
        %984 = vmatpush1.bf16.msra.mxu0 0
        %985 = vmatprep.subr.bf16.mxu0 0
        %986 = vmatpush1.bf16.msra.mxu0 0
        %987 = vmatprep.subr.bf16.mxu0 0
        %988 = vmatpush1.bf16.msra.mxu0 0
        %989 = vmatprep.subr.bf16.mxu0 0
        %990 = vmatpush1.bf16.msra.mxu0 0
        %991 = vmatprep.subr.bf16.mxu0 0
        %992 = vmatpush1.bf16.msra.mxu0 0
        %993 = vmatprep.subr.bf16.mxu0 0
        %994 = vmatpush1.bf16.msra.mxu0 0
        %995 = vmatprep.subr.bf16.mxu0 0
        %996 = vmatpush1.bf16.msra.mxu0 0
        %997 = vmatprep.subr.bf16.mxu0 0
        %998 = vmatpush1.bf16.msra.mxu0 0
        %999 = vmatprep.subr.bf16.mxu0 0
        %1000 = vmatpush1.bf16.msra.mxu0 0
        %1001 = vmatprep.subr.bf16.mxu0 0
        %1002 = vmatpush1.bf16.msra.mxu0 0
        %1003 = vmatprep.subr.bf16.mxu0 0
        %1004 = vmatpush1.bf16.msra.mxu0 0
        %1005 = vmatprep.subr.bf16.mxu0 0
        %1006 = vmatpush1.bf16.msra.mxu0 0
        %1007 = vmatprep.subr.bf16.mxu0 0
        %1008 = vmatpush1.bf16.msra.mxu0 0
        %1009 = vmatprep.mubr.bf16.mxu0 0
        %1010 = vmatmul.mubr.bf16.gmra.mrb[0].mxu0 %v975
        %v1011 = vpop.f32.mrb[0].mxu0
        %v1012 = vadd.f32 0.0, %v1011
        %v1013 = vpop.f32.mrb[0].mxu0
        %v1014 = vpop.f32.mrb[0].mxu0
        %v1015 = vadd.f32 0.0, %v1014
        %v1016 = vpop.f32.mrb[0].mxu0
        %1017 = vdwg.mxu0
        %v1018 = vadd.f32 %v958, %v1012
        %v1019 = vadd.f32 %v959, %v1015
        %v1020 = vld [vmem:[#allocation2 + $0x5] sm:$0xff]
        %v1021 = vld [vmem:[#allocation2 + $0xd] sm:$0xff]
        %v1022 = vpack.c.bf16 %v1021, %v1020
        %s1023 = scalar_lea.vmem %s4, 32
        %v1024 = vld [vmem:[%s1023] sm:$0xf]
        %v1025 = vld [vmem:[%s1023 + $0x4] sm:$0xf]
        %v1028 = vunpack.c.l.b16 %v1024
        %v1029 = vunpack.c.l.b16 %v1025
        %v1030 = vpack.c.b16 %v1029, %v1028
        %v1033 = vsel %vm740, %v1022, 0
        %1035 = vmatprep.subr.bf16.mxu0 0
        %1036 = vmatpush1.bf16.msra.mxu0 %v1030
        %1037 = vmatprep.subr.bf16.mxu0 0
        %1038 = vmatpush1.bf16.msra.mxu0 0
        %1039 = vmatprep.subr.bf16.mxu0 0
        %1040 = vmatpush1.bf16.msra.mxu0 0
        %1041 = vmatprep.subr.bf16.mxu0 0
        %1042 = vmatpush1.bf16.msra.mxu0 0
        %1043 = vmatprep.subr.bf16.mxu0 0
        %1044 = vmatpush1.bf16.msra.mxu0 0
        %1045 = vmatprep.subr.bf16.mxu0 0
        %1046 = vmatpush1.bf16.msra.mxu0 0
        %1047 = vmatprep.subr.bf16.mxu0 0
        %1048 = vmatpush1.bf16.msra.mxu0 0
        %1049 = vmatprep.subr.bf16.mxu0 0
        %1050 = vmatpush1.bf16.msra.mxu0 0
        %1051 = vmatprep.subr.bf16.mxu0 0
        %1052 = vmatpush1.bf16.msra.mxu0 0
        %1053 = vmatprep.subr.bf16.mxu0 0
        %1054 = vmatpush1.bf16.msra.mxu0 0
        %1055 = vmatprep.subr.bf16.mxu0 0
        %1056 = vmatpush1.bf16.msra.mxu0 0
        %1057 = vmatprep.subr.bf16.mxu0 0
        %1058 = vmatpush1.bf16.msra.mxu0 0
        %1059 = vmatprep.subr.bf16.mxu0 0
        %1060 = vmatpush1.bf16.msra.mxu0 0
        %1061 = vmatprep.subr.bf16.mxu0 0
        %1062 = vmatpush1.bf16.msra.mxu0 0
        %1063 = vmatprep.subr.bf16.mxu0 0
        %1064 = vmatpush1.bf16.msra.mxu0 0
        %1065 = vmatprep.subr.bf16.mxu0 0
        %1066 = vmatpush1.bf16.msra.mxu0 0
        %1067 = vmatprep.mubr.bf16.mxu0 0
        %1068 = vmatmul.mubr.bf16.gmra.mrb[0].mxu0 %v1033
        %v1069 = vpop.f32.mrb[0].mxu0
        %v1070 = vadd.f32 0.0, %v1069
        %v1071 = vpop.f32.mrb[0].mxu0
        %v1072 = vpop.f32.mrb[0].mxu0
        %v1073 = vadd.f32 0.0, %v1072
        %v1074 = vpop.f32.mrb[0].mxu0
        %1075 = vdwg.mxu0
        %v1076 = vadd.f32 %v1018, %v1070
        %v1077 = vadd.f32 %v1019, %v1073
        %v1078 = vld [vmem:[#allocation2 + $0x6] sm:$0xff]
        %v1079 = vld [vmem:[#allocation2 + $0xe] sm:$0xff]
        %v1080 = vsel %vm900, %v1078, 0.0
        %v1081 = vsel %vm901, %v1079, 0.0
        %v1082 = vpack.c.bf16 %v1081, %v1080
        %s1083 = scalar_lea.vmem %s4, 40
        %v1084 = vld [vmem:[%s1083] sm:$0xf]
        %v1085 = vld [vmem:[%s1083 + $0x4] sm:$0xf]
        %v1088 = vunpack.c.l.b16 %v1084
        %v1089 = vunpack.c.l.b16 %v1085
        %v1090 = vpack.c.b16 %v1089, %v1088
        %v1093 = vsel %vm740, %v1082, 0
        %1095 = vmatprep.subr.bf16.mxu0 0
        %1096 = vmatpush1.bf16.msra.mxu0 %v1090
        %1097 = vmatprep.subr.bf16.mxu0 0
        %1098 = vmatpush1.bf16.msra.mxu0 0
        %1099 = vmatprep.subr.bf16.mxu0 0
        %1100 = vmatpush1.bf16.msra.mxu0 0
        %1101 = vmatprep.subr.bf16.mxu0 0
        %1102 = vmatpush1.bf16.msra.mxu0 0
        %1103 = vmatprep.subr.bf16.mxu0 0
        %1104 = vmatpush1.bf16.msra.mxu0 0
        %1105 = vmatprep.subr.bf16.mxu0 0
        %1106 = vmatpush1.bf16.msra.mxu0 0
        %1107 = vmatprep.subr.bf16.mxu0 0
        %1108 = vmatpush1.bf16.msra.mxu0 0
        %1109 = vmatprep.subr.bf16.mxu0 0
        %1110 = vmatpush1.bf16.msra.mxu0 0
        %1111 = vmatprep.subr.bf16.mxu0 0
        %1112 = vmatpush1.bf16.msra.mxu0 0
        %1113 = vmatprep.subr.bf16.mxu0 0
        %1114 = vmatpush1.bf16.msra.mxu0 0
        %1115 = vmatprep.subr.bf16.mxu0 0
        %1116 = vmatpush1.bf16.msra.mxu0 0
        %1117 = vmatprep.subr.bf16.mxu0 0
        %1118 = vmatpush1.bf16.msra.mxu0 0
        %1119 = vmatprep.subr.bf16.mxu0 0
        %1120 = vmatpush1.bf16.msra.mxu0 0
        %1121 = vmatprep.subr.bf16.mxu0 0
        %1122 = vmatpush1.bf16.msra.mxu0 0
        %1123 = vmatprep.subr.bf16.mxu0 0
        %1124 = vmatpush1.bf16.msra.mxu0 0
        %1125 = vmatprep.subr.bf16.mxu0 0
        %1126 = vmatpush1.bf16.msra.mxu0 0
        %1127 = vmatprep.mubr.bf16.mxu0 0
        %1128 = vmatmul.mubr.bf16.gmra.mrb[0].mxu0 %v1093
        %v1129 = vpop.f32.mrb[0].mxu0
        %v1130 = vadd.f32 0.0, %v1129
        %v1131 = vpop.f32.mrb[0].mxu0
        %v1132 = vpop.f32.mrb[0].mxu0
        %v1133 = vadd.f32 0.0, %v1132
        %v1134 = vpop.f32.mrb[0].mxu0
        %1135 = vdwg.mxu0
        %v1136 = vadd.f32 %v1076, %v1130
        %v1137 = vadd.f32 %v1077, %v1133
        %v1138 = vld [vmem:[#allocation2 + $0x8] sm:$0xff]
        %v1139 = vld [vmem:[#allocation2 + $0x10] sm:$0xff]
        %v1140 = vsel %vm781, %v1138, 0.0
        %v1141 = vsel %vm782, %v1139, 0.0
        %v1142 = vpack.c.bf16 %v1141, %v1140
        %s1143 = scalar_lea.vmem %s4, 48
        %v1144 = vld [vmem:[%s1143] sm:$0xf]
        %v1145 = vld [vmem:[%s1143 + $0x4] sm:$0xf]
        %v1148 = vunpack.c.l.b16 %v1144
        %v1149 = vunpack.c.l.b16 %v1145
        %v1150 = vpack.c.b16 %v1149, %v1148
        %v1153 = vsel %vm740, %v1142, 0
        %1155 = vmatprep.subr.bf16.mxu0 0
        %1156 = vmatpush1.bf16.msra.mxu0 %v1150
        %1157 = vmatprep.subr.bf16.mxu0 0
        %1158 = vmatpush1.bf16.msra.mxu0 0
        %1159 = vmatprep.subr.bf16.mxu0 0
        %1160 = vmatpush1.bf16.msra.mxu0 0
        %1161 = vmatprep.subr.bf16.mxu0 0
        %1162 = vmatpush1.bf16.msra.mxu0 0
        %1163 = vmatprep.subr.bf16.mxu0 0
        %1164 = vmatpush1.bf16.msra.mxu0 0
        %1165 = vmatprep.subr.bf16.mxu0 0
        %1166 = vmatpush1.bf16.msra.mxu0 0
        %1167 = vmatprep.subr.bf16.mxu0 0
        %1168 = vmatpush1.bf16.msra.mxu0 0
        %1169 = vmatprep.subr.bf16.mxu0 0
        %1170 = vmatpush1.bf16.msra.mxu0 0
        %1171 = vmatprep.subr.bf16.mxu0 0
        %1172 = vmatpush1.bf16.msra.mxu0 0
        %1173 = vmatprep.subr.bf16.mxu0 0
        %1174 = vmatpush1.bf16.msra.mxu0 0
        %1175 = vmatprep.subr.bf16.mxu0 0
        %1176 = vmatpush1.bf16.msra.mxu0 0
        %1177 = vmatprep.subr.bf16.mxu0 0
        %1178 = vmatpush1.bf16.msra.mxu0 0
        %1179 = vmatprep.subr.bf16.mxu0 0
        %1180 = vmatpush1.bf16.msra.mxu0 0
        %1181 = vmatprep.subr.bf16.mxu0 0
        %1182 = vmatpush1.bf16.msra.mxu0 0
        %1183 = vmatprep.subr.bf16.mxu0 0
        %1184 = vmatpush1.bf16.msra.mxu0 0
        %1185 = vmatprep.subr.bf16.mxu0 0
        %1186 = vmatpush1.bf16.msra.mxu0 0
        %1187 = vmatprep.mubr.bf16.mxu0 0
        %1188 = vmatmul.mubr.bf16.gmra.mrb[0].mxu0 %v1153
        %v1189 = vpop.f32.mrb[0].mxu0
        %v1190 = vadd.f32 0.0, %v1189
        %v1191 = vpop.f32.mrb[0].mxu0
        %v1192 = vpop.f32.mrb[0].mxu0
        %v1193 = vadd.f32 0.0, %v1192
        %v1194 = vpop.f32.mrb[0].mxu0
        %1195 = vdwg.mxu0
        %v1196 = vadd.f32 %v1136, %v1190
        %v1197 = vadd.f32 %v1137, %v1193
        %v1198 = vld [vmem:[#allocation2 + $0x9] sm:$0xff]
        %v1199 = vld [vmem:[#allocation2 + $0x11] sm:$0xff]
        %v1200 = vpack.c.bf16 %v1199, %v1198
        %s1201 = scalar_lea.vmem %s4, 56
        %v1202 = vld [vmem:[%s1201] sm:$0xf]
        %v1203 = vld [vmem:[%s1201 + $0x4] sm:$0xf]
        %v1206 = vunpack.c.l.b16 %v1202
        %v1207 = vunpack.c.l.b16 %v1203
        %v1208 = vpack.c.b16 %v1207, %v1206
        %v1211 = vsel %vm740, %v1200, 0
        %1213 = vmatprep.subr.bf16.mxu0 0
        %1214 = vmatpush1.bf16.msra.mxu0 %v1208
        %1215 = vmatprep.subr.bf16.mxu0 0
        %1216 = vmatpush1.bf16.msra.mxu0 0
        %1217 = vmatprep.subr.bf16.mxu0 0
        %1218 = vmatpush1.bf16.msra.mxu0 0
        %1219 = vmatprep.subr.bf16.mxu0 0
        %1220 = vmatpush1.bf16.msra.mxu0 0
        %1221 = vmatprep.subr.bf16.mxu0 0
        %1222 = vmatpush1.bf16.msra.mxu0 0
        %1223 = vmatprep.subr.bf16.mxu0 0
        %1224 = vmatpush1.bf16.msra.mxu0 0
        %1225 = vmatprep.subr.bf16.mxu0 0
        %1226 = vmatpush1.bf16.msra.mxu0 0
        %1227 = vmatprep.subr.bf16.mxu0 0
        %1228 = vmatpush1.bf16.msra.mxu0 0
        %1229 = vmatprep.subr.bf16.mxu0 0
        %1230 = vmatpush1.bf16.msra.mxu0 0
        %1231 = vmatprep.subr.bf16.mxu0 0
        %1232 = vmatpush1.bf16.msra.mxu0 0
        %1233 = vmatprep.subr.bf16.mxu0 0
        %1234 = vmatpush1.bf16.msra.mxu0 0
        %1235 = vmatprep.subr.bf16.mxu0 0
        %1236 = vmatpush1.bf16.msra.mxu0 0
        %1237 = vmatprep.subr.bf16.mxu0 0
        %1238 = vmatpush1.bf16.msra.mxu0 0
        %1239 = vmatprep.subr.bf16.mxu0 0
        %1240 = vmatpush1.bf16.msra.mxu0 0
        %1241 = vmatprep.subr.bf16.mxu0 0
        %1242 = vmatpush1.bf16.msra.mxu0 0
        %1243 = vmatprep.subr.bf16.mxu0 0
        %1244 = vmatpush1.bf16.msra.mxu0 0
        %1245 = vmatprep.mubr.bf16.mxu0 0
        %1246 = vmatmul.mubr.bf16.gmra.mrb[0].mxu0 %v1211
        %v1247 = vpop.f32.mrb[0].mxu0
        %v1248 = vadd.f32 0.0, %v1247
        %v1249 = vpop.f32.mrb[0].mxu0
        %v1250 = vpop.f32.mrb[0].mxu0
        %v1251 = vadd.f32 0.0, %v1250
        %v1252 = vpop.f32.mrb[0].mxu0
        %1253 = vdwg.mxu0
        %v1254 = vadd.f32 %v1196, %v1248
        %v1255 = vadd.f32 %v1197, %v1251
        %v1256 = vld [vmem:[#allocation2 + $0xa] sm:$0xff]
        %v1257 = vld [vmem:[#allocation2 + $0x12] sm:$0xff]
        %v1258 = vsel %vm900, %v1256, 0.0
        %v1259 = vsel %vm901, %v1257, 0.0
        %v1260 = vpack.c.bf16 %v1259, %v1258
        %s1261 = scalar_lea.vmem %s4, 64
        %v1262 = vld [vmem:[%s1261] sm:$0xf]
        %v1263 = vld [vmem:[%s1261 + $0x4] sm:$0xf]
        %v1266 = vunpack.c.l.b16 %v1262
        %v1267 = vunpack.c.l.b16 %v1263
        %v1268 = vpack.c.b16 %v1267, %v1266
        %v1271 = vsel %vm740, %v1260, 0
        %1273 = vmatprep.subr.bf16.mxu0 0
        %1274 = vmatpush1.bf16.msra.mxu0 %v1268
        %1275 = vmatprep.subr.bf16.mxu0 0
        %1276 = vmatpush1.bf16.msra.mxu0 0
        %1277 = vmatprep.subr.bf16.mxu0 0
        %1278 = vmatpush1.bf16.msra.mxu0 0
        %1279 = vmatprep.subr.bf16.mxu0 0
        %1280 = vmatpush1.bf16.msra.mxu0 0
        %1281 = vmatprep.subr.bf16.mxu0 0
        %1282 = vmatpush1.bf16.msra.mxu0 0
        %1283 = vmatprep.subr.bf16.mxu0 0
        %1284 = vmatpush1.bf16.msra.mxu0 0
        %1285 = vmatprep.subr.bf16.mxu0 0
        %1286 = vmatpush1.bf16.msra.mxu0 0
        %1287 = vmatprep.subr.bf16.mxu0 0
        %1288 = vmatpush1.bf16.msra.mxu0 0
        %1289 = vmatprep.subr.bf16.mxu0 0
        %1290 = vmatpush1.bf16.msra.mxu0 0
        %1291 = vmatprep.subr.bf16.mxu0 0
        %1292 = vmatpush1.bf16.msra.mxu0 0
        %1293 = vmatprep.subr.bf16.mxu0 0
        %1294 = vmatpush1.bf16.msra.mxu0 0
        %1295 = vmatprep.subr.bf16.mxu0 0
        %1296 = vmatpush1.bf16.msra.mxu0 0
        %1297 = vmatprep.subr.bf16.mxu0 0
        %1298 = vmatpush1.bf16.msra.mxu0 0
        %1299 = vmatprep.subr.bf16.mxu0 0
        %1300 = vmatpush1.bf16.msra.mxu0 0
        %1301 = vmatprep.subr.bf16.mxu0 0
        %1302 = vmatpush1.bf16.msra.mxu0 0
        %1303 = vmatprep.subr.bf16.mxu0 0
        %1304 = vmatpush1.bf16.msra.mxu0 0
        %1305 = vmatprep.mubr.bf16.mxu0 0
        %1306 = vmatmul.mubr.bf16.gmra.mrb[0].mxu0 %v1271
        %v1307 = vpop.f32.mrb[0].mxu0
        %v1308 = vadd.f32 0.0, %v1307
        %v1309 = vpop.f32.mrb[0].mxu0
        %v1310 = vpop.f32.mrb[0].mxu0
        %v1311 = vadd.f32 0.0, %v1310
        %v1312 = vpop.f32.mrb[0].mxu0
        %1313 = vdwg.mxu0
        %v1314 = vadd.f32 %v1254, %v1308
        %v1315 = vadd.f32 %v1255, %v1311
        %v1316 = vld [vmem:[%s5] sm:$0x1]
        %v1318 = vlaneseq
        %v1319 = vshrl.u32 %v1318, 7
        %v1320 = vsub.s32 0, %v1319
        %v1321 = vrot.slane %v1316, %v1320
        %v1323 = vmul.f32 %v1314, %v1321
        %v1324 = vmul.f32 %v1315, %v1321
        %v1325 = vld [vmem:[%s6] sm:$0x1]
        %v1327 = vlaneseq
        %v1328 = vshrl.u32 %v1327, 7
        %v1329 = vsub.s32 0, %v1328
        %v1330 = vrot.slane %v1325, %v1329
        %v1332 = vadd.f32 %v1323, %v1330
        %v1333 = vadd.f32 %v1324, %v1330
        %v1334 = vmax.f32 %v1332, 0.0
        %v1335 = vmax.f32 %v1333, 0.0
        %1336 = vst.msk [vmem:[#allocation3] sm:$0xff] %vm618, 0.0
        %1337 = vst.msk [vmem:[#allocation3 + $0x8] sm:$0xff] %vm618, 0.0
        %1338 = vst.msk [vmem:[#allocation3 + $0x10] sm:$0xff] %vm618, 0.0
        %vm1339 = vcmask 254976
        %1340 = vst.msk [vmem:[#allocation3 + $0x18] sm:$0x3] %vm1339, 0.0
        %1341 = vst.msk [vmem:[#allocation3 + $0x5] sm:$0xff] %vm618, %v1334
        %1342 = vst.msk [vmem:[#allocation3 + $0xd] sm:$0xff] %vm618, %v1335
        %v1343 = vld [vmem:[#allocation3] sm:$0xff]
        %v1344 = vld [vmem:[#allocation3 + $0x8] sm:$0xff]
        %v1345 = vsel %vm781, %v1343, 0.0
        %v1346 = vsel %vm782, %v1344, 0.0
        %v1347 = vpack.c.bf16 %v1346, %v1345
        %v1348 = vld [vmem:[%s7] sm:$0xf]
        %v1349 = vld [vmem:[%s7 + $0x4] sm:$0xf]
        %v1350 = vld [vmem:[%s7 + $0x8] sm:$0xf]
        %v1351 = vld [vmem:[%s7 + $0xc] sm:$0xf]
        %v1352 = vld [vmem:[#allocation3 + $0x1] sm:$0xff]
        %v1353 = vld [vmem:[#allocation3 + $0x9] sm:$0xff]
        %v1354 = vpack.c.bf16 %v1353, %v1352
        %s1355 = scalar_lea.vmem %s7, 16
        %v1356 = vld [vmem:[%s1355] sm:$0xf]
        %v1357 = vld [vmem:[%s1355 + $0x4] sm:$0xf]
        %v1358 = vld [vmem:[%s1355 + $0x8] sm:$0xf]
        %v1359 = vld [vmem:[%s1355 + $0xc] sm:$0xf]
        %v1364 = vunpack.c.l.b16 %v1356
        %v1365 = vunpack.c.l.b16 %v1357
        %v1366 = vunpack.c.l.b16 %v1358
        %v1367 = vunpack.c.l.b16 %v1359
        %v1368 = vpack.c.b16 %v1365, %v1364
        %v1369 = vpack.c.b16 %v1367, %v1366
        %v1373 = vsel %vm618, %v1354, 0
        %1375 = vmatprep.subr.bf16.mxu0 0
        %1376 = vmatpush1.bf16.msra.mxu0 %v1368
        %1377 = vmatprep.subr.bf16.mxu0 0
        %1378 = vmatpush1.bf16.msra.mxu0 %v1369
        %1379 = vmatprep.subr.bf16.mxu0 0
        %1380 = vmatpush1.bf16.msra.mxu0 0
        %1381 = vmatprep.subr.bf16.mxu0 0
        %1382 = vmatpush1.bf16.msra.mxu0 0
        %1383 = vmatprep.subr.bf16.mxu0 0
        %1384 = vmatpush1.bf16.msra.mxu0 0
        %1385 = vmatprep.subr.bf16.mxu0 0
        %1386 = vmatpush1.bf16.msra.mxu0 0
        %1387 = vmatprep.subr.bf16.mxu0 0
        %1388 = vmatpush1.bf16.msra.mxu0 0
        %1389 = vmatprep.subr.bf16.mxu0 0
        %1390 = vmatpush1.bf16.msra.mxu0 0
        %1391 = vmatprep.subr.bf16.mxu0 0
        %1392 = vmatpush1.bf16.msra.mxu0 0
        %1393 = vmatprep.subr.bf16.mxu0 0
        %1394 = vmatpush1.bf16.msra.mxu0 0
        %1395 = vmatprep.subr.bf16.mxu0 0
        %1396 = vmatpush1.bf16.msra.mxu0 0
        %1397 = vmatprep.subr.bf16.mxu0 0
        %1398 = vmatpush1.bf16.msra.mxu0 0
        %1399 = vmatprep.subr.bf16.mxu0 0
        %1400 = vmatpush1.bf16.msra.mxu0 0
        %1401 = vmatprep.subr.bf16.mxu0 0
        %1402 = vmatpush1.bf16.msra.mxu0 0
        %1403 = vmatprep.subr.bf16.mxu0 0
        %1404 = vmatpush1.bf16.msra.mxu0 0
        %1405 = vmatprep.subr.bf16.mxu0 0
        %1406 = vmatpush1.bf16.msra.mxu0 0
        %1407 = vmatprep.mubr.bf16.mxu0 0
        %1408 = vmatmul.mubr.bf16.gmra.mrb[0].mxu0 %v1373
        %v1409 = vpop.f32.mrb[0].mxu0
        %v1410 = vadd.f32 0.0, %v1409
        %v1411 = vpop.f32.mrb[0].mxu0
        %v1412 = vpop.f32.mrb[0].mxu0
        %v1413 = vadd.f32 0.0, %v1412
        %v1414 = vpop.f32.mrb[0].mxu0
        %1415 = vdwg.mxu0
        %v1420 = vunpack.c.l.b16 %v1348
        %v1421 = vunpack.c.l.b16 %v1349
        %v1422 = vunpack.c.l.b16 %v1350
        %v1423 = vunpack.c.l.b16 %v1351
        %v1424 = vpack.c.b16 %v1421, %v1420
        %v1425 = vpack.c.b16 %v1423, %v1422
        %v1429 = vsel %vm618, %v1347, 0
        %1431 = vmatprep.subr.bf16.mxu0 0
        %1432 = vmatpush1.bf16.msra.mxu0 %v1424
        %1433 = vmatprep.subr.bf16.mxu0 0
        %1434 = vmatpush1.bf16.msra.mxu0 %v1425
        %1435 = vmatprep.subr.bf16.mxu0 0
        %1436 = vmatpush1.bf16.msra.mxu0 0
        %1437 = vmatprep.subr.bf16.mxu0 0
        %1438 = vmatpush1.bf16.msra.mxu0 0
        %1439 = vmatprep.subr.bf16.mxu0 0
        %1440 = vmatpush1.bf16.msra.mxu0 0
        %1441 = vmatprep.subr.bf16.mxu0 0
        %1442 = vmatpush1.bf16.msra.mxu0 0
        %1443 = vmatprep.subr.bf16.mxu0 0
        %1444 = vmatpush1.bf16.msra.mxu0 0
        %1445 = vmatprep.subr.bf16.mxu0 0
        %1446 = vmatpush1.bf16.msra.mxu0 0
        %1447 = vmatprep.subr.bf16.mxu0 0
        %1448 = vmatpush1.bf16.msra.mxu0 0
        %1449 = vmatprep.subr.bf16.mxu0 0
        %1450 = vmatpush1.bf16.msra.mxu0 0
        %1451 = vmatprep.subr.bf16.mxu0 0
        %1452 = vmatpush1.bf16.msra.mxu0 0
        %1453 = vmatprep.subr.bf16.mxu0 0
        %1454 = vmatpush1.bf16.msra.mxu0 0
        %1455 = vmatprep.subr.bf16.mxu0 0
        %1456 = vmatpush1.bf16.msra.mxu0 0
        %1457 = vmatprep.subr.bf16.mxu0 0
        %1458 = vmatpush1.bf16.msra.mxu0 0
        %1459 = vmatprep.subr.bf16.mxu0 0
        %1460 = vmatpush1.bf16.msra.mxu0 0
        %1461 = vmatprep.subr.bf16.mxu0 0
        %1462 = vmatpush1.bf16.msra.mxu0 0
        %1463 = vmatprep.mubr.bf16.mxu0 0
        %1464 = vmatmul.mubr.bf16.gmra.mrb[0].mxu0 %v1429
        %v1465 = vpop.f32.mrb[0].mxu0
        %v1466 = vadd.f32 %v1410, %v1465
        %v1467 = vpop.f32.mrb[0].mxu0
        %v1468 = vpop.f32.mrb[0].mxu0
        %v1469 = vadd.f32 %v1413, %v1468
        %v1470 = vpop.f32.mrb[0].mxu0
        %1471 = vdwg.mxu0
        %v1472 = vld [vmem:[#allocation3 + $0x2] sm:$0xff]
        %v1473 = vld [vmem:[#allocation3 + $0xa] sm:$0xff]
        %v1474 = vsel %vm900, %v1472, 0.0
        %v1475 = vsel %vm901, %v1473, 0.0
        %v1476 = vpack.c.bf16 %v1475, %v1474
        %s1477 = scalar_lea.vmem %s7, 32
        %v1478 = vld [vmem:[%s1477] sm:$0xf]
        %v1479 = vld [vmem:[%s1477 + $0x4] sm:$0xf]
        %v1480 = vld [vmem:[%s1477 + $0x8] sm:$0xf]
        %v1481 = vld [vmem:[%s1477 + $0xc] sm:$0xf]
        %v1486 = vunpack.c.l.b16 %v1478
        %v1487 = vunpack.c.l.b16 %v1479
        %v1488 = vunpack.c.l.b16 %v1480
        %v1489 = vunpack.c.l.b16 %v1481
        %v1490 = vpack.c.b16 %v1487, %v1486
        %v1491 = vpack.c.b16 %v1489, %v1488
        %v1495 = vsel %vm618, %v1476, 0
        %1497 = vmatprep.subr.bf16.mxu0 0
        %1498 = vmatpush1.bf16.msra.mxu0 %v1490
        %1499 = vmatprep.subr.bf16.mxu0 0
        %1500 = vmatpush1.bf16.msra.mxu0 %v1491
        %1501 = vmatprep.subr.bf16.mxu0 0
        %1502 = vmatpush1.bf16.msra.mxu0 0
        %1503 = vmatprep.subr.bf16.mxu0 0
        %1504 = vmatpush1.bf16.msra.mxu0 0
        %1505 = vmatprep.subr.bf16.mxu0 0
        %1506 = vmatpush1.bf16.msra.mxu0 0
        %1507 = vmatprep.subr.bf16.mxu0 0
        %1508 = vmatpush1.bf16.msra.mxu0 0
        %1509 = vmatprep.subr.bf16.mxu0 0
        %1510 = vmatpush1.bf16.msra.mxu0 0
        %1511 = vmatprep.subr.bf16.mxu0 0
        %1512 = vmatpush1.bf16.msra.mxu0 0
        %1513 = vmatprep.subr.bf16.mxu0 0
        %1514 = vmatpush1.bf16.msra.mxu0 0
        %1515 = vmatprep.subr.bf16.mxu0 0
        %1516 = vmatpush1.bf16.msra.mxu0 0
        %1517 = vmatprep.subr.bf16.mxu0 0
        %1518 = vmatpush1.bf16.msra.mxu0 0
        %1519 = vmatprep.subr.bf16.mxu0 0
        %1520 = vmatpush1.bf16.msra.mxu0 0
        %1521 = vmatprep.subr.bf16.mxu0 0
        %1522 = vmatpush1.bf16.msra.mxu0 0
        %1523 = vmatprep.subr.bf16.mxu0 0
        %1524 = vmatpush1.bf16.msra.mxu0 0
        %1525 = vmatprep.subr.bf16.mxu0 0
        %1526 = vmatpush1.bf16.msra.mxu0 0
        %1527 = vmatprep.subr.bf16.mxu0 0
        %1528 = vmatpush1.bf16.msra.mxu0 0
        %1529 = vmatprep.mubr.bf16.mxu0 0
        %1530 = vmatmul.mubr.bf16.gmra.mrb[0].mxu0 %v1495
        %v1531 = vpop.f32.mrb[0].mxu0
        %v1532 = vadd.f32 0.0, %v1531
        %v1533 = vpop.f32.mrb[0].mxu0
        %v1534 = vpop.f32.mrb[0].mxu0
        %v1535 = vadd.f32 0.0, %v1534
        %v1536 = vpop.f32.mrb[0].mxu0
        %1537 = vdwg.mxu0
        %v1538 = vadd.f32 %v1466, %v1532
        %v1539 = vadd.f32 %v1469, %v1535
        %v1540 = vld [vmem:[#allocation3 + $0x4] sm:$0xff]
        %v1541 = vld [vmem:[#allocation3 + $0xc] sm:$0xff]
        %v1542 = vsel %vm781, %v1540, 0.0
        %v1543 = vsel %vm782, %v1541, 0.0
        %v1544 = vpack.c.bf16 %v1543, %v1542
        %s1545 = scalar_lea.vmem %s7, 48
        %v1546 = vld [vmem:[%s1545] sm:$0xf]
        %v1547 = vld [vmem:[%s1545 + $0x4] sm:$0xf]
        %v1548 = vld [vmem:[%s1545 + $0x8] sm:$0xf]
        %v1549 = vld [vmem:[%s1545 + $0xc] sm:$0xf]
        %v1554 = vunpack.c.l.b16 %v1546
        %v1555 = vunpack.c.l.b16 %v1547
        %v1556 = vunpack.c.l.b16 %v1548
        %v1557 = vunpack.c.l.b16 %v1549
        %v1558 = vpack.c.b16 %v1555, %v1554
        %v1559 = vpack.c.b16 %v1557, %v1556
        %v1563 = vsel %vm618, %v1544, 0
        %1565 = vmatprep.subr.bf16.mxu0 0
        %1566 = vmatpush1.bf16.msra.mxu0 %v1558
        %1567 = vmatprep.subr.bf16.mxu0 0
        %1568 = vmatpush1.bf16.msra.mxu0 %v1559
        %1569 = vmatprep.subr.bf16.mxu0 0
        %1570 = vmatpush1.bf16.msra.mxu0 0
        %1571 = vmatprep.subr.bf16.mxu0 0
        %1572 = vmatpush1.bf16.msra.mxu0 0
        %1573 = vmatprep.subr.bf16.mxu0 0
        %1574 = vmatpush1.bf16.msra.mxu0 0
        %1575 = vmatprep.subr.bf16.mxu0 0
        %1576 = vmatpush1.bf16.msra.mxu0 0
        %1577 = vmatprep.subr.bf16.mxu0 0
        %1578 = vmatpush1.bf16.msra.mxu0 0
        %1579 = vmatprep.subr.bf16.mxu0 0
        %1580 = vmatpush1.bf16.msra.mxu0 0
        %1581 = vmatprep.subr.bf16.mxu0 0
        %1582 = vmatpush1.bf16.msra.mxu0 0
        %1583 = vmatprep.subr.bf16.mxu0 0
        %1584 = vmatpush1.bf16.msra.mxu0 0
        %1585 = vmatprep.subr.bf16.mxu0 0
        %1586 = vmatpush1.bf16.msra.mxu0 0
        %1587 = vmatprep.subr.bf16.mxu0 0
        %1588 = vmatpush1.bf16.msra.mxu0 0
        %1589 = vmatprep.subr.bf16.mxu0 0
        %1590 = vmatpush1.bf16.msra.mxu0 0
        %1591 = vmatprep.subr.bf16.mxu0 0
        %1592 = vmatpush1.bf16.msra.mxu0 0
        %1593 = vmatprep.subr.bf16.mxu0 0
        %1594 = vmatpush1.bf16.msra.mxu0 0
        %1595 = vmatprep.subr.bf16.mxu0 0
        %1596 = vmatpush1.bf16.msra.mxu0 0
        %1597 = vmatprep.mubr.bf16.mxu0 0
        %1598 = vmatmul.mubr.bf16.gmra.mrb[0].mxu0 %v1563
        %v1599 = vpop.f32.mrb[0].mxu0
        %v1600 = vadd.f32 0.0, %v1599
        %v1601 = vpop.f32.mrb[0].mxu0
        %v1602 = vpop.f32.mrb[0].mxu0
        %v1603 = vadd.f32 0.0, %v1602
        %v1604 = vpop.f32.mrb[0].mxu0
        %1605 = vdwg.mxu0
        %v1606 = vadd.f32 %v1538, %v1600
        %v1607 = vadd.f32 %v1539, %v1603
        %v1608 = vld [vmem:[#allocation3 + $0x5] sm:$0xff]
        %v1609 = vld [vmem:[#allocation3 + $0xd] sm:$0xff]
        %v1610 = vpack.c.bf16 %v1609, %v1608
        %s1611 = scalar_lea.vmem %s7, 64
        %v1612 = vld [vmem:[%s1611] sm:$0xf]
        %v1613 = vld [vmem:[%s1611 + $0x4] sm:$0xf]
        %v1614 = vld [vmem:[%s1611 + $0x8] sm:$0xf]
        %v1615 = vld [vmem:[%s1611 + $0xc] sm:$0xf]
        %v1620 = vunpack.c.l.b16 %v1612
        %v1621 = vunpack.c.l.b16 %v1613
        %v1622 = vunpack.c.l.b16 %v1614
        %v1623 = vunpack.c.l.b16 %v1615
        %v1624 = vpack.c.b16 %v1621, %v1620
        %v1625 = vpack.c.b16 %v1623, %v1622
        %v1629 = vsel %vm618, %v1610, 0
        %1631 = vmatprep.subr.bf16.mxu0 0
        %1632 = vmatpush1.bf16.msra.mxu0 %v1624
        %1633 = vmatprep.subr.bf16.mxu0 0
        %1634 = vmatpush1.bf16.msra.mxu0 %v1625
        %1635 = vmatprep.subr.bf16.mxu0 0
        %1636 = vmatpush1.bf16.msra.mxu0 0
        %1637 = vmatprep.subr.bf16.mxu0 0
        %1638 = vmatpush1.bf16.msra.mxu0 0
        %1639 = vmatprep.subr.bf16.mxu0 0
        %1640 = vmatpush1.bf16.msra.mxu0 0
        %1641 = vmatprep.subr.bf16.mxu0 0
        %1642 = vmatpush1.bf16.msra.mxu0 0
        %1643 = vmatprep.subr.bf16.mxu0 0
        %1644 = vmatpush1.bf16.msra.mxu0 0
        %1645 = vmatprep.subr.bf16.mxu0 0
        %1646 = vmatpush1.bf16.msra.mxu0 0
        %1647 = vmatprep.subr.bf16.mxu0 0
        %1648 = vmatpush1.bf16.msra.mxu0 0
        %1649 = vmatprep.subr.bf16.mxu0 0
        %1650 = vmatpush1.bf16.msra.mxu0 0
        %1651 = vmatprep.subr.bf16.mxu0 0
        %1652 = vmatpush1.bf16.msra.mxu0 0
        %1653 = vmatprep.subr.bf16.mxu0 0
        %1654 = vmatpush1.bf16.msra.mxu0 0
        %1655 = vmatprep.subr.bf16.mxu0 0
        %1656 = vmatpush1.bf16.msra.mxu0 0
        %1657 = vmatprep.subr.bf16.mxu0 0
        %1658 = vmatpush1.bf16.msra.mxu0 0
        %1659 = vmatprep.subr.bf16.mxu0 0
        %1660 = vmatpush1.bf16.msra.mxu0 0
        %1661 = vmatprep.subr.bf16.mxu0 0
        %1662 = vmatpush1.bf16.msra.mxu0 0
        %1663 = vmatprep.mubr.bf16.mxu0 0
        %1664 = vmatmul.mubr.bf16.gmra.mrb[0].mxu0 %v1629
        %v1665 = vpop.f32.mrb[0].mxu0
        %v1666 = vadd.f32 0.0, %v1665
        %v1667 = vpop.f32.mrb[0].mxu0
        %v1668 = vpop.f32.mrb[0].mxu0
        %v1669 = vadd.f32 0.0, %v1668
        %v1670 = vpop.f32.mrb[0].mxu0
        %1671 = vdwg.mxu0
        %v1672 = vadd.f32 %v1606, %v1666
        %v1673 = vadd.f32 %v1607, %v1669
        %v1674 = vld [vmem:[#allocation3 + $0x6] sm:$0xff]
        %v1675 = vld [vmem:[#allocation3 + $0xe] sm:$0xff]
        %v1676 = vsel %vm900, %v1674, 0.0
        %v1677 = vsel %vm901, %v1675, 0.0
        %v1678 = vpack.c.bf16 %v1677, %v1676
        %s1679 = scalar_lea.vmem %s7, 80
        %v1680 = vld [vmem:[%s1679] sm:$0xf]
        %v1681 = vld [vmem:[%s1679 + $0x4] sm:$0xf]
        %v1682 = vld [vmem:[%s1679 + $0x8] sm:$0xf]
        %v1683 = vld [vmem:[%s1679 + $0xc] sm:$0xf]
        %v1688 = vunpack.c.l.b16 %v1680
        %v1689 = vunpack.c.l.b16 %v1681
        %v1690 = vunpack.c.l.b16 %v1682
        %v1691 = vunpack.c.l.b16 %v1683
        %v1692 = vpack.c.b16 %v1689, %v1688
        %v1693 = vpack.c.b16 %v1691, %v1690
        %v1697 = vsel %vm618, %v1678, 0
        %1699 = vmatprep.subr.bf16.mxu0 0
        %1700 = vmatpush1.bf16.msra.mxu0 %v1692
        %1701 = vmatprep.subr.bf16.mxu0 0
        %1702 = vmatpush1.bf16.msra.mxu0 %v1693
        %1703 = vmatprep.subr.bf16.mxu0 0
        %1704 = vmatpush1.bf16.msra.mxu0 0
        %1705 = vmatprep.subr.bf16.mxu0 0
        %1706 = vmatpush1.bf16.msra.mxu0 0
        %1707 = vmatprep.subr.bf16.mxu0 0
        %1708 = vmatpush1.bf16.msra.mxu0 0
        %1709 = vmatprep.subr.bf16.mxu0 0
        %1710 = vmatpush1.bf16.msra.mxu0 0
        %1711 = vmatprep.subr.bf16.mxu0 0
        %1712 = vmatpush1.bf16.msra.mxu0 0
        %1713 = vmatprep.subr.bf16.mxu0 0
        %1714 = vmatpush1.bf16.msra.mxu0 0
        %1715 = vmatprep.subr.bf16.mxu0 0
        %1716 = vmatpush1.bf16.msra.mxu0 0
        %1717 = vmatprep.subr.bf16.mxu0 0
        %1718 = vmatpush1.bf16.msra.mxu0 0
        %1719 = vmatprep.subr.bf16.mxu0 0
        %1720 = vmatpush1.bf16.msra.mxu0 0
        %1721 = vmatprep.subr.bf16.mxu0 0
        %1722 = vmatpush1.bf16.msra.mxu0 0
        %1723 = vmatprep.subr.bf16.mxu0 0
        %1724 = vmatpush1.bf16.msra.mxu0 0
        %1725 = vmatprep.subr.bf16.mxu0 0
        %1726 = vmatpush1.bf16.msra.mxu0 0
        %1727 = vmatprep.subr.bf16.mxu0 0
        %1728 = vmatpush1.bf16.msra.mxu0 0
        %1729 = vmatprep.subr.bf16.mxu0 0
        %1730 = vmatpush1.bf16.msra.mxu0 0
        %1731 = vmatprep.mubr.bf16.mxu0 0
        %1732 = vmatmul.mubr.bf16.gmra.mrb[0].mxu0 %v1697
        %v1733 = vpop.f32.mrb[0].mxu0
        %v1734 = vadd.f32 0.0, %v1733
        %v1735 = vpop.f32.mrb[0].mxu0
        %v1736 = vpop.f32.mrb[0].mxu0
        %v1737 = vadd.f32 0.0, %v1736
        %v1738 = vpop.f32.mrb[0].mxu0
        %1739 = vdwg.mxu0
        %v1740 = vadd.f32 %v1672, %v1734
        %v1741 = vadd.f32 %v1673, %v1737
        %v1742 = vld [vmem:[#allocation3 + $0x8] sm:$0xff]
        %v1743 = vld [vmem:[#allocation3 + $0x10] sm:$0xff]
        %v1744 = vsel %vm781, %v1742, 0.0
        %v1745 = vsel %vm782, %v1743, 0.0
        %v1746 = vpack.c.bf16 %v1745, %v1744
        %s1747 = scalar_lea.vmem %s7, 96
        %v1748 = vld [vmem:[%s1747] sm:$0xf]
        %v1749 = vld [vmem:[%s1747 + $0x4] sm:$0xf]
        %v1750 = vld [vmem:[%s1747 + $0x8] sm:$0xf]
        %v1751 = vld [vmem:[%s1747 + $0xc] sm:$0xf]
        %v1756 = vunpack.c.l.b16 %v1748
        %v1757 = vunpack.c.l.b16 %v1749
        %v1758 = vunpack.c.l.b16 %v1750
        %v1759 = vunpack.c.l.b16 %v1751
        %v1760 = vpack.c.b16 %v1757, %v1756
        %v1761 = vpack.c.b16 %v1759, %v1758
        %v1765 = vsel %vm618, %v1746, 0
        %1767 = vmatprep.subr.bf16.mxu0 0
        %1768 = vmatpush1.bf16.msra.mxu0 %v1760
        %1769 = vmatprep.subr.bf16.mxu0 0
        %1770 = vmatpush1.bf16.msra.mxu0 %v1761
        %1771 = vmatprep.subr.bf16.mxu0 0
        %1772 = vmatpush1.bf16.msra.mxu0 0
        %1773 = vmatprep.subr.bf16.mxu0 0
        %1774 = vmatpush1.bf16.msra.mxu0 0
        %1775 = vmatprep.subr.bf16.mxu0 0
        %1776 = vmatpush1.bf16.msra.mxu0 0
        %1777 = vmatprep.subr.bf16.mxu0 0
        %1778 = vmatpush1.bf16.msra.mxu0 0
        %1779 = vmatprep.subr.bf16.mxu0 0
        %1780 = vmatpush1.bf16.msra.mxu0 0
        %1781 = vmatprep.subr.bf16.mxu0 0
        %1782 = vmatpush1.bf16.msra.mxu0 0
        %1783 = vmatprep.subr.bf16.mxu0 0
        %1784 = vmatpush1.bf16.msra.mxu0 0
        %1785 = vmatprep.subr.bf16.mxu0 0
        %1786 = vmatpush1.bf16.msra.mxu0 0
        %1787 = vmatprep.subr.bf16.mxu0 0
        %1788 = vmatpush1.bf16.msra.mxu0 0
        %1789 = vmatprep.subr.bf16.mxu0 0
        %1790 = vmatpush1.bf16.msra.mxu0 0
        %1791 = vmatprep.subr.bf16.mxu0 0
        %1792 = vmatpush1.bf16.msra.mxu0 0
        %1793 = vmatprep.subr.bf16.mxu0 0
        %1794 = vmatpush1.bf16.msra.mxu0 0
        %1795 = vmatprep.subr.bf16.mxu0 0
        %1796 = vmatpush1.bf16.msra.mxu0 0
        %1797 = vmatprep.subr.bf16.mxu0 0
        %1798 = vmatpush1.bf16.msra.mxu0 0
        %1799 = vmatprep.mubr.bf16.mxu0 0
        %1800 = vmatmul.mubr.bf16.gmra.mrb[0].mxu0 %v1765
        %v1801 = vpop.f32.mrb[0].mxu0
        %v1802 = vadd.f32 0.0, %v1801
        %v1803 = vpop.f32.mrb[0].mxu0
        %v1804 = vpop.f32.mrb[0].mxu0
        %v1805 = vadd.f32 0.0, %v1804
        %v1806 = vpop.f32.mrb[0].mxu0
        %1807 = vdwg.mxu0
        %v1808 = vadd.f32 %v1740, %v1802
        %v1809 = vadd.f32 %v1741, %v1805
        %v1810 = vld [vmem:[#allocation3 + $0x9] sm:$0xff]
        %v1811 = vld [vmem:[#allocation3 + $0x11] sm:$0xff]
        %v1812 = vpack.c.bf16 %v1811, %v1810
        %s1813 = scalar_lea.vmem %s7, 112
        %v1814 = vld [vmem:[%s1813] sm:$0xf]
        %v1815 = vld [vmem:[%s1813 + $0x4] sm:$0xf]
        %v1816 = vld [vmem:[%s1813 + $0x8] sm:$0xf]
        %v1817 = vld [vmem:[%s1813 + $0xc] sm:$0xf]
        %v1822 = vunpack.c.l.b16 %v1814
        %v1823 = vunpack.c.l.b16 %v1815
        %v1824 = vunpack.c.l.b16 %v1816
        %v1825 = vunpack.c.l.b16 %v1817
        %v1826 = vpack.c.b16 %v1823, %v1822
        %v1827 = vpack.c.b16 %v1825, %v1824
        %v1831 = vsel %vm618, %v1812, 0
        %1833 = vmatprep.subr.bf16.mxu0 0
        %1834 = vmatpush1.bf16.msra.mxu0 %v1826
        %1835 = vmatprep.subr.bf16.mxu0 0
        %1836 = vmatpush1.bf16.msra.mxu0 %v1827
        %1837 = vmatprep.subr.bf16.mxu0 0
        %1838 = vmatpush1.bf16.msra.mxu0 0
        %1839 = vmatprep.subr.bf16.mxu0 0
        %1840 = vmatpush1.bf16.msra.mxu0 0
        %1841 = vmatprep.subr.bf16.mxu0 0
        %1842 = vmatpush1.bf16.msra.mxu0 0
        %1843 = vmatprep.subr.bf16.mxu0 0
        %1844 = vmatpush1.bf16.msra.mxu0 0
        %1845 = vmatprep.subr.bf16.mxu0 0
        %1846 = vmatpush1.bf16.msra.mxu0 0
        %1847 = vmatprep.subr.bf16.mxu0 0
        %1848 = vmatpush1.bf16.msra.mxu0 0
        %1849 = vmatprep.subr.bf16.mxu0 0
        %1850 = vmatpush1.bf16.msra.mxu0 0
        %1851 = vmatprep.subr.bf16.mxu0 0
        %1852 = vmatpush1.bf16.msra.mxu0 0
        %1853 = vmatprep.subr.bf16.mxu0 0
        %1854 = vmatpush1.bf16.msra.mxu0 0
        %1855 = vmatprep.subr.bf16.mxu0 0
        %1856 = vmatpush1.bf16.msra.mxu0 0
        %1857 = vmatprep.subr.bf16.mxu0 0
        %1858 = vmatpush1.bf16.msra.mxu0 0
        %1859 = vmatprep.subr.bf16.mxu0 0
        %1860 = vmatpush1.bf16.msra.mxu0 0
        %1861 = vmatprep.subr.bf16.mxu0 0
        %1862 = vmatpush1.bf16.msra.mxu0 0
        %1863 = vmatprep.subr.bf16.mxu0 0
        %1864 = vmatpush1.bf16.msra.mxu0 0
        %1865 = vmatprep.mubr.bf16.mxu0 0
        %1866 = vmatmul.mubr.bf16.gmra.mrb[0].mxu0 %v1831
        %v1867 = vpop.f32.mrb[0].mxu0
        %v1868 = vadd.f32 0.0, %v1867
        %v1869 = vpop.f32.mrb[0].mxu0
        %v1870 = vpop.f32.mrb[0].mxu0
        %v1871 = vadd.f32 0.0, %v1870
        %v1872 = vpop.f32.mrb[0].mxu0
        %1873 = vdwg.mxu0
        %v1874 = vadd.f32 %v1808, %v1868
        %v1875 = vadd.f32 %v1809, %v1871
        %v1876 = vld [vmem:[#allocation3 + $0xa] sm:$0xff]
        %v1877 = vld [vmem:[#allocation3 + $0x12] sm:$0xff]
        %v1878 = vsel %vm900, %v1876, 0.0
        %v1879 = vsel %vm901, %v1877, 0.0
        %v1880 = vpack.c.bf16 %v1879, %v1878
        %s1881 = scalar_lea.vmem %s7, 128
        %v1882 = vld [vmem:[%s1881] sm:$0xf]
        %v1883 = vld [vmem:[%s1881 + $0x4] sm:$0xf]
        %v1884 = vld [vmem:[%s1881 + $0x8] sm:$0xf]
        %v1885 = vld [vmem:[%s1881 + $0xc] sm:$0xf]
        %v1890 = vunpack.c.l.b16 %v1882
        %v1891 = vunpack.c.l.b16 %v1883
        %v1892 = vunpack.c.l.b16 %v1884
        %v1893 = vunpack.c.l.b16 %v1885
        %v1894 = vpack.c.b16 %v1891, %v1890
        %v1895 = vpack.c.b16 %v1893, %v1892
        %v1899 = vsel %vm618, %v1880, 0
        %1901 = vmatprep.subr.bf16.mxu0 0
        %1902 = vmatpush1.bf16.msra.mxu0 %v1894
        %1903 = vmatprep.subr.bf16.mxu0 0
        %1904 = vmatpush1.bf16.msra.mxu0 %v1895
        %1905 = vmatprep.subr.bf16.mxu0 0
        %1906 = vmatpush1.bf16.msra.mxu0 0
        %1907 = vmatprep.subr.bf16.mxu0 0
        %1908 = vmatpush1.bf16.msra.mxu0 0
        %1909 = vmatprep.subr.bf16.mxu0 0
        %1910 = vmatpush1.bf16.msra.mxu0 0
        %1911 = vmatprep.subr.bf16.mxu0 0
        %1912 = vmatpush1.bf16.msra.mxu0 0
        %1913 = vmatprep.subr.bf16.mxu0 0
        %1914 = vmatpush1.bf16.msra.mxu0 0
        %1915 = vmatprep.subr.bf16.mxu0 0
        %1916 = vmatpush1.bf16.msra.mxu0 0
        %1917 = vmatprep.subr.bf16.mxu0 0
        %1918 = vmatpush1.bf16.msra.mxu0 0
        %1919 = vmatprep.subr.bf16.mxu0 0
        %1920 = vmatpush1.bf16.msra.mxu0 0
        %1921 = vmatprep.subr.bf16.mxu0 0
        %1922 = vmatpush1.bf16.msra.mxu0 0
        %1923 = vmatprep.subr.bf16.mxu0 0
        %1924 = vmatpush1.bf16.msra.mxu0 0
        %1925 = vmatprep.subr.bf16.mxu0 0
        %1926 = vmatpush1.bf16.msra.mxu0 0
        %1927 = vmatprep.subr.bf16.mxu0 0
        %1928 = vmatpush1.bf16.msra.mxu0 0
        %1929 = vmatprep.subr.bf16.mxu0 0
        %1930 = vmatpush1.bf16.msra.mxu0 0
        %1931 = vmatprep.subr.bf16.mxu0 0
        %1932 = vmatpush1.bf16.msra.mxu0 0
        %1933 = vmatprep.mubr.bf16.mxu0 0
        %1934 = vmatmul.mubr.bf16.gmra.mrb[0].mxu0 %v1899
        %v1935 = vpop.f32.mrb[0].mxu0
        %v1936 = vadd.f32 0.0, %v1935
        %v1937 = vpop.f32.mrb[0].mxu0
        %v1938 = vpop.f32.mrb[0].mxu0
        %v1939 = vadd.f32 0.0, %v1938
        %v1940 = vpop.f32.mrb[0].mxu0
        %1941 = vdwg.mxu0
        %v1942 = vadd.f32 %v1874, %v1936
        %v1943 = vadd.f32 %v1875, %v1939
        %v1944 = vld [vmem:[%s8] sm:$0x1]
        %v1946 = vlaneseq
        %v1947 = vshrl.u32 %v1946, 7
        %v1948 = vsub.s32 0, %v1947
        %v1949 = vrot.slane %v1944, %v1948
        %v1951 = vmul.f32 %v1942, %v1949
        %v1952 = vmul.f32 %v1943, %v1949
        %v1953 = vld [vmem:[%s9] sm:$0x1]
        %v1955 = vlaneseq
        %v1956 = vshrl.u32 %v1955, 7
        %v1957 = vsub.s32 0, %v1956
        %v1958 = vrot.slane %v1953, %v1957
        %v1960 = vadd.f32 %v1951, %v1958
        %v1961 = vadd.f32 %v1952, %v1958
        %1964 = vrot.lane.b32.xlu0 %v1332, 96
        %v1965 = vpop.permute.xlu0 %1964
        %1966 = vrot.lane.b32.xlu0 %v1333, 96
        %v1967 = vpop.permute.xlu0 %1966
        %v1970 = vadd.f32 %v1960, %v1965
        %v1971 = vadd.f32 %v1961, %v1967
        %v1972 = vmax.f32 %v1970, 0.0
        %v1973 = vmax.f32 %v1971, 0.0
        %1974 = vst.msk [vmem:[#allocation4] sm:$0xff] %vm618, 0.0
        %1975 = vst.msk [vmem:[#allocation4 + $0x8] sm:$0xff] %vm618, 0.0
        %1976 = vst.msk [vmem:[#allocation4 + $0x10] sm:$0xff] %vm618, 0.0
        %1977 = vst.msk [vmem:[#allocation4 + $0x18] sm:$0x3] %vm1339, 0.0
        %1978 = vst.msk [vmem:[#allocation4 + $0x5] sm:$0xff] %vm618, %v1972
        %1979 = vst.msk [vmem:[#allocation4 + $0xd] sm:$0xff] %vm618, %v1973
        %v1980 = vld [vmem:[#allocation4] sm:$0xff]
        %v1981 = vld [vmem:[#allocation4 + $0x8] sm:$0xff]
        %v1982 = vsel %vm781, %v1980, 0.0
        %v1983 = vsel %vm782, %v1981, 0.0
        %v1984 = vpack.c.bf16 %v1983, %v1982
        %v1985 = vld [vmem:[%s10] sm:$0xf]
        %v1986 = vld [vmem:[%s10 + $0x4] sm:$0xf]
        %v1987 = vld [vmem:[%s10 + $0x8] sm:$0xf]
        %v1988 = vld [vmem:[%s10 + $0xc] sm:$0xf]
        %v1989 = vld [vmem:[#allocation4 + $0x1] sm:$0xff]
        %v1990 = vld [vmem:[#allocation4 + $0x9] sm:$0xff]
        %v1991 = vpack.c.bf16 %v1990, %v1989
        %s1992 = scalar_lea.vmem %s10, 16
        %v1993 = vld [vmem:[%s1992] sm:$0xf]
        %v1994 = vld [vmem:[%s1992 + $0x4] sm:$0xf]
        %v1995 = vld [vmem:[%s1992 + $0x8] sm:$0xf]
        %v1996 = vld [vmem:[%s1992 + $0xc] sm:$0xf]
        %v2001 = vunpack.c.l.b16 %v1993
        %v2002 = vunpack.c.l.b16 %v1994
        %v2003 = vunpack.c.l.b16 %v1995
        %v2004 = vunpack.c.l.b16 %v1996
        %v2005 = vpack.c.b16 %v2002, %v2001
        %v2006 = vpack.c.b16 %v2004, %v2003
        %v2010 = vsel %vm618, %v1991, 0
        %2012 = vmatprep.subr.bf16.mxu0 0
        %2013 = vmatpush1.bf16.msra.mxu0 %v2005
        %2014 = vmatprep.subr.bf16.mxu0 0
        %2015 = vmatpush1.bf16.msra.mxu0 %v2006
        %2016 = vmatprep.subr.bf16.mxu0 0
        %2017 = vmatpush1.bf16.msra.mxu0 0
        %2018 = vmatprep.subr.bf16.mxu0 0
        %2019 = vmatpush1.bf16.msra.mxu0 0
        %2020 = vmatprep.subr.bf16.mxu0 0
        %2021 = vmatpush1.bf16.msra.mxu0 0
        %2022 = vmatprep.subr.bf16.mxu0 0
        %2023 = vmatpush1.bf16.msra.mxu0 0
        %2024 = vmatprep.subr.bf16.mxu0 0
        %2025 = vmatpush1.bf16.msra.mxu0 0
        %2026 = vmatprep.subr.bf16.mxu0 0
        %2027 = vmatpush1.bf16.msra.mxu0 0
        %2028 = vmatprep.subr.bf16.mxu0 0
        %2029 = vmatpush1.bf16.msra.mxu0 0
        %2030 = vmatprep.subr.bf16.mxu0 0
        %2031 = vmatpush1.bf16.msra.mxu0 0
        %2032 = vmatprep.subr.bf16.mxu0 0
        %2033 = vmatpush1.bf16.msra.mxu0 0
        %2034 = vmatprep.subr.bf16.mxu0 0
        %2035 = vmatpush1.bf16.msra.mxu0 0
        %2036 = vmatprep.subr.bf16.mxu0 0
        %2037 = vmatpush1.bf16.msra.mxu0 0
        %2038 = vmatprep.subr.bf16.mxu0 0
        %2039 = vmatpush1.bf16.msra.mxu0 0
        %2040 = vmatprep.subr.bf16.mxu0 0
        %2041 = vmatpush1.bf16.msra.mxu0 0
        %2042 = vmatprep.subr.bf16.mxu0 0
        %2043 = vmatpush1.bf16.msra.mxu0 0
        %2044 = vmatprep.mubr.bf16.mxu0 0
        %2045 = vmatmul.mubr.bf16.gmra.mrb[0].mxu0 %v2010
        %v2046 = vpop.f32.mrb[0].mxu0
        %v2047 = vadd.f32 0.0, %v2046
        %v2048 = vpop.f32.mrb[0].mxu0
        %v2049 = vpop.f32.mrb[0].mxu0
        %v2050 = vadd.f32 0.0, %v2049
        %v2051 = vpop.f32.mrb[0].mxu0
        %2052 = vdwg.mxu0
        %v2057 = vunpack.c.l.b16 %v1985
        %v2058 = vunpack.c.l.b16 %v1986
        %v2059 = vunpack.c.l.b16 %v1987
        %v2060 = vunpack.c.l.b16 %v1988
        %v2061 = vpack.c.b16 %v2058, %v2057
        %v2062 = vpack.c.b16 %v2060, %v2059
        %v2066 = vsel %vm618, %v1984, 0
        %2068 = vmatprep.subr.bf16.mxu0 0
        %2069 = vmatpush1.bf16.msra.mxu0 %v2061
        %2070 = vmatprep.subr.bf16.mxu0 0
        %2071 = vmatpush1.bf16.msra.mxu0 %v2062
        %2072 = vmatprep.subr.bf16.mxu0 0
        %2073 = vmatpush1.bf16.msra.mxu0 0
        %2074 = vmatprep.subr.bf16.mxu0 0
        %2075 = vmatpush1.bf16.msra.mxu0 0
        %2076 = vmatprep.subr.bf16.mxu0 0
        %2077 = vmatpush1.bf16.msra.mxu0 0
        %2078 = vmatprep.subr.bf16.mxu0 0
        %2079 = vmatpush1.bf16.msra.mxu0 0
        %2080 = vmatprep.subr.bf16.mxu0 0
        %2081 = vmatpush1.bf16.msra.mxu0 0
        %2082 = vmatprep.subr.bf16.mxu0 0
        %2083 = vmatpush1.bf16.msra.mxu0 0
        %2084 = vmatprep.subr.bf16.mxu0 0
        %2085 = vmatpush1.bf16.msra.mxu0 0
        %2086 = vmatprep.subr.bf16.mxu0 0
        %2087 = vmatpush1.bf16.msra.mxu0 0
        %2088 = vmatprep.subr.bf16.mxu0 0
        %2089 = vmatpush1.bf16.msra.mxu0 0
        %2090 = vmatprep.subr.bf16.mxu0 0
        %2091 = vmatpush1.bf16.msra.mxu0 0
        %2092 = vmatprep.subr.bf16.mxu0 0
        %2093 = vmatpush1.bf16.msra.mxu0 0
        %2094 = vmatprep.subr.bf16.mxu0 0
        %2095 = vmatpush1.bf16.msra.mxu0 0
        %2096 = vmatprep.subr.bf16.mxu0 0
        %2097 = vmatpush1.bf16.msra.mxu0 0
        %2098 = vmatprep.subr.bf16.mxu0 0
        %2099 = vmatpush1.bf16.msra.mxu0 0
        %2100 = vmatprep.mubr.bf16.mxu0 0
        %2101 = vmatmul.mubr.bf16.gmra.mrb[0].mxu0 %v2066
        %v2102 = vpop.f32.mrb[0].mxu0
        %v2103 = vadd.f32 %v2047, %v2102
        %v2104 = vpop.f32.mrb[0].mxu0
        %v2105 = vpop.f32.mrb[0].mxu0
        %v2106 = vadd.f32 %v2050, %v2105
        %v2107 = vpop.f32.mrb[0].mxu0
        %2108 = vdwg.mxu0
        %v2109 = vld [vmem:[#allocation4 + $0x2] sm:$0xff]
        %v2110 = vld [vmem:[#allocation4 + $0xa] sm:$0xff]
        %v2111 = vsel %vm900, %v2109, 0.0
        %v2112 = vsel %vm901, %v2110, 0.0
        %v2113 = vpack.c.bf16 %v2112, %v2111
        %s2114 = scalar_lea.vmem %s10, 32
        %v2115 = vld [vmem:[%s2114] sm:$0xf]
        %v2116 = vld [vmem:[%s2114 + $0x4] sm:$0xf]
        %v2117 = vld [vmem:[%s2114 + $0x8] sm:$0xf]
        %v2118 = vld [vmem:[%s2114 + $0xc] sm:$0xf]
        %v2123 = vunpack.c.l.b16 %v2115
        %v2124 = vunpack.c.l.b16 %v2116
        %v2125 = vunpack.c.l.b16 %v2117
        %v2126 = vunpack.c.l.b16 %v2118
        %v2127 = vpack.c.b16 %v2124, %v2123
        %v2128 = vpack.c.b16 %v2126, %v2125
        %v2132 = vsel %vm618, %v2113, 0
        %2134 = vmatprep.subr.bf16.mxu0 0
        %2135 = vmatpush1.bf16.msra.mxu0 %v2127
        %2136 = vmatprep.subr.bf16.mxu0 0
        %2137 = vmatpush1.bf16.msra.mxu0 %v2128
        %2138 = vmatprep.subr.bf16.mxu0 0
        %2139 = vmatpush1.bf16.msra.mxu0 0
        %2140 = vmatprep.subr.bf16.mxu0 0
        %2141 = vmatpush1.bf16.msra.mxu0 0
        %2142 = vmatprep.subr.bf16.mxu0 0
        %2143 = vmatpush1.bf16.msra.mxu0 0
        %2144 = vmatprep.subr.bf16.mxu0 0
        %2145 = vmatpush1.bf16.msra.mxu0 0
        %2146 = vmatprep.subr.bf16.mxu0 0
        %2147 = vmatpush1.bf16.msra.mxu0 0
        %2148 = vmatprep.subr.bf16.mxu0 0
        %2149 = vmatpush1.bf16.msra.mxu0 0
        %2150 = vmatprep.subr.bf16.mxu0 0
        %2151 = vmatpush1.bf16.msra.mxu0 0
        %2152 = vmatprep.subr.bf16.mxu0 0
        %2153 = vmatpush1.bf16.msra.mxu0 0
        %2154 = vmatprep.subr.bf16.mxu0 0
        %2155 = vmatpush1.bf16.msra.mxu0 0
        %2156 = vmatprep.subr.bf16.mxu0 0
        %2157 = vmatpush1.bf16.msra.mxu0 0
        %2158 = vmatprep.subr.bf16.mxu0 0
        %2159 = vmatpush1.bf16.msra.mxu0 0
        %2160 = vmatprep.subr.bf16.mxu0 0
        %2161 = vmatpush1.bf16.msra.mxu0 0
        %2162 = vmatprep.subr.bf16.mxu0 0
        %2163 = vmatpush1.bf16.msra.mxu0 0
        %2164 = vmatprep.subr.bf16.mxu0 0
        %2165 = vmatpush1.bf16.msra.mxu0 0
        %2166 = vmatprep.mubr.bf16.mxu0 0
        %2167 = vmatmul.mubr.bf16.gmra.mrb[0].mxu0 %v2132
        %v2168 = vpop.f32.mrb[0].mxu0
        %v2169 = vadd.f32 0.0, %v2168
        %v2170 = vpop.f32.mrb[0].mxu0
        %v2171 = vpop.f32.mrb[0].mxu0
        %v2172 = vadd.f32 0.0, %v2171
        %v2173 = vpop.f32.mrb[0].mxu0
        %2174 = vdwg.mxu0
        %v2175 = vadd.f32 %v2103, %v2169
        %v2176 = vadd.f32 %v2106, %v2172
        %v2177 = vld [vmem:[#allocation4 + $0x4] sm:$0xff]
        %v2178 = vld [vmem:[#allocation4 + $0xc] sm:$0xff]
        %v2179 = vsel %vm781, %v2177, 0.0
        %v2180 = vsel %vm782, %v2178, 0.0
        %v2181 = vpack.c.bf16 %v2180, %v2179
        %s2182 = scalar_lea.vmem %s10, 48
        %v2183 = vld [vmem:[%s2182] sm:$0xf]
        %v2184 = vld [vmem:[%s2182 + $0x4] sm:$0xf]
        %v2185 = vld [vmem:[%s2182 + $0x8] sm:$0xf]
        %v2186 = vld [vmem:[%s2182 + $0xc] sm:$0xf]
        %v2191 = vunpack.c.l.b16 %v2183
        %v2192 = vunpack.c.l.b16 %v2184
        %v2193 = vunpack.c.l.b16 %v2185
        %v2194 = vunpack.c.l.b16 %v2186
        %v2195 = vpack.c.b16 %v2192, %v2191
        %v2196 = vpack.c.b16 %v2194, %v2193
        %v2200 = vsel %vm618, %v2181, 0
        %2202 = vmatprep.subr.bf16.mxu0 0
        %2203 = vmatpush1.bf16.msra.mxu0 %v2195
        %2204 = vmatprep.subr.bf16.mxu0 0
        %2205 = vmatpush1.bf16.msra.mxu0 %v2196
        %2206 = vmatprep.subr.bf16.mxu0 0
        %2207 = vmatpush1.bf16.msra.mxu0 0
        %2208 = vmatprep.subr.bf16.mxu0 0
        %2209 = vmatpush1.bf16.msra.mxu0 0
        %2210 = vmatprep.subr.bf16.mxu0 0
        %2211 = vmatpush1.bf16.msra.mxu0 0
        %2212 = vmatprep.subr.bf16.mxu0 0
        %2213 = vmatpush1.bf16.msra.mxu0 0
        %2214 = vmatprep.subr.bf16.mxu0 0
        %2215 = vmatpush1.bf16.msra.mxu0 0
        %2216 = vmatprep.subr.bf16.mxu0 0
        %2217 = vmatpush1.bf16.msra.mxu0 0
        %2218 = vmatprep.subr.bf16.mxu0 0
        %2219 = vmatpush1.bf16.msra.mxu0 0
        %2220 = vmatprep.subr.bf16.mxu0 0
        %2221 = vmatpush1.bf16.msra.mxu0 0
        %2222 = vmatprep.subr.bf16.mxu0 0
        %2223 = vmatpush1.bf16.msra.mxu0 0
        %2224 = vmatprep.subr.bf16.mxu0 0
        %2225 = vmatpush1.bf16.msra.mxu0 0
        %2226 = vmatprep.subr.bf16.mxu0 0
        %2227 = vmatpush1.bf16.msra.mxu0 0
        %2228 = vmatprep.subr.bf16.mxu0 0
        %2229 = vmatpush1.bf16.msra.mxu0 0
        %2230 = vmatprep.subr.bf16.mxu0 0
        %2231 = vmatpush1.bf16.msra.mxu0 0
        %2232 = vmatprep.subr.bf16.mxu0 0
        %2233 = vmatpush1.bf16.msra.mxu0 0
        %2234 = vmatprep.mubr.bf16.mxu0 0
        %2235 = vmatmul.mubr.bf16.gmra.mrb[0].mxu0 %v2200
        %v2236 = vpop.f32.mrb[0].mxu0
        %v2237 = vadd.f32 0.0, %v2236
        %v2238 = vpop.f32.mrb[0].mxu0
        %v2239 = vpop.f32.mrb[0].mxu0
        %v2240 = vadd.f32 0.0, %v2239
        %v2241 = vpop.f32.mrb[0].mxu0
        %2242 = vdwg.mxu0
        %v2243 = vadd.f32 %v2175, %v2237
        %v2244 = vadd.f32 %v2176, %v2240
        %v2245 = vld [vmem:[#allocation4 + $0x5] sm:$0xff]
        %v2246 = vld [vmem:[#allocation4 + $0xd] sm:$0xff]
        %v2247 = vpack.c.bf16 %v2246, %v2245
        %s2248 = scalar_lea.vmem %s10, 64
        %v2249 = vld [vmem:[%s2248] sm:$0xf]
        %v2250 = vld [vmem:[%s2248 + $0x4] sm:$0xf]
        %v2251 = vld [vmem:[%s2248 + $0x8] sm:$0xf]
        %v2252 = vld [vmem:[%s2248 + $0xc] sm:$0xf]
        %v2257 = vunpack.c.l.b16 %v2249
        %v2258 = vunpack.c.l.b16 %v2250
        %v2259 = vunpack.c.l.b16 %v2251
        %v2260 = vunpack.c.l.b16 %v2252
        %v2261 = vpack.c.b16 %v2258, %v2257
        %v2262 = vpack.c.b16 %v2260, %v2259
        %v2266 = vsel %vm618, %v2247, 0
        %2268 = vmatprep.subr.bf16.mxu0 0
        %2269 = vmatpush1.bf16.msra.mxu0 %v2261
        %2270 = vmatprep.subr.bf16.mxu0 0
        %2271 = vmatpush1.bf16.msra.mxu0 %v2262
        %2272 = vmatprep.subr.bf16.mxu0 0
        %2273 = vmatpush1.bf16.msra.mxu0 0
        %2274 = vmatprep.subr.bf16.mxu0 0
        %2275 = vmatpush1.bf16.msra.mxu0 0
        %2276 = vmatprep.subr.bf16.mxu0 0
        %2277 = vmatpush1.bf16.msra.mxu0 0
        %2278 = vmatprep.subr.bf16.mxu0 0
        %2279 = vmatpush1.bf16.msra.mxu0 0
        %2280 = vmatprep.subr.bf16.mxu0 0
        %2281 = vmatpush1.bf16.msra.mxu0 0
        %2282 = vmatprep.subr.bf16.mxu0 0
        %2283 = vmatpush1.bf16.msra.mxu0 0
        %2284 = vmatprep.subr.bf16.mxu0 0
        %2285 = vmatpush1.bf16.msra.mxu0 0
        %2286 = vmatprep.subr.bf16.mxu0 0
        %2287 = vmatpush1.bf16.msra.mxu0 0
        %2288 = vmatprep.subr.bf16.mxu0 0
        %2289 = vmatpush1.bf16.msra.mxu0 0
        %2290 = vmatprep.subr.bf16.mxu0 0
        %2291 = vmatpush1.bf16.msra.mxu0 0
        %2292 = vmatprep.subr.bf16.mxu0 0
        %2293 = vmatpush1.bf16.msra.mxu0 0
        %2294 = vmatprep.subr.bf16.mxu0 0
        %2295 = vmatpush1.bf16.msra.mxu0 0
        %2296 = vmatprep.subr.bf16.mxu0 0
        %2297 = vmatpush1.bf16.msra.mxu0 0
        %2298 = vmatprep.subr.bf16.mxu0 0
        %2299 = vmatpush1.bf16.msra.mxu0 0
        %2300 = vmatprep.mubr.bf16.mxu0 0
        %2301 = vmatmul.mubr.bf16.gmra.mrb[0].mxu0 %v2266
        %v2302 = vpop.f32.mrb[0].mxu0
        %v2303 = vadd.f32 0.0, %v2302
        %v2304 = vpop.f32.mrb[0].mxu0
        %v2305 = vpop.f32.mrb[0].mxu0
        %v2306 = vadd.f32 0.0, %v2305
        %v2307 = vpop.f32.mrb[0].mxu0
        %2308 = vdwg.mxu0
        %v2309 = vadd.f32 %v2243, %v2303
        %v2310 = vadd.f32 %v2244, %v2306
        %v2311 = vld [vmem:[#allocation4 + $0x6] sm:$0xff]
        %v2312 = vld [vmem:[#allocation4 + $0xe] sm:$0xff]
        %v2313 = vsel %vm900, %v2311, 0.0
        %v2314 = vsel %vm901, %v2312, 0.0
        %v2315 = vpack.c.bf16 %v2314, %v2313
        %s2316 = scalar_lea.vmem %s10, 80
        %v2317 = vld [vmem:[%s2316] sm:$0xf]
        %v2318 = vld [vmem:[%s2316 + $0x4] sm:$0xf]
        %v2319 = vld [vmem:[%s2316 + $0x8] sm:$0xf]
        %v2320 = vld [vmem:[%s2316 + $0xc] sm:$0xf]
        %v2325 = vunpack.c.l.b16 %v2317
        %v2326 = vunpack.c.l.b16 %v2318
        %v2327 = vunpack.c.l.b16 %v2319
        %v2328 = vunpack.c.l.b16 %v2320
        %v2329 = vpack.c.b16 %v2326, %v2325
        %v2330 = vpack.c.b16 %v2328, %v2327
        %v2334 = vsel %vm618, %v2315, 0
        %2336 = vmatprep.subr.bf16.mxu0 0
        %2337 = vmatpush1.bf16.msra.mxu0 %v2329
        %2338 = vmatprep.subr.bf16.mxu0 0
        %2339 = vmatpush1.bf16.msra.mxu0 %v2330
        %2340 = vmatprep.subr.bf16.mxu0 0
        %2341 = vmatpush1.bf16.msra.mxu0 0
        %2342 = vmatprep.subr.bf16.mxu0 0
        %2343 = vmatpush1.bf16.msra.mxu0 0
        %2344 = vmatprep.subr.bf16.mxu0 0
        %2345 = vmatpush1.bf16.msra.mxu0 0
        %2346 = vmatprep.subr.bf16.mxu0 0
        %2347 = vmatpush1.bf16.msra.mxu0 0
        %2348 = vmatprep.subr.bf16.mxu0 0
        %2349 = vmatpush1.bf16.msra.mxu0 0
        %2350 = vmatprep.subr.bf16.mxu0 0
        %2351 = vmatpush1.bf16.msra.mxu0 0
        %2352 = vmatprep.subr.bf16.mxu0 0
        %2353 = vmatpush1.bf16.msra.mxu0 0
        %2354 = vmatprep.subr.bf16.mxu0 0
        %2355 = vmatpush1.bf16.msra.mxu0 0
        %2356 = vmatprep.subr.bf16.mxu0 0
        %2357 = vmatpush1.bf16.msra.mxu0 0
        %2358 = vmatprep.subr.bf16.mxu0 0
        %2359 = vmatpush1.bf16.msra.mxu0 0
        %2360 = vmatprep.subr.bf16.mxu0 0
        %2361 = vmatpush1.bf16.msra.mxu0 0
        %2362 = vmatprep.subr.bf16.mxu0 0
        %2363 = vmatpush1.bf16.msra.mxu0 0
        %2364 = vmatprep.subr.bf16.mxu0 0
        %2365 = vmatpush1.bf16.msra.mxu0 0
        %2366 = vmatprep.subr.bf16.mxu0 0
        %2367 = vmatpush1.bf16.msra.mxu0 0
        %2368 = vmatprep.mubr.bf16.mxu0 0
        %2369 = vmatmul.mubr.bf16.gmra.mrb[0].mxu0 %v2334
        %v2370 = vpop.f32.mrb[0].mxu0
        %v2371 = vadd.f32 0.0, %v2370
        %v2372 = vpop.f32.mrb[0].mxu0
        %v2373 = vpop.f32.mrb[0].mxu0
        %v2374 = vadd.f32 0.0, %v2373
        %v2375 = vpop.f32.mrb[0].mxu0
        %2376 = vdwg.mxu0
        %v2377 = vadd.f32 %v2309, %v2371
        %v2378 = vadd.f32 %v2310, %v2374
        %v2379 = vld [vmem:[#allocation4 + $0x8] sm:$0xff]
        %v2380 = vld [vmem:[#allocation4 + $0x10] sm:$0xff]
        %v2381 = vsel %vm781, %v2379, 0.0
        %v2382 = vsel %vm782, %v2380, 0.0
        %v2383 = vpack.c.bf16 %v2382, %v2381
        %s2384 = scalar_lea.vmem %s10, 96
        %v2385 = vld [vmem:[%s2384] sm:$0xf]
        %v2386 = vld [vmem:[%s2384 + $0x4] sm:$0xf]
        %v2387 = vld [vmem:[%s2384 + $0x8] sm:$0xf]
        %v2388 = vld [vmem:[%s2384 + $0xc] sm:$0xf]
        %v2393 = vunpack.c.l.b16 %v2385
        %v2394 = vunpack.c.l.b16 %v2386
        %v2395 = vunpack.c.l.b16 %v2387
        %v2396 = vunpack.c.l.b16 %v2388
        %v2397 = vpack.c.b16 %v2394, %v2393
        %v2398 = vpack.c.b16 %v2396, %v2395
        %v2402 = vsel %vm618, %v2383, 0
        %2404 = vmatprep.subr.bf16.mxu0 0
        %2405 = vmatpush1.bf16.msra.mxu0 %v2397
        %2406 = vmatprep.subr.bf16.mxu0 0
        %2407 = vmatpush1.bf16.msra.mxu0 %v2398
        %2408 = vmatprep.subr.bf16.mxu0 0
        %2409 = vmatpush1.bf16.msra.mxu0 0
        %2410 = vmatprep.subr.bf16.mxu0 0
        %2411 = vmatpush1.bf16.msra.mxu0 0
        %2412 = vmatprep.subr.bf16.mxu0 0
        %2413 = vmatpush1.bf16.msra.mxu0 0
        %2414 = vmatprep.subr.bf16.mxu0 0
        %2415 = vmatpush1.bf16.msra.mxu0 0
        %2416 = vmatprep.subr.bf16.mxu0 0
        %2417 = vmatpush1.bf16.msra.mxu0 0
        %2418 = vmatprep.subr.bf16.mxu0 0
        %2419 = vmatpush1.bf16.msra.mxu0 0
        %2420 = vmatprep.subr.bf16.mxu0 0
        %2421 = vmatpush1.bf16.msra.mxu0 0
        %2422 = vmatprep.subr.bf16.mxu0 0
        %2423 = vmatpush1.bf16.msra.mxu0 0
        %2424 = vmatprep.subr.bf16.mxu0 0
        %2425 = vmatpush1.bf16.msra.mxu0 0
        %2426 = vmatprep.subr.bf16.mxu0 0
        %2427 = vmatpush1.bf16.msra.mxu0 0
        %2428 = vmatprep.subr.bf16.mxu0 0
        %2429 = vmatpush1.bf16.msra.mxu0 0
        %2430 = vmatprep.subr.bf16.mxu0 0
        %2431 = vmatpush1.bf16.msra.mxu0 0
        %2432 = vmatprep.subr.bf16.mxu0 0
        %2433 = vmatpush1.bf16.msra.mxu0 0
        %2434 = vmatprep.subr.bf16.mxu0 0
        %2435 = vmatpush1.bf16.msra.mxu0 0
        %2436 = vmatprep.mubr.bf16.mxu0 0
        %2437 = vmatmul.mubr.bf16.gmra.mrb[0].mxu0 %v2402
        %v2438 = vpop.f32.mrb[0].mxu0
        %v2439 = vadd.f32 0.0, %v2438
        %v2440 = vpop.f32.mrb[0].mxu0
        %v2441 = vpop.f32.mrb[0].mxu0
        %v2442 = vadd.f32 0.0, %v2441
        %v2443 = vpop.f32.mrb[0].mxu0
        %2444 = vdwg.mxu0
        %v2445 = vadd.f32 %v2377, %v2439
        %v2446 = vadd.f32 %v2378, %v2442
        %v2447 = vld [vmem:[#allocation4 + $0x9] sm:$0xff]
        %v2448 = vld [vmem:[#allocation4 + $0x11] sm:$0xff]
        %v2449 = vpack.c.bf16 %v2448, %v2447
        %s2450 = scalar_lea.vmem %s10, 112
        %v2451 = vld [vmem:[%s2450] sm:$0xf]
        %v2452 = vld [vmem:[%s2450 + $0x4] sm:$0xf]
        %v2453 = vld [vmem:[%s2450 + $0x8] sm:$0xf]
        %v2454 = vld [vmem:[%s2450 + $0xc] sm:$0xf]
        %v2459 = vunpack.c.l.b16 %v2451
        %v2460 = vunpack.c.l.b16 %v2452
        %v2461 = vunpack.c.l.b16 %v2453
        %v2462 = vunpack.c.l.b16 %v2454
        %v2463 = vpack.c.b16 %v2460, %v2459
        %v2464 = vpack.c.b16 %v2462, %v2461
        %v2468 = vsel %vm618, %v2449, 0
        %2470 = vmatprep.subr.bf16.mxu0 0
        %2471 = vmatpush1.bf16.msra.mxu0 %v2463
        %2472 = vmatprep.subr.bf16.mxu0 0
        %2473 = vmatpush1.bf16.msra.mxu0 %v2464
        %2474 = vmatprep.subr.bf16.mxu0 0
        %2475 = vmatpush1.bf16.msra.mxu0 0
        %2476 = vmatprep.subr.bf16.mxu0 0
        %2477 = vmatpush1.bf16.msra.mxu0 0
        %2478 = vmatprep.subr.bf16.mxu0 0
        %2479 = vmatpush1.bf16.msra.mxu0 0
        %2480 = vmatprep.subr.bf16.mxu0 0
        %2481 = vmatpush1.bf16.msra.mxu0 0
        %2482 = vmatprep.subr.bf16.mxu0 0
        %2483 = vmatpush1.bf16.msra.mxu0 0
        %2484 = vmatprep.subr.bf16.mxu0 0
        %2485 = vmatpush1.bf16.msra.mxu0 0
        %2486 = vmatprep.subr.bf16.mxu0 0
        %2487 = vmatpush1.bf16.msra.mxu0 0
        %2488 = vmatprep.subr.bf16.mxu0 0
        %2489 = vmatpush1.bf16.msra.mxu0 0
        %2490 = vmatprep.subr.bf16.mxu0 0
        %2491 = vmatpush1.bf16.msra.mxu0 0
        %2492 = vmatprep.subr.bf16.mxu0 0
        %2493 = vmatpush1.bf16.msra.mxu0 0
        %2494 = vmatprep.subr.bf16.mxu0 0
        %2495 = vmatpush1.bf16.msra.mxu0 0
        %2496 = vmatprep.subr.bf16.mxu0 0
        %2497 = vmatpush1.bf16.msra.mxu0 0
        %2498 = vmatprep.subr.bf16.mxu0 0
        %2499 = vmatpush1.bf16.msra.mxu0 0
        %2500 = vmatprep.subr.bf16.mxu0 0
        %2501 = vmatpush1.bf16.msra.mxu0 0
        %2502 = vmatprep.mubr.bf16.mxu0 0
        %2503 = vmatmul.mubr.bf16.gmra.mrb[0].mxu0 %v2468
        %v2504 = vpop.f32.mrb[0].mxu0
        %v2505 = vadd.f32 0.0, %v2504
        %v2506 = vpop.f32.mrb[0].mxu0
        %v2507 = vpop.f32.mrb[0].mxu0
        %v2508 = vadd.f32 0.0, %v2507
        %v2509 = vpop.f32.mrb[0].mxu0
        %2510 = vdwg.mxu0
        %v2511 = vadd.f32 %v2445, %v2505
        %v2512 = vadd.f32 %v2446, %v2508
        %v2513 = vld [vmem:[#allocation4 + $0xa] sm:$0xff]
        %v2514 = vld [vmem:[#allocation4 + $0x12] sm:$0xff]
        %v2515 = vsel %vm900, %v2513, 0.0
        %v2516 = vsel %vm901, %v2514, 0.0
        %v2517 = vpack.c.bf16 %v2516, %v2515
        %s2518 = scalar_lea.vmem %s10, 128
        %v2519 = vld [vmem:[%s2518] sm:$0xf]
        %v2520 = vld [vmem:[%s2518 + $0x4] sm:$0xf]
        %v2521 = vld [vmem:[%s2518 + $0x8] sm:$0xf]
        %v2522 = vld [vmem:[%s2518 + $0xc] sm:$0xf]
        %v2527 = vunpack.c.l.b16 %v2519
        %v2528 = vunpack.c.l.b16 %v2520
        %v2529 = vunpack.c.l.b16 %v2521
        %v2530 = vunpack.c.l.b16 %v2522
        %v2531 = vpack.c.b16 %v2528, %v2527
        %v2532 = vpack.c.b16 %v2530, %v2529
        %v2536 = vsel %vm618, %v2517, 0
        %2538 = vmatprep.subr.bf16.mxu0 0
        %2539 = vmatpush1.bf16.msra.mxu0 %v2531
        %2540 = vmatprep.subr.bf16.mxu0 0
        %2541 = vmatpush1.bf16.msra.mxu0 %v2532
        %2542 = vmatprep.subr.bf16.mxu0 0
        %2543 = vmatpush1.bf16.msra.mxu0 0
        %2544 = vmatprep.subr.bf16.mxu0 0
        %2545 = vmatpush1.bf16.msra.mxu0 0
        %2546 = vmatprep.subr.bf16.mxu0 0
        %2547 = vmatpush1.bf16.msra.mxu0 0
        %2548 = vmatprep.subr.bf16.mxu0 0
        %2549 = vmatpush1.bf16.msra.mxu0 0
        %2550 = vmatprep.subr.bf16.mxu0 0
        %2551 = vmatpush1.bf16.msra.mxu0 0
        %2552 = vmatprep.subr.bf16.mxu0 0
        %2553 = vmatpush1.bf16.msra.mxu0 0
        %2554 = vmatprep.subr.bf16.mxu0 0
        %2555 = vmatpush1.bf16.msra.mxu0 0
        %2556 = vmatprep.subr.bf16.mxu0 0
        %2557 = vmatpush1.bf16.msra.mxu0 0
        %2558 = vmatprep.subr.bf16.mxu0 0
        %2559 = vmatpush1.bf16.msra.mxu0 0
        %2560 = vmatprep.subr.bf16.mxu0 0
        %2561 = vmatpush1.bf16.msra.mxu0 0
        %2562 = vmatprep.subr.bf16.mxu0 0
        %2563 = vmatpush1.bf16.msra.mxu0 0
        %2564 = vmatprep.subr.bf16.mxu0 0
        %2565 = vmatpush1.bf16.msra.mxu0 0
        %2566 = vmatprep.subr.bf16.mxu0 0
        %2567 = vmatpush1.bf16.msra.mxu0 0
        %2568 = vmatprep.subr.bf16.mxu0 0
        %2569 = vmatpush1.bf16.msra.mxu0 0
        %2570 = vmatprep.mubr.bf16.mxu0 0
        %2571 = vmatmul.mubr.bf16.gmra.mrb[0].mxu0 %v2536
        %v2572 = vpop.f32.mrb[0].mxu0
        %v2573 = vadd.f32 0.0, %v2572
        %v2574 = vpop.f32.mrb[0].mxu0
        %v2575 = vpop.f32.mrb[0].mxu0
        %v2576 = vadd.f32 0.0, %v2575
        %v2577 = vpop.f32.mrb[0].mxu0
        %2578 = vdwg.mxu0
        %v2579 = vadd.f32 %v2511, %v2573
        %v2580 = vadd.f32 %v2512, %v2576
        %v2581 = vld [vmem:[%s11] sm:$0x1]
        %v2583 = vlaneseq
        %v2584 = vshrl.u32 %v2583, 7
        %v2585 = vsub.s32 0, %v2584
        %v2586 = vrot.slane %v2581, %v2585
        %v2588 = vmul.f32 %v2579, %v2586
        %v2589 = vmul.f32 %v2580, %v2586
        %v2590 = vld [vmem:[%s12] sm:$0x1]
        %v2592 = vlaneseq
        %v2593 = vshrl.u32 %v2592, 7
        %v2594 = vsub.s32 0, %v2593
        %v2595 = vrot.slane %v2590, %v2594
        %v2597 = vadd.f32 %v2588, %v2595
        %v2598 = vadd.f32 %v2589, %v2595
        %v2599 = vmax.f32 %v2597, 0.0
        %v2600 = vmax.f32 %v2598, 0.0
        %vm2601 = vcmask 523264
        %2602 = vst.msk [vmem:[#allocation5] sm:$0xff] %vm2601, 0.0
        %vm2603 = vcmask 517120
        %2604 = vst.msk [vmem:[#allocation5 + $0x8] sm:$0x3] %vm2603, 0.0
        %vm2605 = vcmask 516096
        %2606 = vst.msk [vmem:[#allocation5 + $0x3] sm:$0x1] %vm2605, %v2599
        %2608 = vrot.lane.b32.xlu0 %v2597, 64
        %v2609 = vpop.permute.xlu0 %2608
        %2611 = vst.msk [vmem:[#allocation6] sm:$0x1] %vm2605, %v2609
        %vm2612 = vcmask 518146
        %2613 = vst.msk [vmem:[#allocation5 + $0x2] sm:$0x4] %vm2612, %v2599
        %2614 = vst.msk [vmem:[#allocation6 - $0x1] sm:$0x4] %vm2612, %v2609
        %2615 = vst.msk [vmem:[#allocation5 + $0x5] sm:$0x1] %vm2605, %v2600
        %2617 = vrot.lane.b32.xlu0 %v2598, 64
        %v2618 = vpop.permute.xlu0 %2617
        %2620 = vst.msk [vmem:[#allocation6 + $0x2] sm:$0x1] %vm2605, %v2618
        %2621 = vst.msk [vmem:[#allocation5 + $0x4] sm:$0x4] %vm2612, %v2600
        %2622 = vst.msk [vmem:[#allocation6 + $0x1] sm:$0x4] %vm2612, %v2618
        %vm2623 = vcmp.lt.s32.totalorder %v749, 0
        %v2624 = vsub.s32 0, %v749
        %v2625 = vsel %vm2623, %v2624, %v749
        %v2626 = vshrl.u32 %v2625, 1
        %v2627 = vand.u32 %v2625, 1
        %v2628 = vsub.s32 0, %v2627
        %v2629 = vsel %vm2623, %v2628, %v2627
        %vm2630 = vcmp.ne.s32.totalorder %v2629, 0
        %vm2631 = vcmp.lt.s32.totalorder %v2629, 0
        %vm2632 = vmand %vm2631, %vm2630
        %v2633 = vadd.s32 %v2629, 2
        %v2634 = vsel %vm2632, %v2633, %v2629
        %v2635 = vld [vmem:[#allocation5] sm:$0xf]
        %vm2636 = vcmp.ne.s32.totalorder %v2634, 0
        %v2637 = vsel %vm2636, 1, 0
        %vm2638 = vcmp.eq.s32.totalorder %v2637, 1
        %v2639 = vsel %vm2638, %v2635, 0.0
        %v2640 = vpack.c.bf16 %v2639, %v2639
        %v2641 = vld [vmem:[%s13] sm:$0xf]
        %v2642 = vld [vmem:[%s13 + $0x4] sm:$0xf]
        %v2643 = vld [vmem:[%s13 + $0x8] sm:$0xf]
        %v2644 = vld [vmem:[%s13 + $0xc] sm:$0xf]
        %v2645 = vld [vmem:[%s13 + $0x10] sm:$0xf]
        %v2646 = vld [vmem:[%s13 + $0x14] sm:$0xf]
        %v2647 = vld [vmem:[%s13 + $0x18] sm:$0xf]
        %v2648 = vld [vmem:[%s13 + $0x1c] sm:$0xf]
        %v2649 = vld [vmem:[#allocation5 + $0x1] sm:$0xf]
        %v2650 = vpack.c.bf16 %v2649, %v2649
        %s2651 = scalar_lea.vmem %s13, 32
        %v2652 = vld [vmem:[%s2651] sm:$0xf]
        %v2653 = vld [vmem:[%s2651 + $0x4] sm:$0xf]
        %v2654 = vld [vmem:[%s2651 + $0x8] sm:$0xf]
        %v2655 = vld [vmem:[%s2651 + $0xc] sm:$0xf]
        %v2656 = vld [vmem:[%s2651 + $0x10] sm:$0xf]
        %v2657 = vld [vmem:[%s2651 + $0x14] sm:$0xf]
        %v2658 = vld [vmem:[%s2651 + $0x18] sm:$0xf]
        %v2659 = vld [vmem:[%s2651 + $0x1c] sm:$0xf]
        %v2668 = vunpack.c.l.b16 %v2652
        %v2669 = vunpack.c.l.b16 %v2653
        %v2670 = vunpack.c.l.b16 %v2654
        %v2671 = vunpack.c.l.b16 %v2655
        %v2672 = vunpack.c.l.b16 %v2656
        %v2673 = vunpack.c.l.b16 %v2657
        %v2674 = vunpack.c.l.b16 %v2658
        %v2675 = vunpack.c.l.b16 %v2659
        %v2676 = vpack.c.b16 %v2669, %v2668
        %v2677 = vpack.c.b16 %v2671, %v2670
        %v2678 = vpack.c.b16 %v2673, %v2672
        %v2679 = vpack.c.b16 %v2675, %v2674
        %v2685 = vsel %vm2601, %v2650, 0
        %2687 = vmatprep.subr.bf16.mxu0 0
        %2688 = vmatpush1.bf16.msra.mxu0 %v2676
        %2689 = vmatprep.subr.bf16.mxu0 0
        %2690 = vmatpush1.bf16.msra.mxu0 %v2677
        %2691 = vmatprep.subr.bf16.mxu0 0
        %2692 = vmatpush1.bf16.msra.mxu0 %v2678
        %2693 = vmatprep.subr.bf16.mxu0 0
        %2694 = vmatpush1.bf16.msra.mxu0 %v2679
        %2695 = vmatprep.subr.bf16.mxu0 0
        %2696 = vmatpush1.bf16.msra.mxu0 0
        %2697 = vmatprep.subr.bf16.mxu0 0
        %2698 = vmatpush1.bf16.msra.mxu0 0
        %2699 = vmatprep.subr.bf16.mxu0 0
        %2700 = vmatpush1.bf16.msra.mxu0 0
        %2701 = vmatprep.subr.bf16.mxu0 0
        %2702 = vmatpush1.bf16.msra.mxu0 0
        %2703 = vmatprep.subr.bf16.mxu0 0
        %2704 = vmatpush1.bf16.msra.mxu0 0
        %2705 = vmatprep.subr.bf16.mxu0 0
        %2706 = vmatpush1.bf16.msra.mxu0 0
        %2707 = vmatprep.subr.bf16.mxu0 0
        %2708 = vmatpush1.bf16.msra.mxu0 0
        %2709 = vmatprep.subr.bf16.mxu0 0
        %2710 = vmatpush1.bf16.msra.mxu0 0
        %2711 = vmatprep.subr.bf16.mxu0 0
        %2712 = vmatpush1.bf16.msra.mxu0 0
        %2713 = vmatprep.subr.bf16.mxu0 0
        %2714 = vmatpush1.bf16.msra.mxu0 0
        %2715 = vmatprep.subr.bf16.mxu0 0
        %2716 = vmatpush1.bf16.msra.mxu0 0
        %2717 = vmatprep.subr.bf16.mxu0 0
        %2718 = vmatpush1.bf16.msra.mxu0 0
        %2719 = vmatprep.mubr.bf16.mxu0 0
        %2720 = vmatmul.mubr.bf16.gmra.mrb[0].mxu0 %v2685
        %v2721 = vpop.f32.mrb[0].mxu0
        %v2722 = vadd.f32 0.0, %v2721
        %v2723 = vpop.f32.mrb[0].mxu0
        %v2724 = vpop.f32.mrb[0].mxu0
        %v2725 = vpop.f32.mrb[0].mxu0
        %2726 = vdwg.mxu0
        %v2735 = vunpack.c.l.b16 %v2641
        %v2736 = vunpack.c.l.b16 %v2642
        %v2737 = vunpack.c.l.b16 %v2643
        %v2738 = vunpack.c.l.b16 %v2644
        %v2739 = vunpack.c.l.b16 %v2645
        %v2740 = vunpack.c.l.b16 %v2646
        %v2741 = vunpack.c.l.b16 %v2647
        %v2742 = vunpack.c.l.b16 %v2648
        %v2743 = vpack.c.b16 %v2736, %v2735
        %v2744 = vpack.c.b16 %v2738, %v2737
        %v2745 = vpack.c.b16 %v2740, %v2739
        %v2746 = vpack.c.b16 %v2742, %v2741
        %v2752 = vsel %vm2601, %v2640, 0
        %2754 = vmatprep.subr.bf16.mxu0 0
        %2755 = vmatpush1.bf16.msra.mxu0 %v2743
        %2756 = vmatprep.subr.bf16.mxu0 0
        %2757 = vmatpush1.bf16.msra.mxu0 %v2744
        %2758 = vmatprep.subr.bf16.mxu0 0
        %2759 = vmatpush1.bf16.msra.mxu0 %v2745
        %2760 = vmatprep.subr.bf16.mxu0 0
        %2761 = vmatpush1.bf16.msra.mxu0 %v2746
        %2762 = vmatprep.subr.bf16.mxu0 0
        %2763 = vmatpush1.bf16.msra.mxu0 0
        %2764 = vmatprep.subr.bf16.mxu0 0
        %2765 = vmatpush1.bf16.msra.mxu0 0
        %2766 = vmatprep.subr.bf16.mxu0 0
        %2767 = vmatpush1.bf16.msra.mxu0 0
        %2768 = vmatprep.subr.bf16.mxu0 0
        %2769 = vmatpush1.bf16.msra.mxu0 0
        %2770 = vmatprep.subr.bf16.mxu0 0
        %2771 = vmatpush1.bf16.msra.mxu0 0
        %2772 = vmatprep.subr.bf16.mxu0 0
        %2773 = vmatpush1.bf16.msra.mxu0 0
        %2774 = vmatprep.subr.bf16.mxu0 0
        %2775 = vmatpush1.bf16.msra.mxu0 0
        %2776 = vmatprep.subr.bf16.mxu0 0
        %2777 = vmatpush1.bf16.msra.mxu0 0
        %2778 = vmatprep.subr.bf16.mxu0 0
        %2779 = vmatpush1.bf16.msra.mxu0 0
        %2780 = vmatprep.subr.bf16.mxu0 0
        %2781 = vmatpush1.bf16.msra.mxu0 0
        %2782 = vmatprep.subr.bf16.mxu0 0
        %2783 = vmatpush1.bf16.msra.mxu0 0
        %2784 = vmatprep.subr.bf16.mxu0 0
        %2785 = vmatpush1.bf16.msra.mxu0 0
        %2786 = vmatprep.mubr.bf16.mxu0 0
        %2787 = vmatmul.mubr.bf16.gmra.mrb[0].mxu0 %v2752
        %v2788 = vpop.f32.mrb[0].mxu0
        %v2789 = vadd.f32 %v2722, %v2788
        %v2790 = vpop.f32.mrb[0].mxu0
        %v2791 = vpop.f32.mrb[0].mxu0
        %v2792 = vpop.f32.mrb[0].mxu0
        %2793 = vdwg.mxu0
        %v2794 = vld [vmem:[#allocation5 + $0x2] sm:$0xf]
        %vm2795 = vcmp.ne.s32.totalorder %v2634, 1
        %v2796 = vsel %vm2795, 1, 0
        %vm2797 = vcmp.eq.s32.totalorder %v2796, 1
        %v2798 = vsel %vm2797, %v2794, 0.0
        %v2799 = vpack.c.bf16 %v2798, %v2798
        %s2800 = scalar_lea.vmem %s13, 64
        %v2801 = vld [vmem:[%s2800] sm:$0xf]
        %v2802 = vld [vmem:[%s2800 + $0x4] sm:$0xf]
        %v2803 = vld [vmem:[%s2800 + $0x8] sm:$0xf]
        %v2804 = vld [vmem:[%s2800 + $0xc] sm:$0xf]
        %v2805 = vld [vmem:[%s2800 + $0x10] sm:$0xf]
        %v2806 = vld [vmem:[%s2800 + $0x14] sm:$0xf]
        %v2807 = vld [vmem:[%s2800 + $0x18] sm:$0xf]
        %v2808 = vld [vmem:[%s2800 + $0x1c] sm:$0xf]
        %v2817 = vunpack.c.l.b16 %v2801
        %v2818 = vunpack.c.l.b16 %v2802
        %v2819 = vunpack.c.l.b16 %v2803
        %v2820 = vunpack.c.l.b16 %v2804
        %v2821 = vunpack.c.l.b16 %v2805
        %v2822 = vunpack.c.l.b16 %v2806
        %v2823 = vunpack.c.l.b16 %v2807
        %v2824 = vunpack.c.l.b16 %v2808
        %v2825 = vpack.c.b16 %v2818, %v2817
        %v2826 = vpack.c.b16 %v2820, %v2819
        %v2827 = vpack.c.b16 %v2822, %v2821
        %v2828 = vpack.c.b16 %v2824, %v2823
        %v2834 = vsel %vm2601, %v2799, 0
        %2836 = vmatprep.subr.bf16.mxu0 0
        %2837 = vmatpush1.bf16.msra.mxu0 %v2825
        %2838 = vmatprep.subr.bf16.mxu0 0
        %2839 = vmatpush1.bf16.msra.mxu0 %v2826
        %2840 = vmatprep.subr.bf16.mxu0 0
        %2841 = vmatpush1.bf16.msra.mxu0 %v2827
        %2842 = vmatprep.subr.bf16.mxu0 0
        %2843 = vmatpush1.bf16.msra.mxu0 %v2828
        %2844 = vmatprep.subr.bf16.mxu0 0
        %2845 = vmatpush1.bf16.msra.mxu0 0
        %2846 = vmatprep.subr.bf16.mxu0 0
        %2847 = vmatpush1.bf16.msra.mxu0 0
        %2848 = vmatprep.subr.bf16.mxu0 0
        %2849 = vmatpush1.bf16.msra.mxu0 0
        %2850 = vmatprep.subr.bf16.mxu0 0
        %2851 = vmatpush1.bf16.msra.mxu0 0
        %2852 = vmatprep.subr.bf16.mxu0 0
        %2853 = vmatpush1.bf16.msra.mxu0 0
        %2854 = vmatprep.subr.bf16.mxu0 0
        %2855 = vmatpush1.bf16.msra.mxu0 0
        %2856 = vmatprep.subr.bf16.mxu0 0
        %2857 = vmatpush1.bf16.msra.mxu0 0
        %2858 = vmatprep.subr.bf16.mxu0 0
        %2859 = vmatpush1.bf16.msra.mxu0 0
        %2860 = vmatprep.subr.bf16.mxu0 0
        %2861 = vmatpush1.bf16.msra.mxu0 0
        %2862 = vmatprep.subr.bf16.mxu0 0
        %2863 = vmatpush1.bf16.msra.mxu0 0
        %2864 = vmatprep.subr.bf16.mxu0 0
        %2865 = vmatpush1.bf16.msra.mxu0 0
        %2866 = vmatprep.subr.bf16.mxu0 0
        %2867 = vmatpush1.bf16.msra.mxu0 0
        %2868 = vmatprep.mubr.bf16.mxu0 0
        %2869 = vmatmul.mubr.bf16.gmra.mrb[0].mxu0 %v2834
        %v2870 = vpop.f32.mrb[0].mxu0
        %v2871 = vadd.f32 0.0, %v2870
        %v2872 = vpop.f32.mrb[0].mxu0
        %v2873 = vpop.f32.mrb[0].mxu0
        %v2874 = vpop.f32.mrb[0].mxu0
        %2875 = vdwg.mxu0
        %v2876 = vadd.f32 %v2789, %v2871
        %v2877 = vsel %vm2638, %v2794, 0.0
        %v2878 = vpack.c.bf16 %v2877, %v2877
        %s2879 = scalar_lea.vmem %s13, 96
        %v2880 = vld [vmem:[%s2879] sm:$0xf]
        %v2881 = vld [vmem:[%s2879 + $0x4] sm:$0xf]
        %v2882 = vld [vmem:[%s2879 + $0x8] sm:$0xf]
        %v2883 = vld [vmem:[%s2879 + $0xc] sm:$0xf]
        %v2884 = vld [vmem:[%s2879 + $0x10] sm:$0xf]
        %v2885 = vld [vmem:[%s2879 + $0x14] sm:$0xf]
        %v2886 = vld [vmem:[%s2879 + $0x18] sm:$0xf]
        %v2887 = vld [vmem:[%s2879 + $0x1c] sm:$0xf]
        %v2896 = vunpack.c.l.b16 %v2880
        %v2897 = vunpack.c.l.b16 %v2881
        %v2898 = vunpack.c.l.b16 %v2882
        %v2899 = vunpack.c.l.b16 %v2883
        %v2900 = vunpack.c.l.b16 %v2884
        %v2901 = vunpack.c.l.b16 %v2885
        %v2902 = vunpack.c.l.b16 %v2886
        %v2903 = vunpack.c.l.b16 %v2887
        %v2904 = vpack.c.b16 %v2897, %v2896
        %v2905 = vpack.c.b16 %v2899, %v2898
        %v2906 = vpack.c.b16 %v2901, %v2900
        %v2907 = vpack.c.b16 %v2903, %v2902
        %v2913 = vsel %vm2601, %v2878, 0
        %2915 = vmatprep.subr.bf16.mxu0 0
        %2916 = vmatpush1.bf16.msra.mxu0 %v2904
        %2917 = vmatprep.subr.bf16.mxu0 0
        %2918 = vmatpush1.bf16.msra.mxu0 %v2905
        %2919 = vmatprep.subr.bf16.mxu0 0
        %2920 = vmatpush1.bf16.msra.mxu0 %v2906
        %2921 = vmatprep.subr.bf16.mxu0 0
        %2922 = vmatpush1.bf16.msra.mxu0 %v2907
        %2923 = vmatprep.subr.bf16.mxu0 0
        %2924 = vmatpush1.bf16.msra.mxu0 0
        %2925 = vmatprep.subr.bf16.mxu0 0
        %2926 = vmatpush1.bf16.msra.mxu0 0
        %2927 = vmatprep.subr.bf16.mxu0 0
        %2928 = vmatpush1.bf16.msra.mxu0 0
        %2929 = vmatprep.subr.bf16.mxu0 0
        %2930 = vmatpush1.bf16.msra.mxu0 0
        %2931 = vmatprep.subr.bf16.mxu0 0
        %2932 = vmatpush1.bf16.msra.mxu0 0
        %2933 = vmatprep.subr.bf16.mxu0 0
        %2934 = vmatpush1.bf16.msra.mxu0 0
        %2935 = vmatprep.subr.bf16.mxu0 0
        %2936 = vmatpush1.bf16.msra.mxu0 0
        %2937 = vmatprep.subr.bf16.mxu0 0
        %2938 = vmatpush1.bf16.msra.mxu0 0
        %2939 = vmatprep.subr.bf16.mxu0 0
        %2940 = vmatpush1.bf16.msra.mxu0 0
        %2941 = vmatprep.subr.bf16.mxu0 0
        %2942 = vmatpush1.bf16.msra.mxu0 0
        %2943 = vmatprep.subr.bf16.mxu0 0
        %2944 = vmatpush1.bf16.msra.mxu0 0
        %2945 = vmatprep.subr.bf16.mxu0 0
        %2946 = vmatpush1.bf16.msra.mxu0 0
        %2947 = vmatprep.mubr.bf16.mxu0 0
        %2948 = vmatmul.mubr.bf16.gmra.mrb[0].mxu0 %v2913
        %v2949 = vpop.f32.mrb[0].mxu0
        %v2950 = vadd.f32 0.0, %v2949
        %v2951 = vpop.f32.mrb[0].mxu0
        %v2952 = vpop.f32.mrb[0].mxu0
        %v2953 = vpop.f32.mrb[0].mxu0
        %2954 = vdwg.mxu0
        %v2955 = vadd.f32 %v2876, %v2950
        %v2956 = vld [vmem:[#allocation5 + $0x3] sm:$0xf]
        %v2957 = vpack.c.bf16 %v2956, %v2956
        %s2958 = scalar_lea.vmem %s13, 128
        %v2959 = vld [vmem:[%s2958] sm:$0xf]
        %v2960 = vld [vmem:[%s2958 + $0x4] sm:$0xf]
        %v2961 = vld [vmem:[%s2958 + $0x8] sm:$0xf]
        %v2962 = vld [vmem:[%s2958 + $0xc] sm:$0xf]
        %v2963 = vld [vmem:[%s2958 + $0x10] sm:$0xf]
        %v2964 = vld [vmem:[%s2958 + $0x14] sm:$0xf]
        %v2965 = vld [vmem:[%s2958 + $0x18] sm:$0xf]
        %v2966 = vld [vmem:[%s2958 + $0x1c] sm:$0xf]
        %v2975 = vunpack.c.l.b16 %v2959
        %v2976 = vunpack.c.l.b16 %v2960
        %v2977 = vunpack.c.l.b16 %v2961
        %v2978 = vunpack.c.l.b16 %v2962
        %v2979 = vunpack.c.l.b16 %v2963
        %v2980 = vunpack.c.l.b16 %v2964
        %v2981 = vunpack.c.l.b16 %v2965
        %v2982 = vunpack.c.l.b16 %v2966
        %v2983 = vpack.c.b16 %v2976, %v2975
        %v2984 = vpack.c.b16 %v2978, %v2977
        %v2985 = vpack.c.b16 %v2980, %v2979
        %v2986 = vpack.c.b16 %v2982, %v2981
        %v2992 = vsel %vm2601, %v2957, 0
        %2994 = vmatprep.subr.bf16.mxu0 0
        %2995 = vmatpush1.bf16.msra.mxu0 %v2983
        %2996 = vmatprep.subr.bf16.mxu0 0
        %2997 = vmatpush1.bf16.msra.mxu0 %v2984
        %2998 = vmatprep.subr.bf16.mxu0 0
        %2999 = vmatpush1.bf16.msra.mxu0 %v2985
        %3000 = vmatprep.subr.bf16.mxu0 0
        %3001 = vmatpush1.bf16.msra.mxu0 %v2986
        %3002 = vmatprep.subr.bf16.mxu0 0
        %3003 = vmatpush1.bf16.msra.mxu0 0
        %3004 = vmatprep.subr.bf16.mxu0 0
        %3005 = vmatpush1.bf16.msra.mxu0 0
        %3006 = vmatprep.subr.bf16.mxu0 0
        %3007 = vmatpush1.bf16.msra.mxu0 0
        %3008 = vmatprep.subr.bf16.mxu0 0
        %3009 = vmatpush1.bf16.msra.mxu0 0
        %3010 = vmatprep.subr.bf16.mxu0 0
        %3011 = vmatpush1.bf16.msra.mxu0 0
        %3012 = vmatprep.subr.bf16.mxu0 0
        %3013 = vmatpush1.bf16.msra.mxu0 0
        %3014 = vmatprep.subr.bf16.mxu0 0
        %3015 = vmatpush1.bf16.msra.mxu0 0
        %3016 = vmatprep.subr.bf16.mxu0 0
        %3017 = vmatpush1.bf16.msra.mxu0 0
        %3018 = vmatprep.subr.bf16.mxu0 0
        %3019 = vmatpush1.bf16.msra.mxu0 0
        %3020 = vmatprep.subr.bf16.mxu0 0
        %3021 = vmatpush1.bf16.msra.mxu0 0
        %3022 = vmatprep.subr.bf16.mxu0 0
        %3023 = vmatpush1.bf16.msra.mxu0 0
        %3024 = vmatprep.subr.bf16.mxu0 0
        %3025 = vmatpush1.bf16.msra.mxu0 0
        %3026 = vmatprep.mubr.bf16.mxu0 0
        %3027 = vmatmul.mubr.bf16.gmra.mrb[0].mxu0 %v2992
        %v3028 = vpop.f32.mrb[0].mxu0
        %v3029 = vadd.f32 0.0, %v3028
        %v3030 = vpop.f32.mrb[0].mxu0
        %v3031 = vpop.f32.mrb[0].mxu0
        %v3032 = vpop.f32.mrb[0].mxu0
        %3033 = vdwg.mxu0
        %v3034 = vadd.f32 %v2955, %v3029
        %v3035 = vld [vmem:[#allocation5 + $0x4] sm:$0xf]
        %v3036 = vsel %vm2797, %v3035, 0.0
        %v3037 = vpack.c.bf16 %v3036, %v3036
        %s3038 = scalar_lea.vmem %s13, 160
        %v3039 = vld [vmem:[%s3038] sm:$0xf]
        %v3040 = vld [vmem:[%s3038 + $0x4] sm:$0xf]
        %v3041 = vld [vmem:[%s3038 + $0x8] sm:$0xf]
        %v3042 = vld [vmem:[%s3038 + $0xc] sm:$0xf]
        %v3043 = vld [vmem:[%s3038 + $0x10] sm:$0xf]
        %v3044 = vld [vmem:[%s3038 + $0x14] sm:$0xf]
        %v3045 = vld [vmem:[%s3038 + $0x18] sm:$0xf]
        %v3046 = vld [vmem:[%s3038 + $0x1c] sm:$0xf]
        %v3055 = vunpack.c.l.b16 %v3039
        %v3056 = vunpack.c.l.b16 %v3040
        %v3057 = vunpack.c.l.b16 %v3041
        %v3058 = vunpack.c.l.b16 %v3042
        %v3059 = vunpack.c.l.b16 %v3043
        %v3060 = vunpack.c.l.b16 %v3044
        %v3061 = vunpack.c.l.b16 %v3045
        %v3062 = vunpack.c.l.b16 %v3046
        %v3063 = vpack.c.b16 %v3056, %v3055
        %v3064 = vpack.c.b16 %v3058, %v3057
        %v3065 = vpack.c.b16 %v3060, %v3059
        %v3066 = vpack.c.b16 %v3062, %v3061
        %v3072 = vsel %vm2601, %v3037, 0
        %3074 = vmatprep.subr.bf16.mxu0 0
        %3075 = vmatpush1.bf16.msra.mxu0 %v3063
        %3076 = vmatprep.subr.bf16.mxu0 0
        %3077 = vmatpush1.bf16.msra.mxu0 %v3064
        %3078 = vmatprep.subr.bf16.mxu0 0
        %3079 = vmatpush1.bf16.msra.mxu0 %v3065
        %3080 = vmatprep.subr.bf16.mxu0 0
        %3081 = vmatpush1.bf16.msra.mxu0 %v3066
        %3082 = vmatprep.subr.bf16.mxu0 0
        %3083 = vmatpush1.bf16.msra.mxu0 0
        %3084 = vmatprep.subr.bf16.mxu0 0
        %3085 = vmatpush1.bf16.msra.mxu0 0
        %3086 = vmatprep.subr.bf16.mxu0 0
        %3087 = vmatpush1.bf16.msra.mxu0 0
        %3088 = vmatprep.subr.bf16.mxu0 0
        %3089 = vmatpush1.bf16.msra.mxu0 0
        %3090 = vmatprep.subr.bf16.mxu0 0
        %3091 = vmatpush1.bf16.msra.mxu0 0
        %3092 = vmatprep.subr.bf16.mxu0 0
        %3093 = vmatpush1.bf16.msra.mxu0 0
        %3094 = vmatprep.subr.bf16.mxu0 0
        %3095 = vmatpush1.bf16.msra.mxu0 0
        %3096 = vmatprep.subr.bf16.mxu0 0
        %3097 = vmatpush1.bf16.msra.mxu0 0
        %3098 = vmatprep.subr.bf16.mxu0 0
        %3099 = vmatpush1.bf16.msra.mxu0 0
        %3100 = vmatprep.subr.bf16.mxu0 0
        %3101 = vmatpush1.bf16.msra.mxu0 0
        %3102 = vmatprep.subr.bf16.mxu0 0
        %3103 = vmatpush1.bf16.msra.mxu0 0
        %3104 = vmatprep.subr.bf16.mxu0 0
        %3105 = vmatpush1.bf16.msra.mxu0 0
        %3106 = vmatprep.mubr.bf16.mxu0 0
        %3107 = vmatmul.mubr.bf16.gmra.mrb[0].mxu0 %v3072
        %v3108 = vpop.f32.mrb[0].mxu0
        %v3109 = vadd.f32 0.0, %v3108
        %v3110 = vpop.f32.mrb[0].mxu0
        %v3111 = vpop.f32.mrb[0].mxu0
        %v3112 = vpop.f32.mrb[0].mxu0
        %3113 = vdwg.mxu0
        %v3114 = vadd.f32 %v3034, %v3109
        %v3115 = vsel %vm2638, %v3035, 0.0
        %v3116 = vpack.c.bf16 %v3115, %v3115
        %s3117 = scalar_lea.vmem %s13, 192
        %v3118 = vld [vmem:[%s3117] sm:$0xf]
        %v3119 = vld [vmem:[%s3117 + $0x4] sm:$0xf]
        %v3120 = vld [vmem:[%s3117 + $0x8] sm:$0xf]
        %v3121 = vld [vmem:[%s3117 + $0xc] sm:$0xf]
        %v3122 = vld [vmem:[%s3117 + $0x10] sm:$0xf]
        %v3123 = vld [vmem:[%s3117 + $0x14] sm:$0xf]
        %v3124 = vld [vmem:[%s3117 + $0x18] sm:$0xf]
        %v3125 = vld [vmem:[%s3117 + $0x1c] sm:$0xf]
        %v3134 = vunpack.c.l.b16 %v3118
        %v3135 = vunpack.c.l.b16 %v3119
        %v3136 = vunpack.c.l.b16 %v3120
        %v3137 = vunpack.c.l.b16 %v3121
        %v3138 = vunpack.c.l.b16 %v3122
        %v3139 = vunpack.c.l.b16 %v3123
        %v3140 = vunpack.c.l.b16 %v3124
        %v3141 = vunpack.c.l.b16 %v3125
        %v3142 = vpack.c.b16 %v3135, %v3134
        %v3143 = vpack.c.b16 %v3137, %v3136
        %v3144 = vpack.c.b16 %v3139, %v3138
        %v3145 = vpack.c.b16 %v3141, %v3140
        %v3151 = vsel %vm2601, %v3116, 0
        %3153 = vmatprep.subr.bf16.mxu0 0
        %3154 = vmatpush1.bf16.msra.mxu0 %v3142
        %3155 = vmatprep.subr.bf16.mxu0 0
        %3156 = vmatpush1.bf16.msra.mxu0 %v3143
        %3157 = vmatprep.subr.bf16.mxu0 0
        %3158 = vmatpush1.bf16.msra.mxu0 %v3144
        %3159 = vmatprep.subr.bf16.mxu0 0
        %3160 = vmatpush1.bf16.msra.mxu0 %v3145
        %3161 = vmatprep.subr.bf16.mxu0 0
        %3162 = vmatpush1.bf16.msra.mxu0 0
        %3163 = vmatprep.subr.bf16.mxu0 0
        %3164 = vmatpush1.bf16.msra.mxu0 0
        %3165 = vmatprep.subr.bf16.mxu0 0
        %3166 = vmatpush1.bf16.msra.mxu0 0
        %3167 = vmatprep.subr.bf16.mxu0 0
        %3168 = vmatpush1.bf16.msra.mxu0 0
        %3169 = vmatprep.subr.bf16.mxu0 0
        %3170 = vmatpush1.bf16.msra.mxu0 0
        %3171 = vmatprep.subr.bf16.mxu0 0
        %3172 = vmatpush1.bf16.msra.mxu0 0
        %3173 = vmatprep.subr.bf16.mxu0 0
        %3174 = vmatpush1.bf16.msra.mxu0 0
        %3175 = vmatprep.subr.bf16.mxu0 0
        %3176 = vmatpush1.bf16.msra.mxu0 0
        %3177 = vmatprep.subr.bf16.mxu0 0
        %3178 = vmatpush1.bf16.msra.mxu0 0
        %3179 = vmatprep.subr.bf16.mxu0 0
        %3180 = vmatpush1.bf16.msra.mxu0 0
        %3181 = vmatprep.subr.bf16.mxu0 0
        %3182 = vmatpush1.bf16.msra.mxu0 0
        %3183 = vmatprep.subr.bf16.mxu0 0
        %3184 = vmatpush1.bf16.msra.mxu0 0
        %3185 = vmatprep.mubr.bf16.mxu0 0
        %3186 = vmatmul.mubr.bf16.gmra.mrb[0].mxu0 %v3151
        %v3187 = vpop.f32.mrb[0].mxu0
        %v3188 = vadd.f32 0.0, %v3187
        %v3189 = vpop.f32.mrb[0].mxu0
        %v3190 = vpop.f32.mrb[0].mxu0
        %v3191 = vpop.f32.mrb[0].mxu0
        %3192 = vdwg.mxu0
        %v3193 = vadd.f32 %v3114, %v3188
        %v3194 = vld [vmem:[#allocation5 + $0x5] sm:$0xf]
        %v3195 = vpack.c.bf16 %v3194, %v3194
        %s3196 = scalar_lea.vmem %s13, 224
        %v3197 = vld [vmem:[%s3196] sm:$0xf]
        %v3198 = vld [vmem:[%s3196 + $0x4] sm:$0xf]
        %v3199 = vld [vmem:[%s3196 + $0x8] sm:$0xf]
        %v3200 = vld [vmem:[%s3196 + $0xc] sm:$0xf]
        %v3201 = vld [vmem:[%s3196 + $0x10] sm:$0xf]
        %v3202 = vld [vmem:[%s3196 + $0x14] sm:$0xf]
        %v3203 = vld [vmem:[%s3196 + $0x18] sm:$0xf]
        %v3204 = vld [vmem:[%s3196 + $0x1c] sm:$0xf]
        %v3213 = vunpack.c.l.b16 %v3197
        %v3214 = vunpack.c.l.b16 %v3198
        %v3215 = vunpack.c.l.b16 %v3199
        %v3216 = vunpack.c.l.b16 %v3200
        %v3217 = vunpack.c.l.b16 %v3201
        %v3218 = vunpack.c.l.b16 %v3202
        %v3219 = vunpack.c.l.b16 %v3203
        %v3220 = vunpack.c.l.b16 %v3204
        %v3221 = vpack.c.b16 %v3214, %v3213
        %v3222 = vpack.c.b16 %v3216, %v3215
        %v3223 = vpack.c.b16 %v3218, %v3217
        %v3224 = vpack.c.b16 %v3220, %v3219
        %v3230 = vsel %vm2601, %v3195, 0
        %3232 = vmatprep.subr.bf16.mxu0 0
        %3233 = vmatpush1.bf16.msra.mxu0 %v3221
        %3234 = vmatprep.subr.bf16.mxu0 0
        %3235 = vmatpush1.bf16.msra.mxu0 %v3222
        %3236 = vmatprep.subr.bf16.mxu0 0
        %3237 = vmatpush1.bf16.msra.mxu0 %v3223
        %3238 = vmatprep.subr.bf16.mxu0 0
        %3239 = vmatpush1.bf16.msra.mxu0 %v3224
        %3240 = vmatprep.subr.bf16.mxu0 0
        %3241 = vmatpush1.bf16.msra.mxu0 0
        %3242 = vmatprep.subr.bf16.mxu0 0
        %3243 = vmatpush1.bf16.msra.mxu0 0
        %3244 = vmatprep.subr.bf16.mxu0 0
        %3245 = vmatpush1.bf16.msra.mxu0 0
        %3246 = vmatprep.subr.bf16.mxu0 0
        %3247 = vmatpush1.bf16.msra.mxu0 0
        %3248 = vmatprep.subr.bf16.mxu0 0
        %3249 = vmatpush1.bf16.msra.mxu0 0
        %3250 = vmatprep.subr.bf16.mxu0 0
        %3251 = vmatpush1.bf16.msra.mxu0 0
        %3252 = vmatprep.subr.bf16.mxu0 0
        %3253 = vmatpush1.bf16.msra.mxu0 0
        %3254 = vmatprep.subr.bf16.mxu0 0
        %3255 = vmatpush1.bf16.msra.mxu0 0
        %3256 = vmatprep.subr.bf16.mxu0 0
        %3257 = vmatpush1.bf16.msra.mxu0 0
        %3258 = vmatprep.subr.bf16.mxu0 0
        %3259 = vmatpush1.bf16.msra.mxu0 0
        %3260 = vmatprep.subr.bf16.mxu0 0
        %3261 = vmatpush1.bf16.msra.mxu0 0
        %3262 = vmatprep.subr.bf16.mxu0 0
        %3263 = vmatpush1.bf16.msra.mxu0 0
        %3264 = vmatprep.mubr.bf16.mxu0 0
        %3265 = vmatmul.mubr.bf16.gmra.mrb[0].mxu0 %v3230
        %v3266 = vpop.f32.mrb[0].mxu0
        %v3267 = vadd.f32 0.0, %v3266
        %v3268 = vpop.f32.mrb[0].mxu0
        %v3269 = vpop.f32.mrb[0].mxu0
        %v3270 = vpop.f32.mrb[0].mxu0
        %3271 = vdwg.mxu0
        %v3272 = vadd.f32 %v3193, %v3267
        %v3273 = vld [vmem:[#allocation5 + $0x6] sm:$0xf]
        %v3274 = vsel %vm2797, %v3273, 0.0
        %v3275 = vpack.c.bf16 %v3274, %v3274
        %s3276 = scalar_lea.vmem %s13, 256
        %v3277 = vld [vmem:[%s3276] sm:$0xf]
        %v3278 = vld [vmem:[%s3276 + $0x4] sm:$0xf]
        %v3279 = vld [vmem:[%s3276 + $0x8] sm:$0xf]
        %v3280 = vld [vmem:[%s3276 + $0xc] sm:$0xf]
        %v3281 = vld [vmem:[%s3276 + $0x10] sm:$0xf]
        %v3282 = vld [vmem:[%s3276 + $0x14] sm:$0xf]
        %v3283 = vld [vmem:[%s3276 + $0x18] sm:$0xf]
        %v3284 = vld [vmem:[%s3276 + $0x1c] sm:$0xf]
        %v3293 = vunpack.c.l.b16 %v3277
        %v3294 = vunpack.c.l.b16 %v3278
        %v3295 = vunpack.c.l.b16 %v3279
        %v3296 = vunpack.c.l.b16 %v3280
        %v3297 = vunpack.c.l.b16 %v3281
        %v3298 = vunpack.c.l.b16 %v3282
        %v3299 = vunpack.c.l.b16 %v3283
        %v3300 = vunpack.c.l.b16 %v3284
        %v3301 = vpack.c.b16 %v3294, %v3293
        %v3302 = vpack.c.b16 %v3296, %v3295
        %v3303 = vpack.c.b16 %v3298, %v3297
        %v3304 = vpack.c.b16 %v3300, %v3299
        %v3310 = vsel %vm2601, %v3275, 0
        %3312 = vmatprep.subr.bf16.mxu0 0
        %3313 = vmatpush1.bf16.msra.mxu0 %v3301
        %3314 = vmatprep.subr.bf16.mxu0 0
        %3315 = vmatpush1.bf16.msra.mxu0 %v3302
        %3316 = vmatprep.subr.bf16.mxu0 0
        %3317 = vmatpush1.bf16.msra.mxu0 %v3303
        %3318 = vmatprep.subr.bf16.mxu0 0
        %3319 = vmatpush1.bf16.msra.mxu0 %v3304
        %3320 = vmatprep.subr.bf16.mxu0 0
        %3321 = vmatpush1.bf16.msra.mxu0 0
        %3322 = vmatprep.subr.bf16.mxu0 0
        %3323 = vmatpush1.bf16.msra.mxu0 0
        %3324 = vmatprep.subr.bf16.mxu0 0
        %3325 = vmatpush1.bf16.msra.mxu0 0
        %3326 = vmatprep.subr.bf16.mxu0 0
        %3327 = vmatpush1.bf16.msra.mxu0 0
        %3328 = vmatprep.subr.bf16.mxu0 0
        %3329 = vmatpush1.bf16.msra.mxu0 0
        %3330 = vmatprep.subr.bf16.mxu0 0
        %3331 = vmatpush1.bf16.msra.mxu0 0
        %3332 = vmatprep.subr.bf16.mxu0 0
        %3333 = vmatpush1.bf16.msra.mxu0 0
        %3334 = vmatprep.subr.bf16.mxu0 0
        %3335 = vmatpush1.bf16.msra.mxu0 0
        %3336 = vmatprep.subr.bf16.mxu0 0
        %3337 = vmatpush1.bf16.msra.mxu0 0
        %3338 = vmatprep.subr.bf16.mxu0 0
        %3339 = vmatpush1.bf16.msra.mxu0 0
        %3340 = vmatprep.subr.bf16.mxu0 0
        %3341 = vmatpush1.bf16.msra.mxu0 0
        %3342 = vmatprep.subr.bf16.mxu0 0
        %3343 = vmatpush1.bf16.msra.mxu0 0
        %3344 = vmatprep.mubr.bf16.mxu0 0
        %3345 = vmatmul.mubr.bf16.gmra.mrb[0].mxu0 %v3310
        %v3346 = vpop.f32.mrb[0].mxu0
        %v3347 = vadd.f32 0.0, %v3346
        %v3348 = vpop.f32.mrb[0].mxu0
        %v3349 = vpop.f32.mrb[0].mxu0
        %v3350 = vpop.f32.mrb[0].mxu0
        %3351 = vdwg.mxu0
        %v3352 = vadd.f32 %v3272, %v3347
        %v3353 = vld [vmem:[%s14] sm:$0x1]
        %v3355 = vlaneseq
        %v3356 = vshrl.u32 %v3355, 7
        %v3357 = vsub.s32 0, %v3356
        %v3358 = vrot.slane %v3353, %v3357
        %v3360 = vmul.f32 %v3352, %v3358
        %v3361 = vld [vmem:[%s15] sm:$0x1]
        %v3363 = vlaneseq
        %v3364 = vshrl.u32 %v3363, 7
        %v3365 = vsub.s32 0, %v3364
        %v3366 = vrot.slane %v3361, %v3365
        %v3368 = vadd.f32 %v3360, %v3366
        %v3369 = vld [vmem:[#allocation6] sm:$0xf]
        %v3370 = vadd.f32 %v3368, %v3369
        %v3371 = vmax.f32 %v3370, 0.0
        %vm3372 = vcmask 519168
        %v3373 = vsel %vm3372, %v3371, 0.0
        %v3374 = vrot.slane %v3373, 4
        %v3375 = vadd.f32 %v3373, %v3374
        %v3376 = vrot.slane %v3375, 2
        %v3377 = vadd.f32 %v3375, %v3376
        %v3378 = vrot.slane %v3377, 1
        %v3379 = vadd.f32 %v3377, %v3378
        %v3380 = vrcp.pop 4.0
        %v3381 = vmul.f32 %v3379, %v3380
        %v3382 = vpack.c.bf16 %v3381, %v3381
        %v3383 = vld [vmem:[%s16] sm:$0xf]
        %v3384 = vld [vmem:[%s16 + $0x4] sm:$0xf]
        %v3385 = vld [vmem:[%s16 + $0x8] sm:$0xf]
        %v3386 = vld [vmem:[%s16 + $0xc] sm:$0xf]
        %v3387 = vld [vmem:[%s16 + $0x10] sm:$0xf]
        %v3388 = vld [vmem:[%s16 + $0x14] sm:$0xf]
        %v3389 = vld [vmem:[%s16 + $0x18] sm:$0xf]
        %v3390 = vld [vmem:[%s16 + $0x1c] sm:$0xf]
        %v3391 = vld [vmem:[%s17] sm:$0x1]
        %v3400 = vunpack.c.l.b16 %v3383
        %v3401 = vunpack.c.l.b16 %v3384
        %v3402 = vunpack.c.l.b16 %v3385
        %v3403 = vunpack.c.l.b16 %v3386
        %v3404 = vunpack.c.l.b16 %v3387
        %v3405 = vunpack.c.l.b16 %v3388
        %v3406 = vunpack.c.l.b16 %v3389
        %v3407 = vunpack.c.l.b16 %v3390
        %v3408 = vpack.c.b16 %v3401, %v3400
        %v3409 = vpack.c.b16 %v3403, %v3402
        %v3410 = vpack.c.b16 %v3405, %v3404
        %v3411 = vpack.c.b16 %v3407, %v3406
        %v3417 = vsel %vm2601, %v3382, 0
        %3419 = vmatprep.subr.bf16.mxu0 0
        %3420 = vmatpush1.bf16.msra.mxu0 %v3408
        %3421 = vmatprep.subr.bf16.mxu0 0
        %3422 = vmatpush1.bf16.msra.mxu0 %v3409
        %3423 = vmatprep.subr.bf16.mxu0 0
        %3424 = vmatpush1.bf16.msra.mxu0 %v3410
        %3425 = vmatprep.subr.bf16.mxu0 0
        %3426 = vmatpush1.bf16.msra.mxu0 %v3411
        %3427 = vmatprep.subr.bf16.mxu0 0
        %3428 = vmatpush1.bf16.msra.mxu0 0
        %3429 = vmatprep.subr.bf16.mxu0 0
        %3430 = vmatpush1.bf16.msra.mxu0 0
        %3431 = vmatprep.subr.bf16.mxu0 0
        %3432 = vmatpush1.bf16.msra.mxu0 0
        %3433 = vmatprep.subr.bf16.mxu0 0
        %3434 = vmatpush1.bf16.msra.mxu0 0
        %3435 = vmatprep.subr.bf16.mxu0 0
        %3436 = vmatpush1.bf16.msra.mxu0 0
        %3437 = vmatprep.subr.bf16.mxu0 0
        %3438 = vmatpush1.bf16.msra.mxu0 0
        %3439 = vmatprep.subr.bf16.mxu0 0
        %3440 = vmatpush1.bf16.msra.mxu0 0
        %3441 = vmatprep.subr.bf16.mxu0 0
        %3442 = vmatpush1.bf16.msra.mxu0 0
        %3443 = vmatprep.subr.bf16.mxu0 0
        %3444 = vmatpush1.bf16.msra.mxu0 0
        %3445 = vmatprep.subr.bf16.mxu0 0
        %3446 = vmatpush1.bf16.msra.mxu0 0
        %3447 = vmatprep.subr.bf16.mxu0 0
        %3448 = vmatpush1.bf16.msra.mxu0 0
        %3449 = vmatprep.subr.bf16.mxu0 0
        %3450 = vmatpush1.bf16.msra.mxu0 0
        %3451 = vmatprep.mubr.bf16.mxu0 0
        %3452 = vmatmul.mubr.bf16.gmra.mrb[0].mxu0 %v3417
        %v3453 = vpop.f32.mrb[0].mxu0
        %v3454 = vadd.f32 %v3391, %v3453
        %v3455 = vpop.f32.mrb[0].mxu0
        %v3456 = vpop.f32.mrb[0].mxu0
        %v3457 = vpop.f32.mrb[0].mxu0
        %3458 = vdwg.mxu0
        %3459 = vst [vmem:[%s567] sm:$0x1] %v3454
        %s3460 = sand.u32 %s423, 1
        %s3461 = scalar_lea.sflag [#allocation8], %s3460
        %s3462 = sand.u32 %s423, 1
        %s3463 = scalar_lea.vmem [#allocation7], %s3462
        // Predicated region
        $region93: #{osnet_forward.1} parent=91 // pred_check
          %p3464 = pneg %p433
        $region94: #{osnet_forward.1} parent=91 // pred_check_branch
          %3466 = sbr.rel (%p3464) target = $region96
        $region95: #{osnet_forward.1} parent=91 // pred_region
          %s3468 = ssub.s32 16, 16
          %3469 = vsyncadd %s3461, %s3468
          %s3470 = smul.addr %s32, 16
          %s3471 = scalar_lea.hbm %s18, %s3470
          %s3473 = sshll.u32 %s3463, 4
          %s3474 = int_to_ptr.vmem [resolvable:$true] %s3473
          %3476 = dma.vmem_to_hbm [thread:$0]  %s3474, 16, %s3471, %s3461
        $region96: #{osnet_forward.1} parent=91 // pred_fallthru
          _
      $region92: #{osnet_forward.1} parent=5 // pred_fallthru
        _
      %p3477 = scmp.le.s32.totalorder 2, %s27
      // Predicated region
      $region97: #{osnet_forward.1} parent=5 // pred_check
        %p3478 = pneg %p3477
      $region98: #{osnet_forward.1} parent=5 // pred_check_branch
        %3480 = sbr.rel (%p3478) target = $region100
      $region99: #{osnet_forward.1} parent=5 // pred_region
        %s3481 = ssub.s32 %s27, 2
        // Predicated region
        $region101: #{osnet_forward.1} parent=99 // pred_check
          %p3482 = pneg %p439
        $region102: #{osnet_forward.1} parent=99 // pred_check_branch
          %3484 = sbr.rel (%p3482) target = $region104
        $region103: #{osnet_forward.1} parent=99 // pred_region
          %s3485 = sand.u32 %s424, 1
          %s3486 = scalar_lea.sflag [#allocation8], %s3485
          %s3487 = sand.u32 %s424, 1
          %s3488 = scalar_lea.vmem [#allocation7], %s3487
          %3489 = dma.done %s3486, 16
        $region104: #{osnet_forward.1} parent=99 // pred_fallthru
          _
      $region100: #{osnet_forward.1} parent=5 // pred_fallthru
        _
    $region6: #{osnet_forward.1} parent=1 // loop_footer
      %s31 = sadd.s32 1, %s27
    $region7: #{osnet_forward.1} parent=1 // loop_footer_branch
      %26 = sbr.rel target = $region3
    $region8: #{osnet_forward.1} parent=1 // loop_exit
      _
    %3490 = vsyncpa [#allocation8], 1
    %s3491 = scalar_lea.sflag [#allocation8], 1
    %3492 = vsyncpa %s3491, 1

</llo_original>
